<compile_context>
chip_gen: v5e
topology: v5e:2x2
jax: 0.10.0
libtpu: 0.0.40
codegen_flags: <defaults>
</compile_context>

<pallas_src>
import functools

import jax
import jax.numpy as jnp
import numpy as np
from jax.experimental import pallas as pl
from jax.experimental.pallas import tpu as pltpu

BN_EPS = 1e-5
LANE = 128


def _round_up(x, m):
    return ((x + m - 1) // m) * m


def _pad2(a, rows, cols):
    return jnp.pad(a, ((0, rows - a.shape[0]), (0, cols - a.shape[1])))


def _divisor_tile(total, base, cap):
    """Largest multiple of `base` that divides `total` and is <= cap."""
    best = base
    m = 2
    while base * m <= min(cap, total):
        if total % (base * m) == 0:
            best = base * m
        m += 1
    return best


def _default_vmem_limit():
    # Per-generation VMEM budget: ~80% of physical, capped at 100 MiB
    # (128 MiB parts), floored at 32 MiB. Falls back to a v7x-safe value.
    try:
        cap = int(pltpu.get_tpu_info().vmem_capacity_bytes)
    except Exception:  # pragma: no cover - conservative fallback
        cap = 64 * 1024 * 1024
    return max(32 * 1024 * 1024, min(int(cap * 0.8), 100 * 1024 * 1024))


VMEM_LIMIT = _default_vmem_limit()


def _cp(*sem):
    return pltpu.CompilerParams(dimension_semantics=sem,
                                vmem_limit_bytes=VMEM_LIMIT)


# ---------------------------------------------------------------------------
# Kernels
# ---------------------------------------------------------------------------
def _xform_kernel(x_ref, w_ref, o_ref):
    # T1 row-slab = x_tile @ [W1 || Ws1]  (f32 accumulation, stored in cdt)
    o_ref[...] = jnp.dot(x_ref[...], w_ref[...],
                         preferred_element_type=jnp.float32).astype(o_ref.dtype)


def _bn_relu_matmul(acc, b, scale, shift, skip, w_ref, o_ref):
    # f32 epilogue: h = BN(relu(acc + b)) [+ skip]; o = h @ W (MXU in cdt).
    h = jnp.maximum(acc + b, 0.0) * scale + shift
    if skip is not None:
        h = h + skip.astype(jnp.float32)
    o_ref[...] = jnp.dot(h.astype(w_ref.dtype), w_ref[...],
                         preferred_element_type=jnp.float32).astype(o_ref.dtype)


def _gcn_layer_skip_kernel(a_ref, t_ref, skip_ref, b_ref, scale_ref, shift_ref,
                           w_ref, o_ref, acc_ref):
    # Layer 1: acc += A_tile @ (x@W1)_tile over k; finalize:
    #   h1 = BN1(relu(acc + b1)) + (x@Ws1 row tile) [+ bs1 folded into shift1]
    #   o  = h1 @ [W2 || Ws2]
    k = pl.program_id(1)

    @pl.when(k == 0)
    def _():
        acc_ref[...] = jnp.zeros_like(acc_ref)

    acc_ref[...] += jnp.dot(a_ref[...], t_ref[...],
                            preferred_element_type=jnp.float32)

    @pl.when(k == pl.num_programs(1) - 1)
    def _():
        _bn_relu_matmul(acc_ref[...], b_ref[...], scale_ref[...],
                        shift_ref[...], skip_ref[...], w_ref, o_ref)


def _gcn_layer_kernel(a_ref, t_ref, b_ref, scale_ref, shift_ref, w_ref,
                      o_ref, acc_ref):
    # Layer 2: acc += A_tile @ (h1@W2)_tile; finalize: h2 = BN2(relu(acc+b2));
    #          o = h2 @ W3
    k = pl.program_id(1)

    @pl.when(k == 0)
    def _():
        acc_ref[...] = jnp.zeros_like(acc_ref)

    acc_ref[...] += jnp.dot(a_ref[...], t_ref[...],
                            preferred_element_type=jnp.float32)

    @pl.when(k == pl.num_programs(1) - 1)
    def _():
        _bn_relu_matmul(acc_ref[...], b_ref[...], scale_ref[...],
                        shift_ref[...], None, w_ref, o_ref)


def _layer3_kernel(a_ref, t_ref, skip_ref, b_ref, z_ref, acc_ref):
    # Layer 3: acc += A_tile @ (h2@W3)_tile; finalize:
    #   z = acc + (b3 + bs2) + (h1@Ws2 row tile)
    k = pl.program_id(1)

    @pl.when(k == 0)
    def _():
        acc_ref[...] = jnp.zeros_like(acc_ref)

    acc_ref[...] += jnp.dot(a_ref[...], t_ref[...],
                            preferred_element_type=jnp.float32)

    @pl.when(k == pl.num_programs(1) - 1)
    def _():
        z_ref[...] = (acc_ref[...] + b_ref[...]
                      + skip_ref[...].astype(jnp.float32))


def _decode_kernel(zi_ref, zt_ref, adj_ref):
    # adj row-slab i = sigmoid(z_i @ z^T); z^T is VMEM-resident (constant
    # index_map), the full-width store is lane-dense/unmasked.
    logits = jnp.dot(zi_ref[...], zt_ref[...],
                     preferred_element_type=jnp.float32)
    adj_ref[...] = jax.nn.sigmoid(logits)


# ---------------------------------------------------------------------------
# Wrapper
# ---------------------------------------------------------------------------
@functools.partial(jax.jit, static_argnames=("row_tile", "compute_dtype"))
def improved_gae_forward(x, a_norm, params, *, row_tile=256,
                         compute_dtype=jnp.bfloat16):
    """Fused ImprovedGAE forward. x: (N, F_in), a_norm: (N, N). Returns (adj, z).

    compute_dtype controls the MXU-operand dtype (A_hat stream, weights and
    transformed-feature slabs); accumulation and the bias/BN/relu/skip epilogue
    are always f32. Use compute_dtype=jnp.float32 for tight accuracy.
    row_tile: 256 fills the 256-wide MXU on v6e/v7x; use 128 on v5e.
    """
    N, f_in = x.shape
    H = params["w1"].shape[1]
    L = params["w3"].shape[1]
    f32 = jnp.float32
    cdt = compute_dtype

    # Padded (lane-dense) dimensions.
    Fp = _round_up(f_in, LANE)
    Hp = _round_up(H, LANE)
    Lp = _round_up(L, LANE)
    TM = min(row_tile, _round_up(N, 8))
    Np = _round_up(N, TM)
    TK = TM                      # contraction tile; TM | Np ensures TK | Np
    nti = Np // TM
    nk = Np // TK

    # Zero-padded / fused operands. Padded lanes of weights, biases, gamma and
    # beta are zero => padded lanes of h1/h2/z are zero for valid node rows, so
    # the z @ z^T contraction over padded lanes is exact (see header comment).
    xp = _pad2(x, Np, Fp).astype(cdt)
    ap = _pad2(a_norm, Np, Np).astype(cdt)

    wf1 = jnp.concatenate([_pad2(params["w1"], Fp, Hp),
                           _pad2(params["ws1"], Fp, Hp)], axis=1).astype(cdt)
    wf2 = jnp.concatenate([_pad2(params["w2"], Hp, Hp),
                           _pad2(params["ws2"], Hp, Lp)], axis=1).astype(cdt)
    w3 = _pad2(params["w3"], Hp, Lp).astype(cdt)

    # f32 epilogue constants; BatchNorm eval (running_mean=0, running_var=1)
    # precomputed; bs1 folded into shift1, bs2 folded into b3.
    inv_std = 1.0 / jnp.sqrt(1.0 + BN_EPS)
    b1 = _pad2(params["b1"], 1, Hp).astype(f32)
    b2 = _pad2(params["b2"], 1, Hp).astype(f32)
    scale1 = _pad2(params["g1"] * inv_std, 1, Hp).astype(f32)
    shift1 = _pad2(params["be1"] + params["bs1"], 1, Hp).astype(f32)
    scale2 = _pad2(params["g2"] * inv_std, 1, Hp).astype(f32)
    shift2 = _pad2(params["be2"], 1, Hp).astype(f32)
    b3 = _pad2(params["b3"] + params["bs2"], 1, Lp).astype(f32)

    # Index maps for the (i, k) grids.
    atile = lambda i, k: (i, k)      # A_hat tile
    kcol0 = lambda i, k: (k, 0)      # contraction-tile of a T slab (col-blk 0)
    rowi = lambda i, k: (i, 0)       # row tile, constant across k
    const = lambda i, k: (0, 0)      # resident operand

    # --- K1: fused feature transform  T1 = x @ [W1 || Ws1] -> (Np, 2*Hp) ---
    TM1 = _divisor_tile(Np, TM, 2048)   # big row tile; tiny per-step FLOPs
    t1 = pl.pallas_call(
        _xform_kernel,
        out_shape=jax.ShapeDtypeStruct((Np, 2 * Hp), cdt),
        grid=(Np // TM1,),
        in_specs=[pl.BlockSpec((TM1, Fp), lambda i: (i, 0)),
                  pl.BlockSpec((Fp, 2 * Hp), lambda i: (0, 0))],
        out_specs=pl.BlockSpec((TM1, 2 * Hp), lambda i: (i, 0)),
        compiler_params=_cp("parallel"),
    )(xp, wf1)

    # --- K2: h1 = BN1(relu(A@T1conv + b1)) + T1skip (+bs1); T2 = h1@[W2||Ws2]
    t2 = pl.pallas_call(
        _gcn_layer_skip_kernel,
        out_shape=jax.ShapeDtypeStruct((Np, Hp + Lp), cdt),
        grid=(nti, nk),
        in_specs=[pl.BlockSpec((TM, TK), atile),                # A_hat tile
                  pl.BlockSpec((TK, Hp), kcol0),                # T1 conv half
                  pl.BlockSpec((TM, Hp), lambda i, k: (i, 1)),  # T1 skip half
                  pl.BlockSpec((1, Hp), const),                 # b1
                  pl.BlockSpec((1, Hp), const),                 # scale1
                  pl.BlockSpec((1, Hp), const),                 # shift1 + bs1
                  pl.BlockSpec((Hp, Hp + Lp), const)],          # [W2 || Ws2]
        out_specs=pl.BlockSpec((TM, Hp + Lp), rowi),
        scratch_shapes=[pltpu.VMEM((TM, Hp), jnp.float32)],
        compiler_params=_cp("parallel", "arbitrary"),
    )(ap, t1, t1, b1, scale1, shift1, wf2)

    # --- K3: h2 = BN2(relu(A@T2conv + b2)); T3 = h2 @ W3 ---
    t3 = pl.pallas_call(
        _gcn_layer_kernel,
        out_shape=jax.ShapeDtypeStruct((Np, Lp), cdt),
        grid=(nti, nk),
        in_specs=[pl.BlockSpec((TM, TK), atile),
                  pl.BlockSpec((TK, Hp), kcol0),                # T2 conv half
                  pl.BlockSpec((1, Hp), const),                 # b2
                  pl.BlockSpec((1, Hp), const),                 # scale2
                  pl.BlockSpec((1, Hp), const),                 # shift2
                  pl.BlockSpec((Hp, Lp), const)],               # W3
        out_specs=pl.BlockSpec((TM, Lp), rowi),
        scratch_shapes=[pltpu.VMEM((TM, Hp), jnp.float32)],
        compiler_params=_cp("parallel", "arbitrary"),
    )(ap, t2, b2, scale2, shift2, w3)

    # --- K4: z = A@T3 + (b3 + bs2) + (h1 @ Ws2) ---
    skip2 = t2[:, Hp:]  # h1 @ Ws2 half of T2, sliced in the wrapper
    z_pad = pl.pallas_call(
        _layer3_kernel,
        out_shape=jax.ShapeDtypeStruct((Np, Lp), f32),
        grid=(nti, nk),
        in_specs=[pl.BlockSpec((TM, TK), atile),
                  pl.BlockSpec((TK, Lp), kcol0),                # T3
                  pl.BlockSpec((TM, Lp), rowi),                 # skip2 row tile
                  pl.BlockSpec((1, Lp), const)],                # b3 + bs2
        out_specs=pl.BlockSpec((TM, Lp), rowi),
        scratch_shapes=[pltpu.VMEM((TM, Lp), jnp.float32)],
        compiler_params=_cp("parallel", "arbitrary"),
    )(ap, t3, skip2, b3)

    # --- K5: adj = sigmoid(z @ z^T) ---
    # z^T transposed once in the wrapper and kept fully VMEM-resident via a
    # constant index_map (fetched once, no per-tile re-fetch); outputs are
    # full-width lane-dense row slabs. Kept f32: decode is store-bound, inputs
    # are negligible. TODO(synk): j-tile the output for Np beyond ~16K nodes.
    z_t = z_pad.T  # (Lp, Np)
    adj_pad = pl.pallas_call(
        _decode_kernel,
        out_shape=jax.ShapeDtypeStruct((Np, Np), f32),
        grid=(nti,),
        in_specs=[pl.BlockSpec((TM, Lp), lambda i: (i, 0)),
                  pl.BlockSpec((Lp, Np), lambda i: (0, 0))],    # resident z^T
        out_specs=pl.BlockSpec((TM, Np), lambda i: (i, 0)),
        compiler_params=_cp("parallel"),
    )(z_pad, z_t)

    return adj_pad[:N, :N], z_pad[:N, :L]


# ---------------------------------------------------------------------------
# Graph / parameter helpers and pure-numpy reference
# ---------------------------------------------------------------------------
def normalized_adjacency(edge_index, num_nodes):
    """PyG GCNConv normalization: D^{-1/2}(A + I)D^{-1/2} (edges made symmetric)."""
    src, dst = edge_index
    A = jnp.zeros((num_nodes, num_nodes), jnp.float32)
    A = A.at[src, dst].set(1.0)
    A = A.at[dst, src].set(1.0)
    idx = jnp.arange(num_nodes)
    A = A.at[idx, idx].set(1.0)  # add self-loops
    deg = A.sum(axis=1)
    dinv = jnp.where(deg > 0, 1.0 / jnp.sqrt(deg), 0.0)
    return dinv[:, None] * A * dinv[None, :]


def init_params(key, input_dim, hidden_dim, latent_dim):
    ks = jax.random.split(key, 8)
    f32 = jnp.float32

    def w(k, shape, fan_in):
        return (jax.random.normal(k, shape, f32) / np.sqrt(fan_in)).astype(f32)

    # GCNConv weights stored as (in, out) so the kernels do X @ W directly.
    # Linear skip weights are stored pre-transposed to (in, out) as well.
    return {
        "w1": w(ks[0], (input_dim, hidden_dim), input_dim),
        "b1": jnp.zeros((1, hidden_dim), f32),
        "w2": w(ks[1], (hidden_dim, hidden_dim), hidden_dim),
        "b2": jnp.zeros((1, hidden_dim), f32),
        "w3": w(ks[2], (hidden_dim, latent_dim), hidden_dim),
        "b3": jnp.zeros((1, latent_dim), f32),
        "ws1": w(ks[3], (input_dim, hidden_dim), input_dim),
        "bs1": w(ks[4], (1, hidden_dim), input_dim),
        "ws2": w(ks[5], (hidden_dim, latent_dim), hidden_dim),
        "bs2": w(ks[6], (1, latent_dim), hidden_dim),
        # BatchNorm1d affine params (default init gamma=1, beta=0)
        "g1": jnp.ones((1, hidden_dim), f32),
        "be1": jnp.zeros((1, hidden_dim), f32),
        "g2": jnp.ones((1, hidden_dim), f32),
        "be2": jnp.zeros((1, hidden_dim), f32),
    }


def reference_forward(x, a, p):
    inv_std = 1.0 / np.sqrt(1.0 + BN_EPS)
    h1 = np.maximum(a @ (x @ p["w1"]) + p["b1"], 0.0)
    h1 = h1 * (p["g1"] * inv_std) + p["be1"]
    h1 = h1 + x @ p["ws1"] + p["bs1"]
    h2 = np.maximum(a @ (h1 @ p["w2"]) + p["b2"], 0.0)
    h2 = h2 * (p["g2"] * inv_std) + p["be2"]
    z = a @ (h2 @ p["w3"]) + p["b3"]
    z = z + h1 @ p["ws2"] + p["bs2"]
    adj = 1.0 / (1.0 + np.exp(-(z @ z.T)))
    return adj, z


if __name__ == "__main__":
    # Small deterministic problem: 256 nodes (one 256-row tile),
    # module-default feature dims: input=16, hidden=64, latent=32.
    N, INPUT_DIM, HIDDEN_DIM, LATENT_DIM = 256, 16, 64, 32

    key = jax.random.PRNGKey(0)
    k_x, k_p = jax.random.split(key)

    x = jax.random.normal(k_x, (N, INPUT_DIM), jnp.float32)

    # Deterministic ring graph edge_index (2, E), made symmetric inside helper.
    src = jnp.arange(N, dtype=jnp.int32)
    dst = (src + 1) % N
    edge_index = jnp.stack([src, dst], axis=0)

    a_norm = normalized_adjacency(edge_index, N)
    params = init_params(k_p, INPUT_DIM, HIDDEN_DIM, LATENT_DIM)

    np_params = {k: np.asarray(v) for k, v in params.items()}
    adj_ref, z_ref = reference_forward(np.asarray(x), np.asarray(a_norm), np_params)

    # --- f32 MXU path: tight numerical check against numpy reference ---
    adj32, z32 = improved_gae_forward(x, a_norm, params,
                                      compute_dtype=jnp.float32)
    jax.block_until_ready((adj32, z32))
    assert adj32.shape == (N, N) and z32.shape == (N, LATENT_DIM)
    assert np.allclose(np.asarray(z32), z_ref, atol=1e-3, rtol=1e-3), \
        float(np.abs(np.asarray(z32) - z_ref).max())
    assert np.allclose(np.asarray(adj32), adj_ref, atol=1e-3, rtol=1e-3), \
        float(np.abs(np.asarray(adj32) - adj_ref).max())

    # --- default bf16 MXU path: coarse sanity bounds (bf16 rounding ~0.4%) ---
    adj_bf, z_bf = improved_gae_forward(x, a_norm, params)
    jax.block_until_ready((adj_bf, z_bf))
    assert adj_bf.shape == (N, N) and z_bf.shape == (N, LATENT_DIM)
    assert np.isfinite(np.asarray(z_bf)).all()
    assert float(np.abs(np.asarray(z_bf) - z_ref).max()) < 0.5
    assert float(np.abs(np.asarray(adj_bf) - adj_ref).max()) < 0.2

    print("KERNEL_OK")
</pallas_src>

<mosaic_0001>
module attributes {stable_mosaic.version = 11 : i64} {
  func.func @_xform_kernel(%arg0: i32, %arg1: memref<256x128xf32, #tpu.memory_space<vmem>>, %arg2: memref<128x256xf32, #tpu.memory_space<vmem>>, %arg3: memref<256x256xf32, #tpu.memory_space<vmem>>) attributes {dimension_semantics = [#tpu.dimension_semantics<parallel>], iteration_bounds = array<i64: 1>, scalar_prefetch = 0 : i64, scratch_operands = 0 : i64, tpu.core_type = #tpu.core_type<tc>, window_params = [{transform_indices = @transform_0, window_bounds = array<i64: 256, 128>}, {pipeline_mode = #tpu.pipeline_mode<synchronous>, transform_indices = @transform_1, window_bounds = array<i64: 128, 256>}, {transform_indices = @transform_2, window_bounds = array<i64: 256, 256>}]} {
    %c0 = arith.constant 0 : index
    %c0_0 = arith.constant 0 : index
    %0 = vector.load %arg1[%c0, %c0_0] : memref<256x128xf32, #tpu.memory_space<vmem>>, vector<256x128xf32>
    %c0_1 = arith.constant 0 : index
    %c0_2 = arith.constant 0 : index
    %1 = vector.load %arg2[%c0_1, %c0_2] : memref<128x256xf32, #tpu.memory_space<vmem>>, vector<128x256xf32>
    %cst = arith.constant dense<0.000000e+00> : vector<256x256xf32>
    %2 = tpu.matmul %0, %1, %cst {dimension_numbers = #tpu.dot_dimension_numbers<[1], [0], [0], [1], [0, 0, 1, 1], [], []>} : vector<256x128xf32>, vector<128x256xf32>, vector<256x256xf32> -> vector<256x256xf32>
    %c0_3 = arith.constant 0 : index
    %c0_4 = arith.constant 0 : index
    %3 = vector.load %arg3[%c0_3, %c0_4] : memref<256x256xf32, #tpu.memory_space<vmem>>, vector<256x256xf32>
    tpu.vector_store %arg3[%c0_3, %c0_4], %2 {strides = array<i32>} : memref<256x256xf32, #tpu.memory_space<vmem>>, vector<256x256xf32>,
    return
  }
  func.func @transform_0(%arg0: i32) -> (i32, i32) {
    %c0_i32 = arith.constant 0 : i32
    %c0_i32_0 = arith.constant 0 : i32
    return %arg0, %c0_i32 : i32, i32
  }
  func.func @transform_1(%arg0: i32) -> (i32, i32) {
    %c0_i32 = arith.constant 0 : i32
    %c0_i32_0 = arith.constant 0 : i32
    %c0_i32_1 = arith.constant 0 : i32
    return %c0_i32, %c0_i32_0 : i32, i32
  }
  func.func @transform_2(%arg0: i32) -> (i32, i32) {
    %c0_i32 = arith.constant 0 : i32
    %c0_i32_0 = arith.constant 0 : i32
    return %arg0, %c0_i32 : i32, i32
  }
}

module attributes {stable_mosaic.version = 11 : i64} {
  func.func @_gcn_layer_skip_kernel(%arg0: i32, %arg1: i32, %arg2: memref<256x256xf32, #tpu.memory_space<vmem>>, %arg3: memref<256x128xf32, #tpu.memory_space<vmem>>, %arg4: memref<256x128xf32, #tpu.memory_space<vmem>>, %arg5: memref<1x128xf32, #tpu.memory_space<vmem>>, %arg6: memref<1x128xf32, #tpu.memory_space<vmem>>, %arg7: memref<1x128xf32, #tpu.memory_space<vmem>>, %arg8: memref<128x256xf32, #tpu.memory_space<vmem>>, %arg9: memref<256x256xf32, #tpu.memory_space<vmem>>, %arg10: memref<256x128xf32, #tpu.memory_space<vmem>>) attributes {dimension_semantics = [#tpu.dimension_semantics<parallel>, #tpu.dimension_semantics<arbitrary>], iteration_bounds = array<i64: 1, 1>, scalar_prefetch = 0 : i64, scratch_operands = 1 : i64, tpu.core_type = #tpu.core_type<tc>, window_params = [{transform_indices = @transform_0, window_bounds = array<i64: 256, 256>}, {transform_indices = @transform_1, window_bounds = array<i64: 256, 128>}, {transform_indices = @transform_2, window_bounds = array<i64: 256, 128>}, {pipeline_mode = #tpu.pipeline_mode<synchronous>, transform_indices = @transform_3, window_bounds = array<i64: 1, 128>}, {pipeline_mode = #tpu.pipeline_mode<synchronous>, transform_indices = @transform_4, window_bounds = array<i64: 1, 128>}, {pipeline_mode = #tpu.pipeline_mode<synchronous>, transform_indices = @transform_5, window_bounds = array<i64: 1, 128>}, {pipeline_mode = #tpu.pipeline_mode<synchronous>, transform_indices = @transform_6, window_bounds = array<i64: 128, 256>}, {transform_indices = @transform_7, window_bounds = array<i64: 256, 256>}]} {
    %c0_i32 = arith.constant 0 : i32
    %0 = arith.cmpi eq, %arg1, %c0_i32 : i32
    %1 = arith.extui %0 : i1 to i32
    %c0_i32_0 = arith.constant 0 : i32
    %2 = arith.cmpi ne, %1, %c0_i32_0 : i32
    scf.if %2 {
      %cst_10 = arith.constant 0.000000e+00 : f32
      %12 = vector.broadcast %cst_10 : f32 to vector<256x128xf32>
      %c0_11 = arith.constant 0 : index
      %c0_12 = arith.constant 0 : index
      %13 = vector.load %arg10[%c0_11, %c0_12] : memref<256x128xf32, #tpu.memory_space<vmem>>, vector<256x128xf32>
      tpu.vector_store %arg10[%c0_11, %c0_12], %12 {strides = array<i32>} : memref<256x128xf32, #tpu.memory_space<vmem>>, vector<256x128xf32>,
    } else {
    }
    %c0 = arith.constant 0 : index
    %c0_1 = arith.constant 0 : index
    %3 = vector.load %arg10[%c0, %c0_1] : memref<256x128xf32, #tpu.memory_space<vmem>>, vector<256x128xf32>
    %c0_2 = arith.constant 0 : index
    %c0_3 = arith.constant 0 : index
    %4 = vector.load %arg2[%c0_2, %c0_3] : memref<256x256xf32, #tpu.memory_space<vmem>>, vector<256x256xf32>
    %c0_4 = arith.constant 0 : index
    %c0_5 = arith.constant 0 : index
    %5 = vector.load %arg3[%c0_4, %c0_5] : memref<256x128xf32, #tpu.memory_space<vmem>>, vector<256x128xf32>
    %cst = arith.constant dense<0.000000e+00> : vector<256x128xf32>
    %6 = tpu.matmul %4, %5, %cst {dimension_numbers = #tpu.dot_dimension_numbers<[1], [0], [0], [1], [0, 0, 1, 1], [], []>} : vector<256x256xf32>, vector<256x128xf32>, vector<256x128xf32> -> vector<256x128xf32>
    %7 = arith.addf %3, %6 : vector<256x128xf32>
    %c0_6 = arith.constant 0 : index
    %c0_7 = arith.constant 0 : index
    %8 = vector.load %arg10[%c0_6, %c0_7] : memref<256x128xf32, #tpu.memory_space<vmem>>, vector<256x128xf32>
    tpu.vector_store %arg10[%c0_6, %c0_7], %7 {strides = array<i32>} : memref<256x128xf32, #tpu.memory_space<vmem>>, vector<256x128xf32>,
    %c0_i32_8 = arith.constant 0 : i32
    %9 = arith.cmpi eq, %arg1, %c0_i32_8 : i32
    %10 = arith.extui %9 : i1 to i32
    %c0_i32_9 = arith.constant 0 : i32
    %11 = arith.cmpi ne, %10, %c0_i32_9 : i32
    scf.if %11 {
      %c0_10 = arith.constant 0 : index
      %c0_11 = arith.constant 0 : index
      %12 = vector.load %arg10[%c0_10, %c0_11] : memref<256x128xf32, #tpu.memory_space<vmem>>, vector<256x128xf32>
      %c0_12 = arith.constant 0 : index
      %c0_13 = arith.constant 0 : index
      %13 = vector.load %arg5[%c0_12, %c0_13] : memref<1x128xf32, #tpu.memory_space<vmem>>, vector<1x128xf32>
      %c0_14 = arith.constant 0 : index
      %c0_15 = arith.constant 0 : index
      %14 = vector.load %arg6[%c0_14, %c0_15] : memref<1x128xf32, #tpu.memory_space<vmem>>, vector<1x128xf32>
      %c0_16 = arith.constant 0 : index
      %c0_17 = arith.constant 0 : index
      %15 = vector.load %arg7[%c0_16, %c0_17] : memref<1x128xf32, #tpu.memory_space<vmem>>, vector<1x128xf32>
      %c0_18 = arith.constant 0 : index
      %c0_19 = arith.constant 0 : index
      %16 = vector.load %arg4[%c0_18, %c0_19] : memref<256x128xf32, #tpu.memory_space<vmem>>, vector<256x128xf32>
      %17 = vector.broadcast %13 : vector<1x128xf32> to vector<256x128xf32>
      %18 = arith.addf %12, %17 : vector<256x128xf32>
      %cst_20 = arith.constant 0.000000e+00 : f32
      %19 = vector.broadcast %cst_20 : f32 to vector<256x128xf32>
      %20 = arith.maximumf %18, %19 : vector<256x128xf32>
      %21 = vector.broadcast %14 : vector<1x128xf32> to vector<256x128xf32>
      %22 = arith.mulf %20, %21 : vector<256x128xf32>
      %23 = vector.broadcast %15 : vector<1x128xf32> to vector<256x128xf32>
      %24 = arith.addf %22, %23 : vector<256x128xf32>
      %25 = arith.addf %24, %16 : vector<256x128xf32>
      %c0_21 = arith.constant 0 : index
      %c0_22 = arith.constant 0 : index
      %26 = vector.load %arg8[%c0_21, %c0_22] : memref<128x256xf32, #tpu.memory_space<vmem>>, vector<128x256xf32>
      %cst_23 = arith.constant dense<0.000000e+00> : vector<256x256xf32>
      %27 = tpu.matmul %25, %26, %cst_23 {dimension_numbers = #tpu.dot_dimension_numbers<[1], [0], [0], [1], [0, 0, 1, 1], [], []>} : vector<256x128xf32>, vector<128x256xf32>, vector<256x256xf32> -> vector<256x256xf32>
      %c0_24 = arith.constant 0 : index
      %c0_25 = arith.constant 0 : index
      %28 = vector.load %arg9[%c0_24, %c0_25] : memref<256x256xf32, #tpu.memory_space<vmem>>, vector<256x256xf32>
      tpu.vector_store %arg9[%c0_24, %c0_25], %27 {strides = array<i32>} : memref<256x256xf32, #tpu.memory_space<vmem>>, vector<256x256xf32>,
    } else {
    }
    return
  }
  func.func @transform_0(%arg0: i32, %arg1: i32) -> (i32, i32) {
    %c0_i32 = arith.constant 0 : i32
    return %arg0, %arg1 : i32, i32
  }
  func.func @transform_1(%arg0: i32, %arg1: i32) -> (i32, i32) {
    %c0_i32 = arith.constant 0 : i32
    %c0_i32_0 = arith.constant 0 : i32
    return %arg1, %c0_i32 : i32, i32
  }
  func.func @transform_2(%arg0: i32, %arg1: i32) -> (i32, i32) {
    %c1_i32 = arith.constant 1 : i32
    %c0_i32 = arith.constant 0 : i32
    return %arg0, %c1_i32 : i32, i32
  }
  func.func @transform_3(%arg0: i32, %arg1: i32) -> (i32, i32) {
    %c0_i32 = arith.constant 0 : i32
    %c0_i32_0 = arith.constant 0 : i32
    %c0_i32_1 = arith.constant 0 : i32
    return %c0_i32, %c0_i32_0 : i32, i32
  }
  func.func @transform_4(%arg0: i32, %arg1: i32) -> (i32, i32) {
    %c0_i32 = arith.constant 0 : i32
    %c0_i32_0 = arith.constant 0 : i32
    %c0_i32_1 = arith.constant 0 : i32
    return %c0_i32, %c0_i32_0 : i32, i32
  }
  func.func @transform_5(%arg0: i32, %arg1: i32) -> (i32, i32) {
    %c0_i32 = arith.constant 0 : i32
    %c0_i32_0 = arith.constant 0 : i32
    %c0_i32_1 = arith.constant 0 : i32
    return %c0_i32, %c0_i32_0 : i32, i32
  }
  func.func @transform_6(%arg0: i32, %arg1: i32) -> (i32, i32) {
    %c0_i32 = arith.constant 0 : i32
    %c0_i32_0 = arith.constant 0 : i32
    %c0_i32_1 = arith.constant 0 : i32
    return %c0_i32, %c0_i32_0 : i32, i32
  }
  func.func @transform_7(%arg0: i32, %arg1: i32) -> (i32, i32) {
    %c0_i32 = arith.constant 0 : i32
    %c0_i32_0 = arith.constant 0 : i32
    return %arg0, %c0_i32 : i32, i32
  }
}

module attributes {stable_mosaic.version = 11 : i64} {
  func.func @_gcn_layer_kernel(%arg0: i32, %arg1: i32, %arg2: memref<256x256xf32, #tpu.memory_space<vmem>>, %arg3: memref<256x128xf32, #tpu.memory_space<vmem>>, %arg4: memref<1x128xf32, #tpu.memory_space<vmem>>, %arg5: memref<1x128xf32, #tpu.memory_space<vmem>>, %arg6: memref<1x128xf32, #tpu.memory_space<vmem>>, %arg7: memref<128x128xf32, #tpu.memory_space<vmem>>, %arg8: memref<256x128xf32, #tpu.memory_space<vmem>>, %arg9: memref<256x128xf32, #tpu.memory_space<vmem>>) attributes {dimension_semantics = [#tpu.dimension_semantics<parallel>, #tpu.dimension_semantics<arbitrary>], iteration_bounds = array<i64: 1, 1>, scalar_prefetch = 0 : i64, scratch_operands = 1 : i64, tpu.core_type = #tpu.core_type<tc>, window_params = [{transform_indices = @transform_0, window_bounds = array<i64: 256, 256>}, {transform_indices = @transform_1, window_bounds = array<i64: 256, 128>}, {pipeline_mode = #tpu.pipeline_mode<synchronous>, transform_indices = @transform_2, window_bounds = array<i64: 1, 128>}, {pipeline_mode = #tpu.pipeline_mode<synchronous>, transform_indices = @transform_3, window_bounds = array<i64: 1, 128>}, {pipeline_mode = #tpu.pipeline_mode<synchronous>, transform_indices = @transform_4, window_bounds = array<i64: 1, 128>}, {pipeline_mode = #tpu.pipeline_mode<synchronous>, transform_indices = @transform_5, window_bounds = array<i64: 128, 128>}, {transform_indices = @transform_6, window_bounds = array<i64: 256, 128>}]} {
    %c0_i32 = arith.constant 0 : i32
    %0 = arith.cmpi eq, %arg1, %c0_i32 : i32
    %1 = arith.extui %0 : i1 to i32
    %c0_i32_0 = arith.constant 0 : i32
    %2 = arith.cmpi ne, %1, %c0_i32_0 : i32
    scf.if %2 {
      %cst_10 = arith.constant 0.000000e+00 : f32
      %12 = vector.broadcast %cst_10 : f32 to vector<256x128xf32>
      %c0_11 = arith.constant 0 : index
      %c0_12 = arith.constant 0 : index
      %13 = vector.load %arg9[%c0_11, %c0_12] : memref<256x128xf32, #tpu.memory_space<vmem>>, vector<256x128xf32>
      tpu.vector_store %arg9[%c0_11, %c0_12], %12 {strides = array<i32>} : memref<256x128xf32, #tpu.memory_space<vmem>>, vector<256x128xf32>,
    } else {
    }
    %c0 = arith.constant 0 : index
    %c0_1 = arith.constant 0 : index
    %3 = vector.load %arg9[%c0, %c0_1] : memref<256x128xf32, #tpu.memory_space<vmem>>, vector<256x128xf32>
    %c0_2 = arith.constant 0 : index
    %c0_3 = arith.constant 0 : index
    %4 = vector.load %arg2[%c0_2, %c0_3] : memref<256x256xf32, #tpu.memory_space<vmem>>, vector<256x256xf32>
    %c0_4 = arith.constant 0 : index
    %c0_5 = arith.constant 0 : index
    %5 = vector.load %arg3[%c0_4, %c0_5] : memref<256x128xf32, #tpu.memory_space<vmem>>, vector<256x128xf32>
    %cst = arith.constant dense<0.000000e+00> : vector<256x128xf32>
    %6 = tpu.matmul %4, %5, %cst {dimension_numbers = #tpu.dot_dimension_numbers<[1], [0], [0], [1], [0, 0, 1, 1], [], []>} : vector<256x256xf32>, vector<256x128xf32>, vector<256x128xf32> -> vector<256x128xf32>
    %7 = arith.addf %3, %6 : vector<256x128xf32>
    %c0_6 = arith.constant 0 : index
    %c0_7 = arith.constant 0 : index
    %8 = vector.load %arg9[%c0_6, %c0_7] : memref<256x128xf32, #tpu.memory_space<vmem>>, vector<256x128xf32>
    tpu.vector_store %arg9[%c0_6, %c0_7], %7 {strides = array<i32>} : memref<256x128xf32, #tpu.memory_space<vmem>>, vector<256x128xf32>,
    %c0_i32_8 = arith.constant 0 : i32
    %9 = arith.cmpi eq, %arg1, %c0_i32_8 : i32
    %10 = arith.extui %9 : i1 to i32
    %c0_i32_9 = arith.constant 0 : i32
    %11 = arith.cmpi ne, %10, %c0_i32_9 : i32
    scf.if %11 {
      %c0_10 = arith.constant 0 : index
      %c0_11 = arith.constant 0 : index
      %12 = vector.load %arg9[%c0_10, %c0_11] : memref<256x128xf32, #tpu.memory_space<vmem>>, vector<256x128xf32>
      %c0_12 = arith.constant 0 : index
      %c0_13 = arith.constant 0 : index
      %13 = vector.load %arg4[%c0_12, %c0_13] : memref<1x128xf32, #tpu.memory_space<vmem>>, vector<1x128xf32>
      %c0_14 = arith.constant 0 : index
      %c0_15 = arith.constant 0 : index
      %14 = vector.load %arg5[%c0_14, %c0_15] : memref<1x128xf32, #tpu.memory_space<vmem>>, vector<1x128xf32>
      %c0_16 = arith.constant 0 : index
      %c0_17 = arith.constant 0 : index
      %15 = vector.load %arg6[%c0_16, %c0_17] : memref<1x128xf32, #tpu.memory_space<vmem>>, vector<1x128xf32>
      %16 = vector.broadcast %13 : vector<1x128xf32> to vector<256x128xf32>
      %17 = arith.addf %12, %16 : vector<256x128xf32>
      %cst_18 = arith.constant 0.000000e+00 : f32
      %18 = vector.broadcast %cst_18 : f32 to vector<256x128xf32>
      %19 = arith.maximumf %17, %18 : vector<256x128xf32>
      %20 = vector.broadcast %14 : vector<1x128xf32> to vector<256x128xf32>
      %21 = arith.mulf %19, %20 : vector<256x128xf32>
      %22 = vector.broadcast %15 : vector<1x128xf32> to vector<256x128xf32>
      %23 = arith.addf %21, %22 : vector<256x128xf32>
      %c0_19 = arith.constant 0 : index
      %c0_20 = arith.constant 0 : index
      %24 = vector.load %arg7[%c0_19, %c0_20] : memref<128x128xf32, #tpu.memory_space<vmem>>, vector<128x128xf32>
      %cst_21 = arith.constant dense<0.000000e+00> : vector<256x128xf32>
      %25 = tpu.matmul %23, %24, %cst_21 {dimension_numbers = #tpu.dot_dimension_numbers<[1], [0], [0], [1], [0, 0, 1, 1], [], []>} : vector<256x128xf32>, vector<128x128xf32>, vector<256x128xf32> -> vector<256x128xf32>
      %c0_22 = arith.constant 0 : index
      %c0_23 = arith.constant 0 : index
      %26 = vector.load %arg8[%c0_22, %c0_23] : memref<256x128xf32, #tpu.memory_space<vmem>>, vector<256x128xf32>
      tpu.vector_store %arg8[%c0_22, %c0_23], %25 {strides = array<i32>} : memref<256x128xf32, #tpu.memory_space<vmem>>, vector<256x128xf32>,
    } else {
    }
    return
  }
  func.func @transform_0(%arg0: i32, %arg1: i32) -> (i32, i32) {
    %c0_i32 = arith.constant 0 : i32
    return %arg0, %arg1 : i32, i32
  }
  func.func @transform_1(%arg0: i32, %arg1: i32) -> (i32, i32) {
    %c0_i32 = arith.constant 0 : i32
    %c0_i32_0 = arith.constant 0 : i32
    return %arg1, %c0_i32 : i32, i32
  }
  func.func @transform_2(%arg0: i32, %arg1: i32) -> (i32, i32) {
    %c0_i32 = arith.constant 0 : i32
    %c0_i32_0 = arith.constant 0 : i32
    %c0_i32_1 = arith.constant 0 : i32
    return %c0_i32, %c0_i32_0 : i32, i32
  }
  func.func @transform_3(%arg0: i32, %arg1: i32) -> (i32, i32) {
    %c0_i32 = arith.constant 0 : i32
    %c0_i32_0 = arith.constant 0 : i32
    %c0_i32_1 = arith.constant 0 : i32
    return %c0_i32, %c0_i32_0 : i32, i32
  }
  func.func @transform_4(%arg0: i32, %arg1: i32) -> (i32, i32) {
    %c0_i32 = arith.constant 0 : i32
    %c0_i32_0 = arith.constant 0 : i32
    %c0_i32_1 = arith.constant 0 : i32
    return %c0_i32, %c0_i32_0 : i32, i32
  }
  func.func @transform_5(%arg0: i32, %arg1: i32) -> (i32, i32) {
    %c0_i32 = arith.constant 0 : i32
    %c0_i32_0 = arith.constant 0 : i32
    %c0_i32_1 = arith.constant 0 : i32
    return %c0_i32, %c0_i32_0 : i32, i32
  }
  func.func @transform_6(%arg0: i32, %arg1: i32) -> (i32, i32) {
    %c0_i32 = arith.constant 0 : i32
    %c0_i32_0 = arith.constant 0 : i32
    return %arg0, %c0_i32 : i32, i32
  }
}

module attributes {stable_mosaic.version = 11 : i64} {
  func.func @_layer3_kernel(%arg0: i32, %arg1: i32, %arg2: memref<256x256xf32, #tpu.memory_space<vmem>>, %arg3: memref<256x128xf32, #tpu.memory_space<vmem>>, %arg4: memref<256x128xf32, #tpu.memory_space<vmem>>, %arg5: memref<1x128xf32, #tpu.memory_space<vmem>>, %arg6: memref<256x128xf32, #tpu.memory_space<vmem>>, %arg7: memref<256x128xf32, #tpu.memory_space<vmem>>) attributes {dimension_semantics = [#tpu.dimension_semantics<parallel>, #tpu.dimension_semantics<arbitrary>], iteration_bounds = array<i64: 1, 1>, scalar_prefetch = 0 : i64, scratch_operands = 1 : i64, tpu.core_type = #tpu.core_type<tc>, window_params = [{transform_indices = @transform_0, window_bounds = array<i64: 256, 256>}, {transform_indices = @transform_1, window_bounds = array<i64: 256, 128>}, {transform_indices = @transform_2, window_bounds = array<i64: 256, 128>}, {pipeline_mode = #tpu.pipeline_mode<synchronous>, transform_indices = @transform_3, window_bounds = array<i64: 1, 128>}, {transform_indices = @transform_4, window_bounds = array<i64: 256, 128>}]} {
    %c0_i32 = arith.constant 0 : i32
    %0 = arith.cmpi eq, %arg1, %c0_i32 : i32
    %1 = arith.extui %0 : i1 to i32
    %c0_i32_0 = arith.constant 0 : i32
    %2 = arith.cmpi ne, %1, %c0_i32_0 : i32
    scf.if %2 {
      %cst_10 = arith.constant 0.000000e+00 : f32
      %12 = vector.broadcast %cst_10 : f32 to vector<256x128xf32>
      %c0_11 = arith.constant 0 : index
      %c0_12 = arith.constant 0 : index
      %13 = vector.load %arg7[%c0_11, %c0_12] : memref<256x128xf32, #tpu.memory_space<vmem>>, vector<256x128xf32>
      tpu.vector_store %arg7[%c0_11, %c0_12], %12 {strides = array<i32>} : memref<256x128xf32, #tpu.memory_space<vmem>>, vector<256x128xf32>,
    } else {
    }
    %c0 = arith.constant 0 : index
    %c0_1 = arith.constant 0 : index
    %3 = vector.load %arg7[%c0, %c0_1] : memref<256x128xf32, #tpu.memory_space<vmem>>, vector<256x128xf32>
    %c0_2 = arith.constant 0 : index
    %c0_3 = arith.constant 0 : index
    %4 = vector.load %arg2[%c0_2, %c0_3] : memref<256x256xf32, #tpu.memory_space<vmem>>, vector<256x256xf32>
    %c0_4 = arith.constant 0 : index
    %c0_5 = arith.constant 0 : index
    %5 = vector.load %arg3[%c0_4, %c0_5] : memref<256x128xf32, #tpu.memory_space<vmem>>, vector<256x128xf32>
    %cst = arith.constant dense<0.000000e+00> : vector<256x128xf32>
    %6 = tpu.matmul %4, %5, %cst {dimension_numbers = #tpu.dot_dimension_numbers<[1], [0], [0], [1], [0, 0, 1, 1], [], []>} : vector<256x256xf32>, vector<256x128xf32>, vector<256x128xf32> -> vector<256x128xf32>
    %7 = arith.addf %3, %6 : vector<256x128xf32>
    %c0_6 = arith.constant 0 : index
    %c0_7 = arith.constant 0 : index
    %8 = vector.load %arg7[%c0_6, %c0_7] : memref<256x128xf32, #tpu.memory_space<vmem>>, vector<256x128xf32>
    tpu.vector_store %arg7[%c0_6, %c0_7], %7 {strides = array<i32>} : memref<256x128xf32, #tpu.memory_space<vmem>>, vector<256x128xf32>,
    %c0_i32_8 = arith.constant 0 : i32
    %9 = arith.cmpi eq, %arg1, %c0_i32_8 : i32
    %10 = arith.extui %9 : i1 to i32
    %c0_i32_9 = arith.constant 0 : i32
    %11 = arith.cmpi ne, %10, %c0_i32_9 : i32
    scf.if %11 {
      %c0_10 = arith.constant 0 : index
      %c0_11 = arith.constant 0 : index
      %12 = vector.load %arg7[%c0_10, %c0_11] : memref<256x128xf32, #tpu.memory_space<vmem>>, vector<256x128xf32>
      %c0_12 = arith.constant 0 : index
      %c0_13 = arith.constant 0 : index
      %13 = vector.load %arg5[%c0_12, %c0_13] : memref<1x128xf32, #tpu.memory_space<vmem>>, vector<1x128xf32>
      %14 = vector.broadcast %13 : vector<1x128xf32> to vector<256x128xf32>
      %15 = arith.addf %12, %14 : vector<256x128xf32>
      %c0_14 = arith.constant 0 : index
      %c0_15 = arith.constant 0 : index
      %16 = vector.load %arg4[%c0_14, %c0_15] : memref<256x128xf32, #tpu.memory_space<vmem>>, vector<256x128xf32>
      %17 = arith.addf %15, %16 : vector<256x128xf32>
      %c0_16 = arith.constant 0 : index
      %c0_17 = arith.constant 0 : index
      %18 = vector.load %arg6[%c0_16, %c0_17] : memref<256x128xf32, #tpu.memory_space<vmem>>, vector<256x128xf32>
      tpu.vector_store %arg6[%c0_16, %c0_17], %17 {strides = array<i32>} : memref<256x128xf32, #tpu.memory_space<vmem>>, vector<256x128xf32>,
    } else {
    }
    return
  }
  func.func @transform_0(%arg0: i32, %arg1: i32) -> (i32, i32) {
    %c0_i32 = arith.constant 0 : i32
    return %arg0, %arg1 : i32, i32
  }
  func.func @transform_1(%arg0: i32, %arg1: i32) -> (i32, i32) {
    %c0_i32 = arith.constant 0 : i32
    %c0_i32_0 = arith.constant 0 : i32
    return %arg1, %c0_i32 : i32, i32
  }
  func.func @transform_2(%arg0: i32, %arg1: i32) -> (i32, i32) {
    %c0_i32 = arith.constant 0 : i32
    %c0_i32_0 = arith.constant 0 : i32
    return %arg0, %c0_i32 : i32, i32
  }
  func.func @transform_3(%arg0: i32, %arg1: i32) -> (i32, i32) {
    %c0_i32 = arith.constant 0 : i32
    %c0_i32_0 = arith.constant 0 : i32
    %c0_i32_1 = arith.constant 0 : i32
    return %c0_i32, %c0_i32_0 : i32, i32
  }
  func.func @transform_4(%arg0: i32, %arg1: i32) -> (i32, i32) {
    %c0_i32 = arith.constant 0 : i32
    %c0_i32_0 = arith.constant 0 : i32
    return %arg0, %c0_i32 : i32, i32
  }
}

module attributes {stable_mosaic.version = 11 : i64} {
  func.func @_decode_kernel(%arg0: i32, %arg1: memref<256x128xf32, #tpu.memory_space<vmem>>, %arg2: memref<128x256xf32, #tpu.memory_space<vmem>>, %arg3: memref<256x256xf32, #tpu.memory_space<vmem>>) attributes {dimension_semantics = [#tpu.dimension_semantics<parallel>], iteration_bounds = array<i64: 1>, scalar_prefetch = 0 : i64, scratch_operands = 0 : i64, tpu.core_type = #tpu.core_type<tc>, window_params = [{transform_indices = @transform_0, window_bounds = array<i64: 256, 128>}, {pipeline_mode = #tpu.pipeline_mode<synchronous>, transform_indices = @transform_1, window_bounds = array<i64: 128, 256>}, {transform_indices = @transform_2, window_bounds = array<i64: 256, 256>}]} {
    %c0 = arith.constant 0 : index
    %c0_0 = arith.constant 0 : index
    %0 = vector.load %arg1[%c0, %c0_0] : memref<256x128xf32, #tpu.memory_space<vmem>>, vector<256x128xf32>
    %c0_1 = arith.constant 0 : index
    %c0_2 = arith.constant 0 : index
    %1 = vector.load %arg2[%c0_1, %c0_2] : memref<128x256xf32, #tpu.memory_space<vmem>>, vector<128x256xf32>
    %cst = arith.constant dense<0.000000e+00> : vector<256x256xf32>
    %2 = tpu.matmul %0, %1, %cst {dimension_numbers = #tpu.dot_dimension_numbers<[1], [0], [0], [1], [0, 0, 1, 1], [], []>} : vector<256x128xf32>, vector<128x256xf32>, vector<256x256xf32> -> vector<256x256xf32>
    %3 = arith.negf %2 : vector<256x256xf32>
    %4 = math.exp %3 : vector<256x256xf32>
    %cst_3 = arith.constant 1.000000e+00 : f32
    %5 = vector.broadcast %cst_3 : f32 to vector<256x256xf32>
    %6 = arith.addf %5, %4 : vector<256x256xf32>
    %7 = arith.divf %5, %6 : vector<256x256xf32>
    %c0_4 = arith.constant 0 : index
    %c0_5 = arith.constant 0 : index
    %8 = vector.load %arg3[%c0_4, %c0_5] : memref<256x256xf32, #tpu.memory_space<vmem>>, vector<256x256xf32>
    tpu.vector_store %arg3[%c0_4, %c0_5], %7 {strides = array<i32>} : memref<256x256xf32, #tpu.memory_space<vmem>>, vector<256x256xf32>,
    return
  }
  func.func @transform_0(%arg0: i32) -> (i32, i32) {
    %c0_i32 = arith.constant 0 : i32
    %c0_i32_0 = arith.constant 0 : i32
    return %arg0, %c0_i32 : i32, i32
  }
  func.func @transform_1(%arg0: i32) -> (i32, i32) {
    %c0_i32 = arith.constant 0 : i32
    %c0_i32_0 = arith.constant 0 : i32
    %c0_i32_1 = arith.constant 0 : i32
    return %c0_i32, %c0_i32_0 : i32, i32
  }
  func.func @transform_2(%arg0: i32) -> (i32, i32) {
    %c0_i32 = arith.constant 0 : i32
    %c0_i32_0 = arith.constant 0 : i32
    return %arg0, %c0_i32 : i32, i32
  }
}

</mosaic_0001>

<llo_original>
// kernel: improved_gae_forward.5
$region0: #{improved_gae_forward.5}
  #allocation0 [shape = 'u32[]', space=smem, size = 0x4, offset = 0x4, fixed_abs, tag = 'smem constant byte address 0x4 - core index']
  #allocation1 [shape = 'u32[72,128]{1,0:T(1,128)}', space=vmem, size = 0x9000, scoped, tag = 'internal scratch']
  %s0 = inlined_call_operand.vmem [shape: f32[256,128], index: 0, kind: input, shape index: {}]
  %s1 = inlined_call_operand.vmem [shape: f32[128,256], index: 1, kind: input, shape index: {}]
  %s2 = inlined_call_operand.vmem [shape: f32[256,256], index: 2, kind: output, shape index: {}]
  %s3 = sld [smem:[#allocation0]]
  $region18: #{improved_gae_forward.5} parent=0
    _
  %s5 = ssub.s32 1, %s3
  %s6 = scalar_select 0, %s5, %s3
  // Predicated region
  $region2: #{improved_gae_forward.5} parent=0 // pred_check
    _
  $region3: #{improved_gae_forward.5} parent=0 // pred_check_branch
    %8 = sbr.rel (0) target = $region5
  $region4: #{improved_gae_forward.5} parent=0 // pred_region
    _
  $region5: #{improved_gae_forward.5} parent=0 // pred_fallthru
    _
  // Predicated region
  $region6: #{improved_gae_forward.5} parent=0 // pred_check
    _
  $region7: #{improved_gae_forward.5} parent=0 // pred_check_branch
    %10 = sbr.rel (0) target = $region9
  $region8: #{improved_gae_forward.5} parent=0 // pred_region
    _
  $region9: #{improved_gae_forward.5} parent=0 // pred_fallthru
    _
  %v11 = vld [vmem:[%s0] sm:$0xff]
  %v12 = vld [vmem:[%s0 + $0x8] sm:$0xff]
  %v13 = vld [vmem:[%s0 + $0x10] sm:$0xff]
  %v14 = vld [vmem:[%s0 + $0x18] sm:$0xff]
  %v15 = vld [vmem:[%s0 + $0x20] sm:$0xff]
  %v16 = vld [vmem:[%s0 + $0x28] sm:$0xff]
  %v17 = vld [vmem:[%s0 + $0x30] sm:$0xff]
  %v18 = vld [vmem:[%s0 + $0x38] sm:$0xff]
  %v19 = vld [vmem:[%s0 + $0x40] sm:$0xff]
  %v20 = vld [vmem:[%s0 + $0x48] sm:$0xff]
  %v21 = vld [vmem:[%s0 + $0x50] sm:$0xff]
  %v22 = vld [vmem:[%s0 + $0x58] sm:$0xff]
  %v23 = vld [vmem:[%s0 + $0x60] sm:$0xff]
  %v24 = vld [vmem:[%s0 + $0x68] sm:$0xff]
  %v25 = vld [vmem:[%s0 + $0x70] sm:$0xff]
  %v26 = vld [vmem:[%s0 + $0x78] sm:$0xff]
  %v27 = vld [vmem:[%s0 + $0x80] sm:$0xff]
  %v28 = vld [vmem:[%s0 + $0x88] sm:$0xff]
  %v29 = vld [vmem:[%s0 + $0x90] sm:$0xff]
  %v30 = vld [vmem:[%s0 + $0x98] sm:$0xff]
  %v31 = vld [vmem:[%s0 + $0xa0] sm:$0xff]
  %v32 = vld [vmem:[%s0 + $0xa8] sm:$0xff]
  %v33 = vld [vmem:[%s0 + $0xb0] sm:$0xff]
  %v34 = vld [vmem:[%s0 + $0xb8] sm:$0xff]
  %v35 = vld [vmem:[%s0 + $0xc0] sm:$0xff]
  %v36 = vld [vmem:[%s0 + $0xc8] sm:$0xff]
  %v37 = vld [vmem:[%s0 + $0xd0] sm:$0xff]
  %v38 = vld [vmem:[%s0 + $0xd8] sm:$0xff]
  %v39 = vld [vmem:[%s0 + $0xe0] sm:$0xff]
  %v40 = vld [vmem:[%s0 + $0xe8] sm:$0xff]
  %v41 = vld [vmem:[%s0 + $0xf0] sm:$0xff]
  %v42 = vld [vmem:[%s0 + $0xf8] sm:$0xff]
  %v43 = vld [vmem:[%s1] sm:$0xff]
  %v44 = vld [vmem:[%s1 + $0x8] sm:$0xff]
  %v45 = vld [vmem:[%s1 + $0x10] sm:$0xff]
  %v46 = vld [vmem:[%s1 + $0x18] sm:$0xff]
  %v47 = vld [vmem:[%s1 + $0x20] sm:$0xff]
  %v48 = vld [vmem:[%s1 + $0x28] sm:$0xff]
  %v49 = vld [vmem:[%s1 + $0x30] sm:$0xff]
  %v50 = vld [vmem:[%s1 + $0x38] sm:$0xff]
  %v51 = vld [vmem:[%s1 + $0x40] sm:$0xff]
  %v52 = vld [vmem:[%s1 + $0x48] sm:$0xff]
  %v53 = vld [vmem:[%s1 + $0x50] sm:$0xff]
  %v54 = vld [vmem:[%s1 + $0x58] sm:$0xff]
  %v55 = vld [vmem:[%s1 + $0x60] sm:$0xff]
  %v56 = vld [vmem:[%s1 + $0x68] sm:$0xff]
  %v57 = vld [vmem:[%s1 + $0x70] sm:$0xff]
  %v58 = vld [vmem:[%s1 + $0x78] sm:$0xff]
  %v59 = vld [vmem:[%s1 + $0x80] sm:$0xff]
  %v60 = vld [vmem:[%s1 + $0x88] sm:$0xff]
  %v61 = vld [vmem:[%s1 + $0x90] sm:$0xff]
  %v62 = vld [vmem:[%s1 + $0x98] sm:$0xff]
  %v63 = vld [vmem:[%s1 + $0xa0] sm:$0xff]
  %v64 = vld [vmem:[%s1 + $0xa8] sm:$0xff]
  %v65 = vld [vmem:[%s1 + $0xb0] sm:$0xff]
  %v66 = vld [vmem:[%s1 + $0xb8] sm:$0xff]
  %v67 = vld [vmem:[%s1 + $0xc0] sm:$0xff]
  %v68 = vld [vmem:[%s1 + $0xc8] sm:$0xff]
  %v69 = vld [vmem:[%s1 + $0xd0] sm:$0xff]
  %v70 = vld [vmem:[%s1 + $0xd8] sm:$0xff]
  %v71 = vld [vmem:[%s1 + $0xe0] sm:$0xff]
  %v72 = vld [vmem:[%s1 + $0xe8] sm:$0xff]
  %v73 = vld [vmem:[%s1 + $0xf0] sm:$0xff]
  %v74 = vld [vmem:[%s1 + $0xf8] sm:$0xff]
  %75 = vmatpush.msra.mxu0 %v73
  %76 = vmatpush.msra.mxu0 %v71
  %77 = vmatpush.msra.mxu0 %v69
  %78 = vmatpush.msra.mxu0 %v67
  %79 = vmatpush.msra.mxu0 %v65
  %80 = vmatpush.msra.mxu0 %v63
  %81 = vmatpush.msra.mxu0 %v61
  %82 = vmatpush.msra.mxu0 %v59
  %83 = vmatpush.msra.mxu0 %v57
  %84 = vmatpush.msra.mxu0 %v55
  %85 = vmatpush.msra.mxu0 %v53
  %86 = vmatpush.msra.mxu0 %v51
  %87 = vmatpush.msra.mxu0 %v49
  %88 = vmatpush.msra.mxu0 %v47
  %89 = vmatpush.msra.mxu0 %v45
  %90 = vmatpush.msra.mxu0 %v43
  %91 = vmatmul.f32.gmra.mxu0 %v11
  %v92 = vpop.f32.mrf.mxu0
  %v93 = vadd.f32 0.0, %v92
  %94 = vmatmul.f32.gmra.mxu0 %v12
  %v95 = vpop.f32.mrf.mxu0
  %v96 = vadd.f32 0.0, %v95
  %97 = vmatmul.f32.gmra.mxu0 %v13
  %v98 = vpop.f32.mrf.mxu0
  %v99 = vadd.f32 0.0, %v98
  %100 = vmatmul.f32.gmra.mxu0 %v14
  %v101 = vpop.f32.mrf.mxu0
  %v102 = vadd.f32 0.0, %v101
  %103 = vmatmul.f32.gmra.mxu0 %v15
  %v104 = vpop.f32.mrf.mxu0
  %v105 = vadd.f32 0.0, %v104
  %106 = vmatmul.f32.gmra.mxu0 %v16
  %v107 = vpop.f32.mrf.mxu0
  %v108 = vadd.f32 0.0, %v107
  %109 = vmatmul.f32.gmra.mxu0 %v17
  %v110 = vpop.f32.mrf.mxu0
  %v111 = vadd.f32 0.0, %v110
  %112 = vmatmul.f32.gmra.mxu0 %v18
  %v113 = vpop.f32.mrf.mxu0
  %v114 = vadd.f32 0.0, %v113
  %115 = vmatmul.f32.gmra.mxu0 %v19
  %v116 = vpop.f32.mrf.mxu0
  %v117 = vadd.f32 0.0, %v116
  %118 = vmatmul.f32.gmra.mxu0 %v20
  %v119 = vpop.f32.mrf.mxu0
  %v120 = vadd.f32 0.0, %v119
  %121 = vmatmul.f32.gmra.mxu0 %v21
  %v122 = vpop.f32.mrf.mxu0
  %v123 = vadd.f32 0.0, %v122
  %124 = vmatmul.f32.gmra.mxu0 %v22
  %v125 = vpop.f32.mrf.mxu0
  %v126 = vadd.f32 0.0, %v125
  %127 = vmatmul.f32.gmra.mxu0 %v23
  %v128 = vpop.f32.mrf.mxu0
  %v129 = vadd.f32 0.0, %v128
  %130 = vmatmul.f32.gmra.mxu0 %v24
  %v131 = vpop.f32.mrf.mxu0
  %v132 = vadd.f32 0.0, %v131
  %133 = vmatmul.f32.gmra.mxu0 %v25
  %v134 = vpop.f32.mrf.mxu0
  %v135 = vadd.f32 0.0, %v134
  %136 = vmatmul.f32.gmra.mxu0 %v26
  %v137 = vpop.f32.mrf.mxu0
  %v138 = vadd.f32 0.0, %v137
  %139 = vmatmul.f32.gmra.mxu0 %v27
  %v140 = vpop.f32.mrf.mxu0
  %v141 = vadd.f32 0.0, %v140
  %142 = vmatmul.f32.gmra.mxu0 %v28
  %v143 = vpop.f32.mrf.mxu0
  %v144 = vadd.f32 0.0, %v143
  %145 = vmatmul.f32.gmra.mxu0 %v29
  %v146 = vpop.f32.mrf.mxu0
  %v147 = vadd.f32 0.0, %v146
  %148 = vmatmul.f32.gmra.mxu0 %v30
  %v149 = vpop.f32.mrf.mxu0
  %v150 = vadd.f32 0.0, %v149
  %151 = vmatmul.f32.gmra.mxu0 %v31
  %v152 = vpop.f32.mrf.mxu0
  %v153 = vadd.f32 0.0, %v152
  %154 = vmatmul.f32.gmra.mxu0 %v32
  %v155 = vpop.f32.mrf.mxu0
  %v156 = vadd.f32 0.0, %v155
  %157 = vmatmul.f32.gmra.mxu0 %v33
  %v158 = vpop.f32.mrf.mxu0
  %v159 = vadd.f32 0.0, %v158
  %160 = vmatmul.f32.gmra.mxu0 %v34
  %v161 = vpop.f32.mrf.mxu0
  %v162 = vadd.f32 0.0, %v161
  %163 = vmatmul.f32.gmra.mxu0 %v35
  %v164 = vpop.f32.mrf.mxu0
  %v165 = vadd.f32 0.0, %v164
  %166 = vmatmul.f32.gmra.mxu0 %v36
  %v167 = vpop.f32.mrf.mxu0
  %v168 = vadd.f32 0.0, %v167
  %169 = vmatmul.f32.gmra.mxu0 %v37
  %v170 = vpop.f32.mrf.mxu0
  %v171 = vadd.f32 0.0, %v170
  %172 = vmatmul.f32.gmra.mxu0 %v38
  %v173 = vpop.f32.mrf.mxu0
  %v174 = vadd.f32 0.0, %v173
  %175 = vmatmul.f32.gmra.mxu0 %v39
  %v176 = vpop.f32.mrf.mxu0
  %v177 = vadd.f32 0.0, %v176
  %178 = vmatmul.f32.gmra.mxu0 %v40
  %v179 = vpop.f32.mrf.mxu0
  %v180 = vadd.f32 0.0, %v179
  %181 = vmatmul.f32.gmra.mxu0 %v41
  %v182 = vpop.f32.mrf.mxu0
  %v183 = vadd.f32 0.0, %v182
  %184 = vmatmul.f32.gmra.mxu0 %v42
  %v185 = vpop.f32.mrf.mxu0
  %v186 = vadd.f32 0.0, %v185
  %187 = vdwg.mxu0
  %188 = vmatpush.msra.mxu0 %v74
  %189 = vmatpush.msra.mxu0 %v72
  %190 = vmatpush.msra.mxu0 %v70
  %191 = vmatpush.msra.mxu0 %v68
  %192 = vmatpush.msra.mxu0 %v66
  %193 = vmatpush.msra.mxu0 %v64
  %194 = vmatpush.msra.mxu0 %v62
  %195 = vmatpush.msra.mxu0 %v60
  %196 = vmatpush.msra.mxu0 %v58
  %197 = vmatpush.msra.mxu0 %v56
  %198 = vmatpush.msra.mxu0 %v54
  %199 = vmatpush.msra.mxu0 %v52
  %200 = vmatpush.msra.mxu0 %v50
  %201 = vmatpush.msra.mxu0 %v48
  %202 = vmatpush.msra.mxu0 %v46
  %203 = vmatpush.msra.mxu0 %v44
  %204 = vmatmul.f32.gmra.mxu0 %v11
  %v205 = vpop.f32.mrf.mxu0
  %v206 = vadd.f32 0.0, %v205
  %207 = vmatmul.f32.gmra.mxu0 %v12
  %v208 = vpop.f32.mrf.mxu0
  %v209 = vadd.f32 0.0, %v208
  %210 = vmatmul.f32.gmra.mxu0 %v13
  %v211 = vpop.f32.mrf.mxu0
  %v212 = vadd.f32 0.0, %v211
  %213 = vmatmul.f32.gmra.mxu0 %v14
  %v214 = vpop.f32.mrf.mxu0
  %v215 = vadd.f32 0.0, %v214
  %216 = vmatmul.f32.gmra.mxu0 %v15
  %v217 = vpop.f32.mrf.mxu0
  %v218 = vadd.f32 0.0, %v217
  %219 = vmatmul.f32.gmra.mxu0 %v16
  %v220 = vpop.f32.mrf.mxu0
  %v221 = vadd.f32 0.0, %v220
  %222 = vmatmul.f32.gmra.mxu0 %v17
  %v223 = vpop.f32.mrf.mxu0
  %v224 = vadd.f32 0.0, %v223
  %225 = vmatmul.f32.gmra.mxu0 %v18
  %v226 = vpop.f32.mrf.mxu0
  %v227 = vadd.f32 0.0, %v226
  %228 = vmatmul.f32.gmra.mxu0 %v19
  %v229 = vpop.f32.mrf.mxu0
  %v230 = vadd.f32 0.0, %v229
  %231 = vmatmul.f32.gmra.mxu0 %v20
  %v232 = vpop.f32.mrf.mxu0
  %v233 = vadd.f32 0.0, %v232
  %234 = vmatmul.f32.gmra.mxu0 %v21
  %v235 = vpop.f32.mrf.mxu0
  %v236 = vadd.f32 0.0, %v235
  %237 = vmatmul.f32.gmra.mxu0 %v22
  %v238 = vpop.f32.mrf.mxu0
  %v239 = vadd.f32 0.0, %v238
  %240 = vmatmul.f32.gmra.mxu0 %v23
  %v241 = vpop.f32.mrf.mxu0
  %v242 = vadd.f32 0.0, %v241
  %243 = vmatmul.f32.gmra.mxu0 %v24
  %v244 = vpop.f32.mrf.mxu0
  %v245 = vadd.f32 0.0, %v244
  %246 = vmatmul.f32.gmra.mxu0 %v25
  %v247 = vpop.f32.mrf.mxu0
  %v248 = vadd.f32 0.0, %v247
  %249 = vmatmul.f32.gmra.mxu0 %v26
  %v250 = vpop.f32.mrf.mxu0
  %v251 = vadd.f32 0.0, %v250
  %252 = vmatmul.f32.gmra.mxu0 %v27
  %v253 = vpop.f32.mrf.mxu0
  %v254 = vadd.f32 0.0, %v253
  %255 = vmatmul.f32.gmra.mxu0 %v28
  %v256 = vpop.f32.mrf.mxu0
  %v257 = vadd.f32 0.0, %v256
  %258 = vmatmul.f32.gmra.mxu0 %v29
  %v259 = vpop.f32.mrf.mxu0
  %v260 = vadd.f32 0.0, %v259
  %261 = vmatmul.f32.gmra.mxu0 %v30
  %v262 = vpop.f32.mrf.mxu0
  %v263 = vadd.f32 0.0, %v262
  %264 = vmatmul.f32.gmra.mxu0 %v31
  %v265 = vpop.f32.mrf.mxu0
  %v266 = vadd.f32 0.0, %v265
  %267 = vmatmul.f32.gmra.mxu0 %v32
  %v268 = vpop.f32.mrf.mxu0
  %v269 = vadd.f32 0.0, %v268
  %270 = vmatmul.f32.gmra.mxu0 %v33
  %v271 = vpop.f32.mrf.mxu0
  %v272 = vadd.f32 0.0, %v271
  %273 = vmatmul.f32.gmra.mxu0 %v34
  %v274 = vpop.f32.mrf.mxu0
  %v275 = vadd.f32 0.0, %v274
  %276 = vmatmul.f32.gmra.mxu0 %v35
  %v277 = vpop.f32.mrf.mxu0
  %v278 = vadd.f32 0.0, %v277
  %279 = vmatmul.f32.gmra.mxu0 %v36
  %v280 = vpop.f32.mrf.mxu0
  %v281 = vadd.f32 0.0, %v280
  %282 = vmatmul.f32.gmra.mxu0 %v37
  %v283 = vpop.f32.mrf.mxu0
  %v284 = vadd.f32 0.0, %v283
  %285 = vmatmul.f32.gmra.mxu0 %v38
  %v286 = vpop.f32.mrf.mxu0
  %v287 = vadd.f32 0.0, %v286
  %288 = vmatmul.f32.gmra.mxu0 %v39
  %v289 = vpop.f32.mrf.mxu0
  %v290 = vadd.f32 0.0, %v289
  %291 = vmatmul.f32.gmra.mxu0 %v40
  %v292 = vpop.f32.mrf.mxu0
  %v293 = vadd.f32 0.0, %v292
  %294 = vmatmul.f32.gmra.mxu0 %v41
  %v295 = vpop.f32.mrf.mxu0
  %v296 = vadd.f32 0.0, %v295
  %297 = vmatmul.f32.gmra.mxu0 %v42
  %v298 = vpop.f32.mrf.mxu0
  %v299 = vadd.f32 0.0, %v298
  %300 = vdwg.mxu0
  %301 = vst [vmem:[%s2] sm:$0xff] %v93
  %302 = vst [vmem:[%s2 + $0x8] sm:$0xff] %v206
  %303 = vst [vmem:[%s2 + $0x10] sm:$0xff] %v96
  %304 = vst [vmem:[%s2 + $0x18] sm:$0xff] %v209
  %305 = vst [vmem:[%s2 + $0x20] sm:$0xff] %v99
  %306 = vst [vmem:[%s2 + $0x28] sm:$0xff] %v212
  %307 = vst [vmem:[%s2 + $0x30] sm:$0xff] %v102
  %308 = vst [vmem:[%s2 + $0x38] sm:$0xff] %v215
  %309 = vst [vmem:[%s2 + $0x40] sm:$0xff] %v105
  %310 = vst [vmem:[%s2 + $0x48] sm:$0xff] %v218
  %311 = vst [vmem:[%s2 + $0x50] sm:$0xff] %v108
  %312 = vst [vmem:[%s2 + $0x58] sm:$0xff] %v221
  %313 = vst [vmem:[%s2 + $0x60] sm:$0xff] %v111
  %314 = vst [vmem:[%s2 + $0x68] sm:$0xff] %v224
  %315 = vst [vmem:[%s2 + $0x70] sm:$0xff] %v114
  %316 = vst [vmem:[%s2 + $0x78] sm:$0xff] %v227
  %317 = vst [vmem:[%s2 + $0x80] sm:$0xff] %v117
  %318 = vst [vmem:[%s2 + $0x88] sm:$0xff] %v230
  %319 = vst [vmem:[%s2 + $0x90] sm:$0xff] %v120
  %320 = vst [vmem:[%s2 + $0x98] sm:$0xff] %v233
  %321 = vst [vmem:[%s2 + $0xa0] sm:$0xff] %v123
  %322 = vst [vmem:[%s2 + $0xa8] sm:$0xff] %v236
  %323 = vst [vmem:[%s2 + $0xb0] sm:$0xff] %v126
  %324 = vst [vmem:[%s2 + $0xb8] sm:$0xff] %v239
  %325 = vst [vmem:[%s2 + $0xc0] sm:$0xff] %v129
  %326 = vst [vmem:[%s2 + $0xc8] sm:$0xff] %v242
  %327 = vst [vmem:[%s2 + $0xd0] sm:$0xff] %v132
  %328 = vst [vmem:[%s2 + $0xd8] sm:$0xff] %v245
  %329 = vst [vmem:[%s2 + $0xe0] sm:$0xff] %v135
  %330 = vst [vmem:[%s2 + $0xe8] sm:$0xff] %v248
  %331 = vst [vmem:[%s2 + $0xf0] sm:$0xff] %v138
  %332 = vst [vmem:[%s2 + $0xf8] sm:$0xff] %v251
  %333 = vst [vmem:[%s2 + $0x100] sm:$0xff] %v141
  %334 = vst [vmem:[%s2 + $0x108] sm:$0xff] %v254
  %335 = vst [vmem:[%s2 + $0x110] sm:$0xff] %v144
  %336 = vst [vmem:[%s2 + $0x118] sm:$0xff] %v257
  %337 = vst [vmem:[%s2 + $0x120] sm:$0xff] %v147
  %338 = vst [vmem:[%s2 + $0x128] sm:$0xff] %v260
  %339 = vst [vmem:[%s2 + $0x130] sm:$0xff] %v150
  %340 = vst [vmem:[%s2 + $0x138] sm:$0xff] %v263
  %341 = vst [vmem:[%s2 + $0x140] sm:$0xff] %v153
  %342 = vst [vmem:[%s2 + $0x148] sm:$0xff] %v266
  %343 = vst [vmem:[%s2 + $0x150] sm:$0xff] %v156
  %344 = vst [vmem:[%s2 + $0x158] sm:$0xff] %v269
  %345 = vst [vmem:[%s2 + $0x160] sm:$0xff] %v159
  %346 = vst [vmem:[%s2 + $0x168] sm:$0xff] %v272
  %347 = vst [vmem:[%s2 + $0x170] sm:$0xff] %v162
  %348 = vst [vmem:[%s2 + $0x178] sm:$0xff] %v275
  %349 = vst [vmem:[%s2 + $0x180] sm:$0xff] %v165
  %350 = vst [vmem:[%s2 + $0x188] sm:$0xff] %v278
  %351 = vst [vmem:[%s2 + $0x190] sm:$0xff] %v168
  %352 = vst [vmem:[%s2 + $0x198] sm:$0xff] %v281
  %353 = vst [vmem:[%s2 + $0x1a0] sm:$0xff] %v171
  %354 = vst [vmem:[%s2 + $0x1a8] sm:$0xff] %v284
  %355 = vst [vmem:[%s2 + $0x1b0] sm:$0xff] %v174
  %356 = vst [vmem:[%s2 + $0x1b8] sm:$0xff] %v287
  %357 = vst [vmem:[%s2 + $0x1c0] sm:$0xff] %v177
  %358 = vst [vmem:[%s2 + $0x1c8] sm:$0xff] %v290
  %359 = vst [vmem:[%s2 + $0x1d0] sm:$0xff] %v180
  %360 = vst [vmem:[%s2 + $0x1d8] sm:$0xff] %v293
  %361 = vst [vmem:[%s2 + $0x1e0] sm:$0xff] %v183
  %362 = vst [vmem:[%s2 + $0x1e8] sm:$0xff] %v296
  %363 = vst [vmem:[%s2 + $0x1f0] sm:$0xff] %v186
  %364 = vst [vmem:[%s2 + $0x1f8] sm:$0xff] %v299
  // Predicated region
  $region10: #{improved_gae_forward.5} parent=0 // pred_check
    _
  $region11: #{improved_gae_forward.5} parent=0 // pred_check_branch
    %366 = sbr.rel (0) target = $region13
  $region12: #{improved_gae_forward.5} parent=0 // pred_region
    _
  $region13: #{improved_gae_forward.5} parent=0 // pred_fallthru
    _
  // Predicated region
  $region14: #{improved_gae_forward.5} parent=0 // pred_check
    _
  $region15: #{improved_gae_forward.5} parent=0 // pred_check_branch
    %368 = sbr.rel (0) target = $region17
  $region16: #{improved_gae_forward.5} parent=0 // pred_region
    _
  $region17: #{improved_gae_forward.5} parent=0 // pred_fallthru
    _

// kernel: improved_gae_forward.7
$region0: #{improved_gae_forward.7}
  #allocation0 [shape = 'u32[]', space=smem, size = 0x4, offset = 0x4, fixed_abs, tag = 'smem constant byte address 0x4 - core index']
  #allocation1 [shape = 'u32[72,128]{1,0:T(1,128)}', space=vmem, size = 0x9000, scoped, tag = 'internal scratch']
  #allocation2 [shape = 'f32[256,128]{1,0:T(8,128)}', space=vmem, size = 0x20000, scoped, tag = 'scratch operand']
  %s0 = inlined_call_operand.vmem [shape: f32[256,256], index: 0, kind: input, shape index: {}]
  %s1 = inlined_call_operand.vmem [shape: f32[256,256], index: 1, kind: input, shape index: {}]
  %s2 = inlined_call_operand.vmem [shape: f32[1,128], index: 2, kind: input, shape index: {}]
  %s3 = inlined_call_operand.vmem [shape: f32[1,128], index: 3, kind: input, shape index: {}]
  %s4 = inlined_call_operand.vmem [shape: f32[1,128], index: 4, kind: input, shape index: {}]
  %s5 = inlined_call_operand.vmem [shape: f32[128,128], index: 5, kind: input, shape index: {}]
  %s6 = inlined_call_operand.vmem [shape: f32[256,128], index: 6, kind: output, shape index: {}]
  %s7 = sld [smem:[#allocation0]]
  $region80: #{improved_gae_forward.7} parent=0
    _
  %s9 = ssub.s32 1, %s7
  %s10 = scalar_select 0, %s9, %s7
  $region1: #{improved_gae_forward.7} parent=0
    #allocation3 [shape = 'u8[131072]{0}', space=vmem, size = 0x20000, scoped, tag = 'input window, operand 1, single buffered']
    // Predicated region
    $region2: #{improved_gae_forward.7} parent=1 // pred_check
      _
    $region3: #{improved_gae_forward.7} parent=1 // pred_check_branch
      %12 = sbr.rel (0) target = $region5
    $region4: #{improved_gae_forward.7} parent=1 // pred_region
      _
    $region5: #{improved_gae_forward.7} parent=1 // pred_fallthru
      _
    // Predicated region
    $region6: #{improved_gae_forward.7} parent=1 // pred_check
      _
    $region7: #{improved_gae_forward.7} parent=1 // pred_check_branch
      %14 = sbr.rel (0) target = $region9
    $region8: #{improved_gae_forward.7} parent=1 // pred_region
      // Predicated region
      $region10: #{improved_gae_forward.7} parent=8 // pred_check
        _
      $region11: #{improved_gae_forward.7} parent=8 // pred_check_branch
        %16 = sbr.rel (0) target = $region13
      $region12: #{improved_gae_forward.7} parent=8 // pred_region
        // Predicated region
        $region14: #{improved_gae_forward.7} parent=12 // pred_check
          _
        $region15: #{improved_gae_forward.7} parent=12 // pred_check_branch
          %18 = sbr.rel (0) target = $region17
        $region16: #{improved_gae_forward.7} parent=12 // pred_region
          // Predicated region
          $region29: #{improved_gae_forward.7} parent=16 // pred_check
            _
          $region30: #{improved_gae_forward.7} parent=16 // pred_check_branch
            %96 = sbr.rel (0) target = $region32
          $region31: #{improved_gae_forward.7} parent=16 // pred_region
            loop: start=0, step=1, limit=1
            $region33: #{improved_gae_forward.7} parent=31 // loop_pre_header
              _
            $region34: #{improved_gae_forward.7} parent=31 // loop_header
              %s98 = sphi 0, %s102
              %p99 = scmp.ge.s32.totalorder %s98, 1
              %s103 = sphi %s1, %s1
              %s104 = sphi [#allocation3], [#allocation3]
            $region35: #{improved_gae_forward.7} parent=31 // loop_header_branch
              %101 = sbr.rel (%p99) target = $region39
            $region36: #{improved_gae_forward.7} parent=31 // loop_body
              %v105 = vld [vmem:[%s103] sm:$0xff]
              %106 = vst [vmem:[%s104] sm:$0xff] %v105
              %v107 = vld [vmem:[%s103 + $0x10] sm:$0xff]
              %108 = vst [vmem:[%s104 + $0x8] sm:$0xff] %v107
              %v109 = vld [vmem:[%s103 + $0x20] sm:$0xff]
              %110 = vst [vmem:[%s104 + $0x10] sm:$0xff] %v109
              %v111 = vld [vmem:[%s103 + $0x30] sm:$0xff]
              %112 = vst [vmem:[%s104 + $0x18] sm:$0xff] %v111
              %v113 = vld [vmem:[%s103 + $0x40] sm:$0xff]
              %114 = vst [vmem:[%s104 + $0x20] sm:$0xff] %v113
              %v115 = vld [vmem:[%s103 + $0x50] sm:$0xff]
              %116 = vst [vmem:[%s104 + $0x28] sm:$0xff] %v115
              %v117 = vld [vmem:[%s103 + $0x60] sm:$0xff]
              %118 = vst [vmem:[%s104 + $0x30] sm:$0xff] %v117
              %v119 = vld [vmem:[%s103 + $0x70] sm:$0xff]
              %120 = vst [vmem:[%s104 + $0x38] sm:$0xff] %v119
              %v121 = vld [vmem:[%s103 + $0x80] sm:$0xff]
              %122 = vst [vmem:[%s104 + $0x40] sm:$0xff] %v121
              %v123 = vld [vmem:[%s103 + $0x90] sm:$0xff]
              %124 = vst [vmem:[%s104 + $0x48] sm:$0xff] %v123
              %v125 = vld [vmem:[%s103 + $0xa0] sm:$0xff]
              %126 = vst [vmem:[%s104 + $0x50] sm:$0xff] %v125
              %v127 = vld [vmem:[%s103 + $0xb0] sm:$0xff]
              %128 = vst [vmem:[%s104 + $0x58] sm:$0xff] %v127
              %v129 = vld [vmem:[%s103 + $0xc0] sm:$0xff]
              %130 = vst [vmem:[%s104 + $0x60] sm:$0xff] %v129
              %v131 = vld [vmem:[%s103 + $0xd0] sm:$0xff]
              %132 = vst [vmem:[%s104 + $0x68] sm:$0xff] %v131
              %v133 = vld [vmem:[%s103 + $0xe0] sm:$0xff]
              %134 = vst [vmem:[%s104 + $0x70] sm:$0xff] %v133
              %v135 = vld [vmem:[%s103 + $0xf0] sm:$0xff]
              %136 = vst [vmem:[%s104 + $0x78] sm:$0xff] %v135
              %v137 = vld [vmem:[%s103 + $0x100] sm:$0xff]
              %138 = vst [vmem:[%s104 + $0x80] sm:$0xff] %v137
              %v139 = vld [vmem:[%s103 + $0x110] sm:$0xff]
              %140 = vst [vmem:[%s104 + $0x88] sm:$0xff] %v139
              %v141 = vld [vmem:[%s103 + $0x120] sm:$0xff]
              %142 = vst [vmem:[%s104 + $0x90] sm:$0xff] %v141
              %v143 = vld [vmem:[%s103 + $0x130] sm:$0xff]
              %144 = vst [vmem:[%s104 + $0x98] sm:$0xff] %v143
              %v145 = vld [vmem:[%s103 + $0x140] sm:$0xff]
              %146 = vst [vmem:[%s104 + $0xa0] sm:$0xff] %v145
              %v147 = vld [vmem:[%s103 + $0x150] sm:$0xff]
              %148 = vst [vmem:[%s104 + $0xa8] sm:$0xff] %v147
              %v149 = vld [vmem:[%s103 + $0x160] sm:$0xff]
              %150 = vst [vmem:[%s104 + $0xb0] sm:$0xff] %v149
              %v151 = vld [vmem:[%s103 + $0x170] sm:$0xff]
              %152 = vst [vmem:[%s104 + $0xb8] sm:$0xff] %v151
              %v153 = vld [vmem:[%s103 + $0x180] sm:$0xff]
              %154 = vst [vmem:[%s104 + $0xc0] sm:$0xff] %v153
              %v155 = vld [vmem:[%s103 + $0x190] sm:$0xff]
              %156 = vst [vmem:[%s104 + $0xc8] sm:$0xff] %v155
              %v157 = vld [vmem:[%s103 + $0x1a0] sm:$0xff]
              %158 = vst [vmem:[%s104 + $0xd0] sm:$0xff] %v157
              %v159 = vld [vmem:[%s103 + $0x1b0] sm:$0xff]
              %160 = vst [vmem:[%s104 + $0xd8] sm:$0xff] %v159
              %v161 = vld [vmem:[%s103 + $0x1c0] sm:$0xff]
              %162 = vst [vmem:[%s104 + $0xe0] sm:$0xff] %v161
              %v163 = vld [vmem:[%s103 + $0x1d0] sm:$0xff]
              %164 = vst [vmem:[%s104 + $0xe8] sm:$0xff] %v163
              %v165 = vld [vmem:[%s103 + $0x1e0] sm:$0xff]
              %166 = vst [vmem:[%s104 + $0xf0] sm:$0xff] %v165
              %v167 = vld [vmem:[%s103 + $0x1f0] sm:$0xff]
              %168 = vst [vmem:[%s104 + $0xf8] sm:$0xff] %v167
            $region37: #{improved_gae_forward.7} parent=31 // loop_footer
              %s102 = sadd.s32 1, %s98
            $region38: #{improved_gae_forward.7} parent=31 // loop_footer_branch
              %97 = sbr.rel target = $region34
            $region39: #{improved_gae_forward.7} parent=31 // loop_exit
              _
          $region32: #{improved_gae_forward.7} parent=16 // pred_fallthru
            _
          // Predicated region
          $region40: #{improved_gae_forward.7} parent=16 // pred_check
            _
          $region41: #{improved_gae_forward.7} parent=16 // pred_check_branch
            %170 = sbr.rel target = $region43
          $region42: #{improved_gae_forward.7} parent=16 // pred_region
            _
          $region43: #{improved_gae_forward.7} parent=16 // pred_fallthru
            _
        $region17: #{improved_gae_forward.7} parent=12 // pred_fallthru
          _
        // Predicated region
        $region18: #{improved_gae_forward.7} parent=12 // pred_check
          _
        $region19: #{improved_gae_forward.7} parent=12 // pred_check_branch
          %20 = sbr.rel target = $region21
        $region20: #{improved_gae_forward.7} parent=12 // pred_region
          %s22 = ssub.s32 256, 1
          loop: start=0, step=1, limit=1
          $region22: #{improved_gae_forward.7} parent=20 // loop_pre_header
            _
          $region23: #{improved_gae_forward.7} parent=20 // loop_header
            %s24 = sphi 0, %s28
            %p25 = scmp.ge.s32.totalorder %s24, 1
            %s29 = sphi %s1, %s1
            %s30 = sphi [#allocation3], [#allocation3]
          $region24: #{improved_gae_forward.7} parent=20 // loop_header_branch
            %27 = sbr.rel (%p25) target = $region28
          $region25: #{improved_gae_forward.7} parent=20 // loop_body
            %v31 = vld [vmem:[%s29] sm:%s22]
            %32 = vst [vmem:[%s30] sm:%s22] %v31
            %v33 = vld [vmem:[%s29 + $0x10] sm:%s22]
            %34 = vst [vmem:[%s30 + $0x8] sm:%s22] %v33
            %v35 = vld [vmem:[%s29 + $0x20] sm:%s22]
            %36 = vst [vmem:[%s30 + $0x10] sm:%s22] %v35
            %v37 = vld [vmem:[%s29 + $0x30] sm:%s22]
            %38 = vst [vmem:[%s30 + $0x18] sm:%s22] %v37
            %v39 = vld [vmem:[%s29 + $0x40] sm:%s22]
            %40 = vst [vmem:[%s30 + $0x20] sm:%s22] %v39
            %v41 = vld [vmem:[%s29 + $0x50] sm:%s22]
            %42 = vst [vmem:[%s30 + $0x28] sm:%s22] %v41
            %v43 = vld [vmem:[%s29 + $0x60] sm:%s22]
            %44 = vst [vmem:[%s30 + $0x30] sm:%s22] %v43
            %v45 = vld [vmem:[%s29 + $0x70] sm:%s22]
            %46 = vst [vmem:[%s30 + $0x38] sm:%s22] %v45
            %v47 = vld [vmem:[%s29 + $0x80] sm:%s22]
            %48 = vst [vmem:[%s30 + $0x40] sm:%s22] %v47
            %v49 = vld [vmem:[%s29 + $0x90] sm:%s22]
            %50 = vst [vmem:[%s30 + $0x48] sm:%s22] %v49
            %v51 = vld [vmem:[%s29 + $0xa0] sm:%s22]
            %52 = vst [vmem:[%s30 + $0x50] sm:%s22] %v51
            %v53 = vld [vmem:[%s29 + $0xb0] sm:%s22]
            %54 = vst [vmem:[%s30 + $0x58] sm:%s22] %v53
            %v55 = vld [vmem:[%s29 + $0xc0] sm:%s22]
            %56 = vst [vmem:[%s30 + $0x60] sm:%s22] %v55
            %v57 = vld [vmem:[%s29 + $0xd0] sm:%s22]
            %58 = vst [vmem:[%s30 + $0x68] sm:%s22] %v57
            %v59 = vld [vmem:[%s29 + $0xe0] sm:%s22]
            %60 = vst [vmem:[%s30 + $0x70] sm:%s22] %v59
            %v61 = vld [vmem:[%s29 + $0xf0] sm:%s22]
            %62 = vst [vmem:[%s30 + $0x78] sm:%s22] %v61
            %v63 = vld [vmem:[%s29 + $0x100] sm:%s22]
            %64 = vst [vmem:[%s30 + $0x80] sm:%s22] %v63
            %v65 = vld [vmem:[%s29 + $0x110] sm:%s22]
            %66 = vst [vmem:[%s30 + $0x88] sm:%s22] %v65
            %v67 = vld [vmem:[%s29 + $0x120] sm:%s22]
            %68 = vst [vmem:[%s30 + $0x90] sm:%s22] %v67
            %v69 = vld [vmem:[%s29 + $0x130] sm:%s22]
            %70 = vst [vmem:[%s30 + $0x98] sm:%s22] %v69
            %v71 = vld [vmem:[%s29 + $0x140] sm:%s22]
            %72 = vst [vmem:[%s30 + $0xa0] sm:%s22] %v71
            %v73 = vld [vmem:[%s29 + $0x150] sm:%s22]
            %74 = vst [vmem:[%s30 + $0xa8] sm:%s22] %v73
            %v75 = vld [vmem:[%s29 + $0x160] sm:%s22]
            %76 = vst [vmem:[%s30 + $0xb0] sm:%s22] %v75
            %v77 = vld [vmem:[%s29 + $0x170] sm:%s22]
            %78 = vst [vmem:[%s30 + $0xb8] sm:%s22] %v77
            %v79 = vld [vmem:[%s29 + $0x180] sm:%s22]
            %80 = vst [vmem:[%s30 + $0xc0] sm:%s22] %v79
            %v81 = vld [vmem:[%s29 + $0x190] sm:%s22]
            %82 = vst [vmem:[%s30 + $0xc8] sm:%s22] %v81
            %v83 = vld [vmem:[%s29 + $0x1a0] sm:%s22]
            %84 = vst [vmem:[%s30 + $0xd0] sm:%s22] %v83
            %v85 = vld [vmem:[%s29 + $0x1b0] sm:%s22]
            %86 = vst [vmem:[%s30 + $0xd8] sm:%s22] %v85
            %v87 = vld [vmem:[%s29 + $0x1c0] sm:%s22]
            %88 = vst [vmem:[%s30 + $0xe0] sm:%s22] %v87
            %v89 = vld [vmem:[%s29 + $0x1d0] sm:%s22]
            %90 = vst [vmem:[%s30 + $0xe8] sm:%s22] %v89
            %v91 = vld [vmem:[%s29 + $0x1e0] sm:%s22]
            %92 = vst [vmem:[%s30 + $0xf0] sm:%s22] %v91
            %v93 = vld [vmem:[%s29 + $0x1f0] sm:%s22]
            %94 = vst [vmem:[%s30 + $0xf8] sm:%s22] %v93
          $region26: #{improved_gae_forward.7} parent=20 // loop_footer
            %s28 = sadd.s32 1, %s24
          $region27: #{improved_gae_forward.7} parent=20 // loop_footer_branch
            %23 = sbr.rel target = $region23
          $region28: #{improved_gae_forward.7} parent=20 // loop_exit
            _
        $region21: #{improved_gae_forward.7} parent=12 // pred_fallthru
          _
      $region13: #{improved_gae_forward.7} parent=8 // pred_fallthru
        _
      %171 = vnop
    $region9: #{improved_gae_forward.7} parent=1 // pred_fallthru
      _
    // Predicated region
    $region44: #{improved_gae_forward.7} parent=1 // pred_check
      _
    $region45: #{improved_gae_forward.7} parent=1 // pred_check_branch
      %173 = sbr.rel (0) target = $region47
    $region46: #{improved_gae_forward.7} parent=1 // pred_region
      _
    $region47: #{improved_gae_forward.7} parent=1 // pred_fallthru
      _
    // Predicated region
    $region48: #{improved_gae_forward.7} parent=1 // pred_check
      _
    $region49: #{improved_gae_forward.7} parent=1 // pred_check_branch
      %175 = sbr.rel (0) target = $region51
    $region50: #{improved_gae_forward.7} parent=1 // pred_region
      _
    $region51: #{improved_gae_forward.7} parent=1 // pred_fallthru
      _
    // Predicated region
    $region52: #{improved_gae_forward.7} parent=1 // pred_check
      _
    $region53: #{improved_gae_forward.7} parent=1 // pred_check_branch
      %177 = sbr.rel (0) target = $region55
    $region54: #{improved_gae_forward.7} parent=1 // pred_region
      _
    $region55: #{improved_gae_forward.7} parent=1 // pred_fallthru
      _
    // Predicated region
    $region56: #{improved_gae_forward.7} parent=1 // pred_check
      _
    $region57: #{improved_gae_forward.7} parent=1 // pred_check_branch
      %179 = sbr.rel (0) target = $region59
    $region58: #{improved_gae_forward.7} parent=1 // pred_region
      _
    $region59: #{improved_gae_forward.7} parent=1 // pred_fallthru
      _
    // Predicated region
    $region60: #{improved_gae_forward.7} parent=1 // pred_check
      _
    $region61: #{improved_gae_forward.7} parent=1 // pred_check_branch
      %181 = sbr.rel (0) target = $region63
    $region62: #{improved_gae_forward.7} parent=1 // pred_region
      _
    $region63: #{improved_gae_forward.7} parent=1 // pred_fallthru
      _
    %p182 = scmp.eq.s32.totalorder 0, 0
    // Predicated region
    $region64: #{improved_gae_forward.7} parent=1 // pred_check
      %p183 = pneg %p182
    $region65: #{improved_gae_forward.7} parent=1 // pred_check_branch
      %185 = sbr.rel (%p183) target = $region67
    $region66: #{improved_gae_forward.7} parent=1 // pred_region
      %186 = vst [vmem:[#allocation2] sm:$0xff] 0.0
      %187 = vst [vmem:[#allocation2 + $0x8] sm:$0xff] 0.0
      %188 = vst [vmem:[#allocation2 + $0x10] sm:$0xff] 0.0
      %189 = vst [vmem:[#allocation2 + $0x18] sm:$0xff] 0.0
      %190 = vst [vmem:[#allocation2 + $0x20] sm:$0xff] 0.0
      %191 = vst [vmem:[#allocation2 + $0x28] sm:$0xff] 0.0
      %192 = vst [vmem:[#allocation2 + $0x30] sm:$0xff] 0.0
      %193 = vst [vmem:[#allocation2 + $0x38] sm:$0xff] 0.0
      %194 = vst [vmem:[#allocation2 + $0x40] sm:$0xff] 0.0
      %195 = vst [vmem:[#allocation2 + $0x48] sm:$0xff] 0.0
      %196 = vst [vmem:[#allocation2 + $0x50] sm:$0xff] 0.0
      %197 = vst [vmem:[#allocation2 + $0x58] sm:$0xff] 0.0
      %198 = vst [vmem:[#allocation2 + $0x60] sm:$0xff] 0.0
      %199 = vst [vmem:[#allocation2 + $0x68] sm:$0xff] 0.0
      %200 = vst [vmem:[#allocation2 + $0x70] sm:$0xff] 0.0
      %201 = vst [vmem:[#allocation2 + $0x78] sm:$0xff] 0.0
      %202 = vst [vmem:[#allocation2 + $0x80] sm:$0xff] 0.0
      %203 = vst [vmem:[#allocation2 + $0x88] sm:$0xff] 0.0
      %204 = vst [vmem:[#allocation2 + $0x90] sm:$0xff] 0.0
      %205 = vst [vmem:[#allocation2 + $0x98] sm:$0xff] 0.0
      %206 = vst [vmem:[#allocation2 + $0xa0] sm:$0xff] 0.0
      %207 = vst [vmem:[#allocation2 + $0xa8] sm:$0xff] 0.0
      %208 = vst [vmem:[#allocation2 + $0xb0] sm:$0xff] 0.0
      %209 = vst [vmem:[#allocation2 + $0xb8] sm:$0xff] 0.0
      %210 = vst [vmem:[#allocation2 + $0xc0] sm:$0xff] 0.0
      %211 = vst [vmem:[#allocation2 + $0xc8] sm:$0xff] 0.0
      %212 = vst [vmem:[#allocation2 + $0xd0] sm:$0xff] 0.0
      %213 = vst [vmem:[#allocation2 + $0xd8] sm:$0xff] 0.0
      %214 = vst [vmem:[#allocation2 + $0xe0] sm:$0xff] 0.0
      %215 = vst [vmem:[#allocation2 + $0xe8] sm:$0xff] 0.0
      %216 = vst [vmem:[#allocation2 + $0xf0] sm:$0xff] 0.0
      %217 = vst [vmem:[#allocation2 + $0xf8] sm:$0xff] 0.0
    $region67: #{improved_gae_forward.7} parent=1 // pred_fallthru
      _
    %v218 = vld [vmem:[#allocation2] sm:$0xff]
    %v219 = vld [vmem:[#allocation2 + $0x8] sm:$0xff]
    %v220 = vld [vmem:[#allocation2 + $0x10] sm:$0xff]
    %v221 = vld [vmem:[#allocation2 + $0x18] sm:$0xff]
    %v222 = vld [vmem:[#allocation2 + $0x20] sm:$0xff]
    %v223 = vld [vmem:[#allocation2 + $0x28] sm:$0xff]
    %v224 = vld [vmem:[#allocation2 + $0x30] sm:$0xff]
    %v225 = vld [vmem:[#allocation2 + $0x38] sm:$0xff]
    %v226 = vld [vmem:[#allocation2 + $0x40] sm:$0xff]
    %v227 = vld [vmem:[#allocation2 + $0x48] sm:$0xff]
    %v228 = vld [vmem:[#allocation2 + $0x50] sm:$0xff]
    %v229 = vld [vmem:[#allocation2 + $0x58] sm:$0xff]
    %v230 = vld [vmem:[#allocation2 + $0x60] sm:$0xff]
    %v231 = vld [vmem:[#allocation2 + $0x68] sm:$0xff]
    %v232 = vld [vmem:[#allocation2 + $0x70] sm:$0xff]
    %v233 = vld [vmem:[#allocation2 + $0x78] sm:$0xff]
    %v234 = vld [vmem:[#allocation2 + $0x80] sm:$0xff]
    %v235 = vld [vmem:[#allocation2 + $0x88] sm:$0xff]
    %v236 = vld [vmem:[#allocation2 + $0x90] sm:$0xff]
    %v237 = vld [vmem:[#allocation2 + $0x98] sm:$0xff]
    %v238 = vld [vmem:[#allocation2 + $0xa0] sm:$0xff]
    %v239 = vld [vmem:[#allocation2 + $0xa8] sm:$0xff]
    %v240 = vld [vmem:[#allocation2 + $0xb0] sm:$0xff]
    %v241 = vld [vmem:[#allocation2 + $0xb8] sm:$0xff]
    %v242 = vld [vmem:[#allocation2 + $0xc0] sm:$0xff]
    %v243 = vld [vmem:[#allocation2 + $0xc8] sm:$0xff]
    %v244 = vld [vmem:[#allocation2 + $0xd0] sm:$0xff]
    %v245 = vld [vmem:[#allocation2 + $0xd8] sm:$0xff]
    %v246 = vld [vmem:[#allocation2 + $0xe0] sm:$0xff]
    %v247 = vld [vmem:[#allocation2 + $0xe8] sm:$0xff]
    %v248 = vld [vmem:[#allocation2 + $0xf0] sm:$0xff]
    %v249 = vld [vmem:[#allocation2 + $0xf8] sm:$0xff]
    %v250 = vld [vmem:[%s0] sm:$0xff]
    %v251 = vld [vmem:[%s0 + $0x8] sm:$0xff]
    %v252 = vld [vmem:[%s0 + $0x10] sm:$0xff]
    %v253 = vld [vmem:[%s0 + $0x18] sm:$0xff]
    %v254 = vld [vmem:[%s0 + $0x20] sm:$0xff]
    %v255 = vld [vmem:[%s0 + $0x28] sm:$0xff]
    %v256 = vld [vmem:[%s0 + $0x30] sm:$0xff]
    %v257 = vld [vmem:[%s0 + $0x38] sm:$0xff]
    %v258 = vld [vmem:[%s0 + $0x40] sm:$0xff]
    %v259 = vld [vmem:[%s0 + $0x48] sm:$0xff]
    %v260 = vld [vmem:[%s0 + $0x50] sm:$0xff]
    %v261 = vld [vmem:[%s0 + $0x58] sm:$0xff]
    %v262 = vld [vmem:[%s0 + $0x60] sm:$0xff]
    %v263 = vld [vmem:[%s0 + $0x68] sm:$0xff]
    %v264 = vld [vmem:[%s0 + $0x70] sm:$0xff]
    %v265 = vld [vmem:[%s0 + $0x78] sm:$0xff]
    %v266 = vld [vmem:[%s0 + $0x80] sm:$0xff]
    %v267 = vld [vmem:[%s0 + $0x88] sm:$0xff]
    %v268 = vld [vmem:[%s0 + $0x90] sm:$0xff]
    %v269 = vld [vmem:[%s0 + $0x98] sm:$0xff]
    %v270 = vld [vmem:[%s0 + $0xa0] sm:$0xff]
    %v271 = vld [vmem:[%s0 + $0xa8] sm:$0xff]
    %v272 = vld [vmem:[%s0 + $0xb0] sm:$0xff]
    %v273 = vld [vmem:[%s0 + $0xb8] sm:$0xff]
    %v274 = vld [vmem:[%s0 + $0xc0] sm:$0xff]
    %v275 = vld [vmem:[%s0 + $0xc8] sm:$0xff]
    %v276 = vld [vmem:[%s0 + $0xd0] sm:$0xff]
    %v277 = vld [vmem:[%s0 + $0xd8] sm:$0xff]
    %v278 = vld [vmem:[%s0 + $0xe0] sm:$0xff]
    %v279 = vld [vmem:[%s0 + $0xe8] sm:$0xff]
    %v280 = vld [vmem:[%s0 + $0xf0] sm:$0xff]
    %v281 = vld [vmem:[%s0 + $0xf8] sm:$0xff]
    %v282 = vld [vmem:[%s0 + $0x100] sm:$0xff]
    %v283 = vld [vmem:[%s0 + $0x108] sm:$0xff]
    %v284 = vld [vmem:[%s0 + $0x110] sm:$0xff]
    %v285 = vld [vmem:[%s0 + $0x118] sm:$0xff]
    %v286 = vld [vmem:[%s0 + $0x120] sm:$0xff]
    %v287 = vld [vmem:[%s0 + $0x128] sm:$0xff]
    %v288 = vld [vmem:[%s0 + $0x130] sm:$0xff]
    %v289 = vld [vmem:[%s0 + $0x138] sm:$0xff]
    %v290 = vld [vmem:[%s0 + $0x140] sm:$0xff]
    %v291 = vld [vmem:[%s0 + $0x148] sm:$0xff]
    %v292 = vld [vmem:[%s0 + $0x150] sm:$0xff]
    %v293 = vld [vmem:[%s0 + $0x158] sm:$0xff]
    %v294 = vld [vmem:[%s0 + $0x160] sm:$0xff]
    %v295 = vld [vmem:[%s0 + $0x168] sm:$0xff]
    %v296 = vld [vmem:[%s0 + $0x170] sm:$0xff]
    %v297 = vld [vmem:[%s0 + $0x178] sm:$0xff]
    %v298 = vld [vmem:[%s0 + $0x180] sm:$0xff]
    %v299 = vld [vmem:[%s0 + $0x188] sm:$0xff]
    %v300 = vld [vmem:[%s0 + $0x190] sm:$0xff]
    %v301 = vld [vmem:[%s0 + $0x198] sm:$0xff]
    %v302 = vld [vmem:[%s0 + $0x1a0] sm:$0xff]
    %v303 = vld [vmem:[%s0 + $0x1a8] sm:$0xff]
    %v304 = vld [vmem:[%s0 + $0x1b0] sm:$0xff]
    %v305 = vld [vmem:[%s0 + $0x1b8] sm:$0xff]
    %v306 = vld [vmem:[%s0 + $0x1c0] sm:$0xff]
    %v307 = vld [vmem:[%s0 + $0x1c8] sm:$0xff]
    %v308 = vld [vmem:[%s0 + $0x1d0] sm:$0xff]
    %v309 = vld [vmem:[%s0 + $0x1d8] sm:$0xff]
    %v310 = vld [vmem:[%s0 + $0x1e0] sm:$0xff]
    %v311 = vld [vmem:[%s0 + $0x1e8] sm:$0xff]
    %v312 = vld [vmem:[%s0 + $0x1f0] sm:$0xff]
    %v313 = vld [vmem:[%s0 + $0x1f8] sm:$0xff]
    %v314 = vld [vmem:[#allocation3] sm:$0xff]
    %v315 = vld [vmem:[#allocation3 + $0x8] sm:$0xff]
    %v316 = vld [vmem:[#allocation3 + $0x10] sm:$0xff]
    %v317 = vld [vmem:[#allocation3 + $0x18] sm:$0xff]
    %v318 = vld [vmem:[#allocation3 + $0x20] sm:$0xff]
    %v319 = vld [vmem:[#allocation3 + $0x28] sm:$0xff]
    %v320 = vld [vmem:[#allocation3 + $0x30] sm:$0xff]
    %v321 = vld [vmem:[#allocation3 + $0x38] sm:$0xff]
    %v322 = vld [vmem:[#allocation3 + $0x40] sm:$0xff]
    %v323 = vld [vmem:[#allocation3 + $0x48] sm:$0xff]
    %v324 = vld [vmem:[#allocation3 + $0x50] sm:$0xff]
    %v325 = vld [vmem:[#allocation3 + $0x58] sm:$0xff]
    %v326 = vld [vmem:[#allocation3 + $0x60] sm:$0xff]
    %v327 = vld [vmem:[#allocation3 + $0x68] sm:$0xff]
    %v328 = vld [vmem:[#allocation3 + $0x70] sm:$0xff]
    %v329 = vld [vmem:[#allocation3 + $0x78] sm:$0xff]
    %v330 = vld [vmem:[#allocation3 + $0x80] sm:$0xff]
    %v331 = vld [vmem:[#allocation3 + $0x88] sm:$0xff]
    %v332 = vld [vmem:[#allocation3 + $0x90] sm:$0xff]
    %v333 = vld [vmem:[#allocation3 + $0x98] sm:$0xff]
    %v334 = vld [vmem:[#allocation3 + $0xa0] sm:$0xff]
    %v335 = vld [vmem:[#allocation3 + $0xa8] sm:$0xff]
    %v336 = vld [vmem:[#allocation3 + $0xb0] sm:$0xff]
    %v337 = vld [vmem:[#allocation3 + $0xb8] sm:$0xff]
    %v338 = vld [vmem:[#allocation3 + $0xc0] sm:$0xff]
    %v339 = vld [vmem:[#allocation3 + $0xc8] sm:$0xff]
    %v340 = vld [vmem:[#allocation3 + $0xd0] sm:$0xff]
    %v341 = vld [vmem:[#allocation3 + $0xd8] sm:$0xff]
    %v342 = vld [vmem:[#allocation3 + $0xe0] sm:$0xff]
    %v343 = vld [vmem:[#allocation3 + $0xe8] sm:$0xff]
    %v344 = vld [vmem:[#allocation3 + $0xf0] sm:$0xff]
    %v345 = vld [vmem:[#allocation3 + $0xf8] sm:$0xff]
    %346 = vmatpush.msra.mxu0 %v329
    %347 = vmatpush.msra.mxu0 %v328
    %348 = vmatpush.msra.mxu0 %v327
    %349 = vmatpush.msra.mxu0 %v326
    %350 = vmatpush.msra.mxu0 %v325
    %351 = vmatpush.msra.mxu0 %v324
    %352 = vmatpush.msra.mxu0 %v323
    %353 = vmatpush.msra.mxu0 %v322
    %354 = vmatpush.msra.mxu0 %v321
    %355 = vmatpush.msra.mxu0 %v320
    %356 = vmatpush.msra.mxu0 %v319
    %357 = vmatpush.msra.mxu0 %v318
    %358 = vmatpush.msra.mxu0 %v317
    %359 = vmatpush.msra.mxu0 %v316
    %360 = vmatpush.msra.mxu0 %v315
    %361 = vmatpush.msra.mxu0 %v314
    %362 = vmatmul.f32.gmra.mxu0 %v250
    %v363 = vpop.f32.mrf.mxu0
    %v364 = vadd.f32 0.0, %v363
    %365 = vmatmul.f32.gmra.mxu0 %v252
    %v366 = vpop.f32.mrf.mxu0
    %v367 = vadd.f32 0.0, %v366
    %368 = vmatmul.f32.gmra.mxu0 %v254
    %v369 = vpop.f32.mrf.mxu0
    %v370 = vadd.f32 0.0, %v369
    %371 = vmatmul.f32.gmra.mxu0 %v256
    %v372 = vpop.f32.mrf.mxu0
    %v373 = vadd.f32 0.0, %v372
    %374 = vmatmul.f32.gmra.mxu0 %v258
    %v375 = vpop.f32.mrf.mxu0
    %v376 = vadd.f32 0.0, %v375
    %377 = vmatmul.f32.gmra.mxu0 %v260
    %v378 = vpop.f32.mrf.mxu0
    %v379 = vadd.f32 0.0, %v378
    %380 = vmatmul.f32.gmra.mxu0 %v262
    %v381 = vpop.f32.mrf.mxu0
    %v382 = vadd.f32 0.0, %v381
    %383 = vmatmul.f32.gmra.mxu0 %v264
    %v384 = vpop.f32.mrf.mxu0
    %v385 = vadd.f32 0.0, %v384
    %386 = vmatmul.f32.gmra.mxu0 %v266
    %v387 = vpop.f32.mrf.mxu0
    %v388 = vadd.f32 0.0, %v387
    %389 = vmatmul.f32.gmra.mxu0 %v268
    %v390 = vpop.f32.mrf.mxu0
    %v391 = vadd.f32 0.0, %v390
    %392 = vmatmul.f32.gmra.mxu0 %v270
    %v393 = vpop.f32.mrf.mxu0
    %v394 = vadd.f32 0.0, %v393
    %395 = vmatmul.f32.gmra.mxu0 %v272
    %v396 = vpop.f32.mrf.mxu0
    %v397 = vadd.f32 0.0, %v396
    %398 = vmatmul.f32.gmra.mxu0 %v274
    %v399 = vpop.f32.mrf.mxu0
    %v400 = vadd.f32 0.0, %v399
    %401 = vmatmul.f32.gmra.mxu0 %v276
    %v402 = vpop.f32.mrf.mxu0
    %v403 = vadd.f32 0.0, %v402
    %404 = vmatmul.f32.gmra.mxu0 %v278
    %v405 = vpop.f32.mrf.mxu0
    %v406 = vadd.f32 0.0, %v405
    %407 = vmatmul.f32.gmra.mxu0 %v280
    %v408 = vpop.f32.mrf.mxu0
    %v409 = vadd.f32 0.0, %v408
    %410 = vmatmul.f32.gmra.mxu0 %v282
    %v411 = vpop.f32.mrf.mxu0
    %v412 = vadd.f32 0.0, %v411
    %413 = vmatmul.f32.gmra.mxu0 %v284
    %v414 = vpop.f32.mrf.mxu0
    %v415 = vadd.f32 0.0, %v414
    %416 = vmatmul.f32.gmra.mxu0 %v286
    %v417 = vpop.f32.mrf.mxu0
    %v418 = vadd.f32 0.0, %v417
    %419 = vmatmul.f32.gmra.mxu0 %v288
    %v420 = vpop.f32.mrf.mxu0
    %v421 = vadd.f32 0.0, %v420
    %422 = vmatmul.f32.gmra.mxu0 %v290
    %v423 = vpop.f32.mrf.mxu0
    %v424 = vadd.f32 0.0, %v423
    %425 = vmatmul.f32.gmra.mxu0 %v292
    %v426 = vpop.f32.mrf.mxu0
    %v427 = vadd.f32 0.0, %v426
    %428 = vmatmul.f32.gmra.mxu0 %v294
    %v429 = vpop.f32.mrf.mxu0
    %v430 = vadd.f32 0.0, %v429
    %431 = vmatmul.f32.gmra.mxu0 %v296
    %v432 = vpop.f32.mrf.mxu0
    %v433 = vadd.f32 0.0, %v432
    %434 = vmatmul.f32.gmra.mxu0 %v298
    %v435 = vpop.f32.mrf.mxu0
    %v436 = vadd.f32 0.0, %v435
    %437 = vmatmul.f32.gmra.mxu0 %v300
    %v438 = vpop.f32.mrf.mxu0
    %v439 = vadd.f32 0.0, %v438
    %440 = vmatmul.f32.gmra.mxu0 %v302
    %v441 = vpop.f32.mrf.mxu0
    %v442 = vadd.f32 0.0, %v441
    %443 = vmatmul.f32.gmra.mxu0 %v304
    %v444 = vpop.f32.mrf.mxu0
    %v445 = vadd.f32 0.0, %v444
    %446 = vmatmul.f32.gmra.mxu0 %v306
    %v447 = vpop.f32.mrf.mxu0
    %v448 = vadd.f32 0.0, %v447
    %449 = vmatmul.f32.gmra.mxu0 %v308
    %v450 = vpop.f32.mrf.mxu0
    %v451 = vadd.f32 0.0, %v450
    %452 = vmatmul.f32.gmra.mxu0 %v310
    %v453 = vpop.f32.mrf.mxu0
    %v454 = vadd.f32 0.0, %v453
    %455 = vmatmul.f32.gmra.mxu0 %v312
    %v456 = vpop.f32.mrf.mxu0
    %v457 = vadd.f32 0.0, %v456
    %458 = vdwg.mxu0
    %459 = vmatpush.msra.mxu0 %v345
    %460 = vmatpush.msra.mxu0 %v344
    %461 = vmatpush.msra.mxu0 %v343
    %462 = vmatpush.msra.mxu0 %v342
    %463 = vmatpush.msra.mxu0 %v341
    %464 = vmatpush.msra.mxu0 %v340
    %465 = vmatpush.msra.mxu0 %v339
    %466 = vmatpush.msra.mxu0 %v338
    %467 = vmatpush.msra.mxu0 %v337
    %468 = vmatpush.msra.mxu0 %v336
    %469 = vmatpush.msra.mxu0 %v335
    %470 = vmatpush.msra.mxu0 %v334
    %471 = vmatpush.msra.mxu0 %v333
    %472 = vmatpush.msra.mxu0 %v332
    %473 = vmatpush.msra.mxu0 %v331
    %474 = vmatpush.msra.mxu0 %v330
    %475 = vmatmul.f32.gmra.mxu0 %v251
    %v476 = vpop.f32.mrf.mxu0
    %v477 = vadd.f32 %v364, %v476
    %478 = vmatmul.f32.gmra.mxu0 %v253
    %v479 = vpop.f32.mrf.mxu0
    %v480 = vadd.f32 %v367, %v479
    %481 = vmatmul.f32.gmra.mxu0 %v255
    %v482 = vpop.f32.mrf.mxu0
    %v483 = vadd.f32 %v370, %v482
    %484 = vmatmul.f32.gmra.mxu0 %v257
    %v485 = vpop.f32.mrf.mxu0
    %v486 = vadd.f32 %v373, %v485
    %487 = vmatmul.f32.gmra.mxu0 %v259
    %v488 = vpop.f32.mrf.mxu0
    %v489 = vadd.f32 %v376, %v488
    %490 = vmatmul.f32.gmra.mxu0 %v261
    %v491 = vpop.f32.mrf.mxu0
    %v492 = vadd.f32 %v379, %v491
    %493 = vmatmul.f32.gmra.mxu0 %v263
    %v494 = vpop.f32.mrf.mxu0
    %v495 = vadd.f32 %v382, %v494
    %496 = vmatmul.f32.gmra.mxu0 %v265
    %v497 = vpop.f32.mrf.mxu0
    %v498 = vadd.f32 %v385, %v497
    %499 = vmatmul.f32.gmra.mxu0 %v267
    %v500 = vpop.f32.mrf.mxu0
    %v501 = vadd.f32 %v388, %v500
    %502 = vmatmul.f32.gmra.mxu0 %v269
    %v503 = vpop.f32.mrf.mxu0
    %v504 = vadd.f32 %v391, %v503
    %505 = vmatmul.f32.gmra.mxu0 %v271
    %v506 = vpop.f32.mrf.mxu0
    %v507 = vadd.f32 %v394, %v506
    %508 = vmatmul.f32.gmra.mxu0 %v273
    %v509 = vpop.f32.mrf.mxu0
    %v510 = vadd.f32 %v397, %v509
    %511 = vmatmul.f32.gmra.mxu0 %v275
    %v512 = vpop.f32.mrf.mxu0
    %v513 = vadd.f32 %v400, %v512
    %514 = vmatmul.f32.gmra.mxu0 %v277
    %v515 = vpop.f32.mrf.mxu0
    %v516 = vadd.f32 %v403, %v515
    %517 = vmatmul.f32.gmra.mxu0 %v279
    %v518 = vpop.f32.mrf.mxu0
    %v519 = vadd.f32 %v406, %v518
    %520 = vmatmul.f32.gmra.mxu0 %v281
    %v521 = vpop.f32.mrf.mxu0
    %v522 = vadd.f32 %v409, %v521
    %523 = vmatmul.f32.gmra.mxu0 %v283
    %v524 = vpop.f32.mrf.mxu0
    %v525 = vadd.f32 %v412, %v524
    %526 = vmatmul.f32.gmra.mxu0 %v285
    %v527 = vpop.f32.mrf.mxu0
    %v528 = vadd.f32 %v415, %v527
    %529 = vmatmul.f32.gmra.mxu0 %v287
    %v530 = vpop.f32.mrf.mxu0
    %v531 = vadd.f32 %v418, %v530
    %532 = vmatmul.f32.gmra.mxu0 %v289
    %v533 = vpop.f32.mrf.mxu0
    %v534 = vadd.f32 %v421, %v533
    %535 = vmatmul.f32.gmra.mxu0 %v291
    %v536 = vpop.f32.mrf.mxu0
    %v537 = vadd.f32 %v424, %v536
    %538 = vmatmul.f32.gmra.mxu0 %v293
    %v539 = vpop.f32.mrf.mxu0
    %v540 = vadd.f32 %v427, %v539
    %541 = vmatmul.f32.gmra.mxu0 %v295
    %v542 = vpop.f32.mrf.mxu0
    %v543 = vadd.f32 %v430, %v542
    %544 = vmatmul.f32.gmra.mxu0 %v297
    %v545 = vpop.f32.mrf.mxu0
    %v546 = vadd.f32 %v433, %v545
    %547 = vmatmul.f32.gmra.mxu0 %v299
    %v548 = vpop.f32.mrf.mxu0
    %v549 = vadd.f32 %v436, %v548
    %550 = vmatmul.f32.gmra.mxu0 %v301
    %v551 = vpop.f32.mrf.mxu0
    %v552 = vadd.f32 %v439, %v551
    %553 = vmatmul.f32.gmra.mxu0 %v303
    %v554 = vpop.f32.mrf.mxu0
    %v555 = vadd.f32 %v442, %v554
    %556 = vmatmul.f32.gmra.mxu0 %v305
    %v557 = vpop.f32.mrf.mxu0
    %v558 = vadd.f32 %v445, %v557
    %559 = vmatmul.f32.gmra.mxu0 %v307
    %v560 = vpop.f32.mrf.mxu0
    %v561 = vadd.f32 %v448, %v560
    %562 = vmatmul.f32.gmra.mxu0 %v309
    %v563 = vpop.f32.mrf.mxu0
    %v564 = vadd.f32 %v451, %v563
    %565 = vmatmul.f32.gmra.mxu0 %v311
    %v566 = vpop.f32.mrf.mxu0
    %v567 = vadd.f32 %v454, %v566
    %568 = vmatmul.f32.gmra.mxu0 %v313
    %v569 = vpop.f32.mrf.mxu0
    %v570 = vadd.f32 %v457, %v569
    %571 = vdwg.mxu0
    %v572 = vadd.f32 %v218, %v477
    %v573 = vadd.f32 %v219, %v480
    %v574 = vadd.f32 %v220, %v483
    %v575 = vadd.f32 %v221, %v486
    %v576 = vadd.f32 %v222, %v489
    %v577 = vadd.f32 %v223, %v492
    %v578 = vadd.f32 %v224, %v495
    %v579 = vadd.f32 %v225, %v498
    %v580 = vadd.f32 %v226, %v501
    %v581 = vadd.f32 %v227, %v504
    %v582 = vadd.f32 %v228, %v507
    %v583 = vadd.f32 %v229, %v510
    %v584 = vadd.f32 %v230, %v513
    %v585 = vadd.f32 %v231, %v516
    %v586 = vadd.f32 %v232, %v519
    %v587 = vadd.f32 %v233, %v522
    %v588 = vadd.f32 %v234, %v525
    %v589 = vadd.f32 %v235, %v528
    %v590 = vadd.f32 %v236, %v531
    %v591 = vadd.f32 %v237, %v534
    %v592 = vadd.f32 %v238, %v537
    %v593 = vadd.f32 %v239, %v540
    %v594 = vadd.f32 %v240, %v543
    %v595 = vadd.f32 %v241, %v546
    %v596 = vadd.f32 %v242, %v549
    %v597 = vadd.f32 %v243, %v552
    %v598 = vadd.f32 %v244, %v555
    %v599 = vadd.f32 %v245, %v558
    %v600 = vadd.f32 %v246, %v561
    %v601 = vadd.f32 %v247, %v564
    %v602 = vadd.f32 %v248, %v567
    %v603 = vadd.f32 %v249, %v570
    %604 = vst [vmem:[#allocation2] sm:$0xff] %v572
    %605 = vst [vmem:[#allocation2 + $0x8] sm:$0xff] %v573
    %606 = vst [vmem:[#allocation2 + $0x10] sm:$0xff] %v574
    %607 = vst [vmem:[#allocation2 + $0x18] sm:$0xff] %v575
    %608 = vst [vmem:[#allocation2 + $0x20] sm:$0xff] %v576
    %609 = vst [vmem:[#allocation2 + $0x28] sm:$0xff] %v577
    %610 = vst [vmem:[#allocation2 + $0x30] sm:$0xff] %v578
    %611 = vst [vmem:[#allocation2 + $0x38] sm:$0xff] %v579
    %612 = vst [vmem:[#allocation2 + $0x40] sm:$0xff] %v580
    %613 = vst [vmem:[#allocation2 + $0x48] sm:$0xff] %v581
    %614 = vst [vmem:[#allocation2 + $0x50] sm:$0xff] %v582
    %615 = vst [vmem:[#allocation2 + $0x58] sm:$0xff] %v583
    %616 = vst [vmem:[#allocation2 + $0x60] sm:$0xff] %v584
    %617 = vst [vmem:[#allocation2 + $0x68] sm:$0xff] %v585
    %618 = vst [vmem:[#allocation2 + $0x70] sm:$0xff] %v586
    %619 = vst [vmem:[#allocation2 + $0x78] sm:$0xff] %v587
    %620 = vst [vmem:[#allocation2 + $0x80] sm:$0xff] %v588
    %621 = vst [vmem:[#allocation2 + $0x88] sm:$0xff] %v589
    %622 = vst [vmem:[#allocation2 + $0x90] sm:$0xff] %v590
    %623 = vst [vmem:[#allocation2 + $0x98] sm:$0xff] %v591
    %624 = vst [vmem:[#allocation2 + $0xa0] sm:$0xff] %v592
    %625 = vst [vmem:[#allocation2 + $0xa8] sm:$0xff] %v593
    %626 = vst [vmem:[#allocation2 + $0xb0] sm:$0xff] %v594
    %627 = vst [vmem:[#allocation2 + $0xb8] sm:$0xff] %v595
    %628 = vst [vmem:[#allocation2 + $0xc0] sm:$0xff] %v596
    %629 = vst [vmem:[#allocation2 + $0xc8] sm:$0xff] %v597
    %630 = vst [vmem:[#allocation2 + $0xd0] sm:$0xff] %v598
    %631 = vst [vmem:[#allocation2 + $0xd8] sm:$0xff] %v599
    %632 = vst [vmem:[#allocation2 + $0xe0] sm:$0xff] %v600
    %633 = vst [vmem:[#allocation2 + $0xe8] sm:$0xff] %v601
    %634 = vst [vmem:[#allocation2 + $0xf0] sm:$0xff] %v602
    %635 = vst [vmem:[#allocation2 + $0xf8] sm:$0xff] %v603
    // Predicated region
    $region68: #{improved_gae_forward.7} parent=1 // pred_check
      %p636 = pneg %p182
    $region69: #{improved_gae_forward.7} parent=1 // pred_check_branch
      %638 = sbr.rel (%p636) target = $region71
    $region70: #{improved_gae_forward.7} parent=1 // pred_region
      %v639 = vld [vmem:[#allocation2] sm:$0xff]
      %v640 = vld [vmem:[#allocation2 + $0x8] sm:$0xff]
      %v641 = vld [vmem:[#allocation2 + $0x10] sm:$0xff]
      %v642 = vld [vmem:[#allocation2 + $0x18] sm:$0xff]
      %v643 = vld [vmem:[#allocation2 + $0x20] sm:$0xff]
      %v644 = vld [vmem:[#allocation2 + $0x28] sm:$0xff]
      %v645 = vld [vmem:[#allocation2 + $0x30] sm:$0xff]
      %v646 = vld [vmem:[#allocation2 + $0x38] sm:$0xff]
      %v647 = vld [vmem:[#allocation2 + $0x40] sm:$0xff]
      %v648 = vld [vmem:[#allocation2 + $0x48] sm:$0xff]
      %v649 = vld [vmem:[#allocation2 + $0x50] sm:$0xff]
      %v650 = vld [vmem:[#allocation2 + $0x58] sm:$0xff]
      %v651 = vld [vmem:[#allocation2 + $0x60] sm:$0xff]
      %v652 = vld [vmem:[#allocation2 + $0x68] sm:$0xff]
      %v653 = vld [vmem:[#allocation2 + $0x70] sm:$0xff]
      %v654 = vld [vmem:[#allocation2 + $0x78] sm:$0xff]
      %v655 = vld [vmem:[#allocation2 + $0x80] sm:$0xff]
      %v656 = vld [vmem:[#allocation2 + $0x88] sm:$0xff]
      %v657 = vld [vmem:[#allocation2 + $0x90] sm:$0xff]
      %v658 = vld [vmem:[#allocation2 + $0x98] sm:$0xff]
      %v659 = vld [vmem:[#allocation2 + $0xa0] sm:$0xff]
      %v660 = vld [vmem:[#allocation2 + $0xa8] sm:$0xff]
      %v661 = vld [vmem:[#allocation2 + $0xb0] sm:$0xff]
      %v662 = vld [vmem:[#allocation2 + $0xb8] sm:$0xff]
      %v663 = vld [vmem:[#allocation2 + $0xc0] sm:$0xff]
      %v664 = vld [vmem:[#allocation2 + $0xc8] sm:$0xff]
      %v665 = vld [vmem:[#allocation2 + $0xd0] sm:$0xff]
      %v666 = vld [vmem:[#allocation2 + $0xd8] sm:$0xff]
      %v667 = vld [vmem:[#allocation2 + $0xe0] sm:$0xff]
      %v668 = vld [vmem:[#allocation2 + $0xe8] sm:$0xff]
      %v669 = vld [vmem:[#allocation2 + $0xf0] sm:$0xff]
      %v670 = vld [vmem:[#allocation2 + $0xf8] sm:$0xff]
      %v671 = vld [vmem:[%s2] sm:$0x1]
      %v672 = vld [vmem:[%s3] sm:$0x1]
      %v673 = vld [vmem:[%s4] sm:$0x1]
      %v675 = vperm.slane %v671, 0
      %v677 = vadd.f32 %v639, %v675
      %v678 = vadd.f32 %v640, %v675
      %v679 = vadd.f32 %v641, %v675
      %v680 = vadd.f32 %v642, %v675
      %v681 = vadd.f32 %v643, %v675
      %v682 = vadd.f32 %v644, %v675
      %v683 = vadd.f32 %v645, %v675
      %v684 = vadd.f32 %v646, %v675
      %v685 = vadd.f32 %v647, %v675
      %v686 = vadd.f32 %v648, %v675
      %v687 = vadd.f32 %v649, %v675
      %v688 = vadd.f32 %v650, %v675
      %v689 = vadd.f32 %v651, %v675
      %v690 = vadd.f32 %v652, %v675
      %v691 = vadd.f32 %v653, %v675
      %v692 = vadd.f32 %v654, %v675
      %v693 = vadd.f32 %v655, %v675
      %v694 = vadd.f32 %v656, %v675
      %v695 = vadd.f32 %v657, %v675
      %v696 = vadd.f32 %v658, %v675
      %v697 = vadd.f32 %v659, %v675
      %v698 = vadd.f32 %v660, %v675
      %v699 = vadd.f32 %v661, %v675
      %v700 = vadd.f32 %v662, %v675
      %v701 = vadd.f32 %v663, %v675
      %v702 = vadd.f32 %v664, %v675
      %v703 = vadd.f32 %v665, %v675
      %v704 = vadd.f32 %v666, %v675
      %v705 = vadd.f32 %v667, %v675
      %v706 = vadd.f32 %v668, %v675
      %v707 = vadd.f32 %v669, %v675
      %v708 = vadd.f32 %v670, %v675
      %v709 = vmax.f32 %v677, 0.0
      %v710 = vmax.f32 %v678, 0.0
      %v711 = vmax.f32 %v679, 0.0
      %v712 = vmax.f32 %v680, 0.0
      %v713 = vmax.f32 %v681, 0.0
      %v714 = vmax.f32 %v682, 0.0
      %v715 = vmax.f32 %v683, 0.0
      %v716 = vmax.f32 %v684, 0.0
      %v717 = vmax.f32 %v685, 0.0
      %v718 = vmax.f32 %v686, 0.0
      %v719 = vmax.f32 %v687, 0.0
      %v720 = vmax.f32 %v688, 0.0
      %v721 = vmax.f32 %v689, 0.0
      %v722 = vmax.f32 %v690, 0.0
      %v723 = vmax.f32 %v691, 0.0
      %v724 = vmax.f32 %v692, 0.0
      %v725 = vmax.f32 %v693, 0.0
      %v726 = vmax.f32 %v694, 0.0
      %v727 = vmax.f32 %v695, 0.0
      %v728 = vmax.f32 %v696, 0.0
      %v729 = vmax.f32 %v697, 0.0
      %v730 = vmax.f32 %v698, 0.0
      %v731 = vmax.f32 %v699, 0.0
      %v732 = vmax.f32 %v700, 0.0
      %v733 = vmax.f32 %v701, 0.0
      %v734 = vmax.f32 %v702, 0.0
      %v735 = vmax.f32 %v703, 0.0
      %v736 = vmax.f32 %v704, 0.0
      %v737 = vmax.f32 %v705, 0.0
      %v738 = vmax.f32 %v706, 0.0
      %v739 = vmax.f32 %v707, 0.0
      %v740 = vmax.f32 %v708, 0.0
      %v742 = vperm.slane %v672, 0
      %v744 = vmul.f32 %v709, %v742
      %v745 = vmul.f32 %v710, %v742
      %v746 = vmul.f32 %v711, %v742
      %v747 = vmul.f32 %v712, %v742
      %v748 = vmul.f32 %v713, %v742
      %v749 = vmul.f32 %v714, %v742
      %v750 = vmul.f32 %v715, %v742
      %v751 = vmul.f32 %v716, %v742
      %v752 = vmul.f32 %v717, %v742
      %v753 = vmul.f32 %v718, %v742
      %v754 = vmul.f32 %v719, %v742
      %v755 = vmul.f32 %v720, %v742
      %v756 = vmul.f32 %v721, %v742
      %v757 = vmul.f32 %v722, %v742
      %v758 = vmul.f32 %v723, %v742
      %v759 = vmul.f32 %v724, %v742
      %v760 = vmul.f32 %v725, %v742
      %v761 = vmul.f32 %v726, %v742
      %v762 = vmul.f32 %v727, %v742
      %v763 = vmul.f32 %v728, %v742
      %v764 = vmul.f32 %v729, %v742
      %v765 = vmul.f32 %v730, %v742
      %v766 = vmul.f32 %v731, %v742
      %v767 = vmul.f32 %v732, %v742
      %v768 = vmul.f32 %v733, %v742
      %v769 = vmul.f32 %v734, %v742
      %v770 = vmul.f32 %v735, %v742
      %v771 = vmul.f32 %v736, %v742
      %v772 = vmul.f32 %v737, %v742
      %v773 = vmul.f32 %v738, %v742
      %v774 = vmul.f32 %v739, %v742
      %v775 = vmul.f32 %v740, %v742
      %v777 = vperm.slane %v673, 0
      %v779 = vadd.f32 %v744, %v777
      %v780 = vadd.f32 %v745, %v777
      %v781 = vadd.f32 %v746, %v777
      %v782 = vadd.f32 %v747, %v777
      %v783 = vadd.f32 %v748, %v777
      %v784 = vadd.f32 %v749, %v777
      %v785 = vadd.f32 %v750, %v777
      %v786 = vadd.f32 %v751, %v777
      %v787 = vadd.f32 %v752, %v777
      %v788 = vadd.f32 %v753, %v777
      %v789 = vadd.f32 %v754, %v777
      %v790 = vadd.f32 %v755, %v777
      %v791 = vadd.f32 %v756, %v777
      %v792 = vadd.f32 %v757, %v777
      %v793 = vadd.f32 %v758, %v777
      %v794 = vadd.f32 %v759, %v777
      %v795 = vadd.f32 %v760, %v777
      %v796 = vadd.f32 %v761, %v777
      %v797 = vadd.f32 %v762, %v777
      %v798 = vadd.f32 %v763, %v777
      %v799 = vadd.f32 %v764, %v777
      %v800 = vadd.f32 %v765, %v777
      %v801 = vadd.f32 %v766, %v777
      %v802 = vadd.f32 %v767, %v777
      %v803 = vadd.f32 %v768, %v777
      %v804 = vadd.f32 %v769, %v777
      %v805 = vadd.f32 %v770, %v777
      %v806 = vadd.f32 %v771, %v777
      %v807 = vadd.f32 %v772, %v777
      %v808 = vadd.f32 %v773, %v777
      %v809 = vadd.f32 %v774, %v777
      %v810 = vadd.f32 %v775, %v777
      %v811 = vld [vmem:[%s5] sm:$0xff]
      %v812 = vld [vmem:[%s5 + $0x8] sm:$0xff]
      %v813 = vld [vmem:[%s5 + $0x10] sm:$0xff]
      %v814 = vld [vmem:[%s5 + $0x18] sm:$0xff]
      %v815 = vld [vmem:[%s5 + $0x20] sm:$0xff]
      %v816 = vld [vmem:[%s5 + $0x28] sm:$0xff]
      %v817 = vld [vmem:[%s5 + $0x30] sm:$0xff]
      %v818 = vld [vmem:[%s5 + $0x38] sm:$0xff]
      %v819 = vld [vmem:[%s5 + $0x40] sm:$0xff]
      %v820 = vld [vmem:[%s5 + $0x48] sm:$0xff]
      %v821 = vld [vmem:[%s5 + $0x50] sm:$0xff]
      %v822 = vld [vmem:[%s5 + $0x58] sm:$0xff]
      %v823 = vld [vmem:[%s5 + $0x60] sm:$0xff]
      %v824 = vld [vmem:[%s5 + $0x68] sm:$0xff]
      %v825 = vld [vmem:[%s5 + $0x70] sm:$0xff]
      %v826 = vld [vmem:[%s5 + $0x78] sm:$0xff]
      %827 = vmatpush.msra.mxu0 %v826
      %828 = vmatpush.msra.mxu0 %v825
      %829 = vmatpush.msra.mxu0 %v824
      %830 = vmatpush.msra.mxu0 %v823
      %831 = vmatpush.msra.mxu0 %v822
      %832 = vmatpush.msra.mxu0 %v821
      %833 = vmatpush.msra.mxu0 %v820
      %834 = vmatpush.msra.mxu0 %v819
      %835 = vmatpush.msra.mxu0 %v818
      %836 = vmatpush.msra.mxu0 %v817
      %837 = vmatpush.msra.mxu0 %v816
      %838 = vmatpush.msra.mxu0 %v815
      %839 = vmatpush.msra.mxu0 %v814
      %840 = vmatpush.msra.mxu0 %v813
      %841 = vmatpush.msra.mxu0 %v812
      %842 = vmatpush.msra.mxu0 %v811
      %843 = vmatmul.f32.gmra.mxu0 %v779
      %v844 = vpop.f32.mrf.mxu0
      %v845 = vadd.f32 0.0, %v844
      %846 = vmatmul.f32.gmra.mxu0 %v780
      %v847 = vpop.f32.mrf.mxu0
      %v848 = vadd.f32 0.0, %v847
      %849 = vmatmul.f32.gmra.mxu0 %v781
      %v850 = vpop.f32.mrf.mxu0
      %v851 = vadd.f32 0.0, %v850
      %852 = vmatmul.f32.gmra.mxu0 %v782
      %v853 = vpop.f32.mrf.mxu0
      %v854 = vadd.f32 0.0, %v853
      %855 = vmatmul.f32.gmra.mxu0 %v783
      %v856 = vpop.f32.mrf.mxu0
      %v857 = vadd.f32 0.0, %v856
      %858 = vmatmul.f32.gmra.mxu0 %v784
      %v859 = vpop.f32.mrf.mxu0
      %v860 = vadd.f32 0.0, %v859
      %861 = vmatmul.f32.gmra.mxu0 %v785
      %v862 = vpop.f32.mrf.mxu0
      %v863 = vadd.f32 0.0, %v862
      %864 = vmatmul.f32.gmra.mxu0 %v786
      %v865 = vpop.f32.mrf.mxu0
      %v866 = vadd.f32 0.0, %v865
      %867 = vmatmul.f32.gmra.mxu0 %v787
      %v868 = vpop.f32.mrf.mxu0
      %v869 = vadd.f32 0.0, %v868
      %870 = vmatmul.f32.gmra.mxu0 %v788
      %v871 = vpop.f32.mrf.mxu0
      %v872 = vadd.f32 0.0, %v871
      %873 = vmatmul.f32.gmra.mxu0 %v789
      %v874 = vpop.f32.mrf.mxu0
      %v875 = vadd.f32 0.0, %v874
      %876 = vmatmul.f32.gmra.mxu0 %v790
      %v877 = vpop.f32.mrf.mxu0
      %v878 = vadd.f32 0.0, %v877
      %879 = vmatmul.f32.gmra.mxu0 %v791
      %v880 = vpop.f32.mrf.mxu0
      %v881 = vadd.f32 0.0, %v880
      %882 = vmatmul.f32.gmra.mxu0 %v792
      %v883 = vpop.f32.mrf.mxu0
      %v884 = vadd.f32 0.0, %v883
      %885 = vmatmul.f32.gmra.mxu0 %v793
      %v886 = vpop.f32.mrf.mxu0
      %v887 = vadd.f32 0.0, %v886
      %888 = vmatmul.f32.gmra.mxu0 %v794
      %v889 = vpop.f32.mrf.mxu0
      %v890 = vadd.f32 0.0, %v889
      %891 = vmatmul.f32.gmra.mxu0 %v795
      %v892 = vpop.f32.mrf.mxu0
      %v893 = vadd.f32 0.0, %v892
      %894 = vmatmul.f32.gmra.mxu0 %v796
      %v895 = vpop.f32.mrf.mxu0
      %v896 = vadd.f32 0.0, %v895
      %897 = vmatmul.f32.gmra.mxu0 %v797
      %v898 = vpop.f32.mrf.mxu0
      %v899 = vadd.f32 0.0, %v898
      %900 = vmatmul.f32.gmra.mxu0 %v798
      %v901 = vpop.f32.mrf.mxu0
      %v902 = vadd.f32 0.0, %v901
      %903 = vmatmul.f32.gmra.mxu0 %v799
      %v904 = vpop.f32.mrf.mxu0
      %v905 = vadd.f32 0.0, %v904
      %906 = vmatmul.f32.gmra.mxu0 %v800
      %v907 = vpop.f32.mrf.mxu0
      %v908 = vadd.f32 0.0, %v907
      %909 = vmatmul.f32.gmra.mxu0 %v801
      %v910 = vpop.f32.mrf.mxu0
      %v911 = vadd.f32 0.0, %v910
      %912 = vmatmul.f32.gmra.mxu0 %v802
      %v913 = vpop.f32.mrf.mxu0
      %v914 = vadd.f32 0.0, %v913
      %915 = vmatmul.f32.gmra.mxu0 %v803
      %v916 = vpop.f32.mrf.mxu0
      %v917 = vadd.f32 0.0, %v916
      %918 = vmatmul.f32.gmra.mxu0 %v804
      %v919 = vpop.f32.mrf.mxu0
      %v920 = vadd.f32 0.0, %v919
      %921 = vmatmul.f32.gmra.mxu0 %v805
      %v922 = vpop.f32.mrf.mxu0
      %v923 = vadd.f32 0.0, %v922
      %924 = vmatmul.f32.gmra.mxu0 %v806
      %v925 = vpop.f32.mrf.mxu0
      %v926 = vadd.f32 0.0, %v925
      %927 = vmatmul.f32.gmra.mxu0 %v807
      %v928 = vpop.f32.mrf.mxu0
      %v929 = vadd.f32 0.0, %v928
      %930 = vmatmul.f32.gmra.mxu0 %v808
      %v931 = vpop.f32.mrf.mxu0
      %v932 = vadd.f32 0.0, %v931
      %933 = vmatmul.f32.gmra.mxu0 %v809
      %v934 = vpop.f32.mrf.mxu0
      %v935 = vadd.f32 0.0, %v934
      %936 = vmatmul.f32.gmra.mxu0 %v810
      %v937 = vpop.f32.mrf.mxu0
      %v938 = vadd.f32 0.0, %v937
      %939 = vdwg.mxu0
      %940 = vst [vmem:[%s6] sm:$0xff] %v845
      %941 = vst [vmem:[%s6 + $0x8] sm:$0xff] %v848
      %942 = vst [vmem:[%s6 + $0x10] sm:$0xff] %v851
      %943 = vst [vmem:[%s6 + $0x18] sm:$0xff] %v854
      %944 = vst [vmem:[%s6 + $0x20] sm:$0xff] %v857
      %945 = vst [vmem:[%s6 + $0x28] sm:$0xff] %v860
      %946 = vst [vmem:[%s6 + $0x30] sm:$0xff] %v863
      %947 = vst [vmem:[%s6 + $0x38] sm:$0xff] %v866
      %948 = vst [vmem:[%s6 + $0x40] sm:$0xff] %v869
      %949 = vst [vmem:[%s6 + $0x48] sm:$0xff] %v872
      %950 = vst [vmem:[%s6 + $0x50] sm:$0xff] %v875
      %951 = vst [vmem:[%s6 + $0x58] sm:$0xff] %v878
      %952 = vst [vmem:[%s6 + $0x60] sm:$0xff] %v881
      %953 = vst [vmem:[%s6 + $0x68] sm:$0xff] %v884
      %954 = vst [vmem:[%s6 + $0x70] sm:$0xff] %v887
      %955 = vst [vmem:[%s6 + $0x78] sm:$0xff] %v890
      %956 = vst [vmem:[%s6 + $0x80] sm:$0xff] %v893
      %957 = vst [vmem:[%s6 + $0x88] sm:$0xff] %v896
      %958 = vst [vmem:[%s6 + $0x90] sm:$0xff] %v899
      %959 = vst [vmem:[%s6 + $0x98] sm:$0xff] %v902
      %960 = vst [vmem:[%s6 + $0xa0] sm:$0xff] %v905
      %961 = vst [vmem:[%s6 + $0xa8] sm:$0xff] %v908
      %962 = vst [vmem:[%s6 + $0xb0] sm:$0xff] %v911
      %963 = vst [vmem:[%s6 + $0xb8] sm:$0xff] %v914
      %964 = vst [vmem:[%s6 + $0xc0] sm:$0xff] %v917
      %965 = vst [vmem:[%s6 + $0xc8] sm:$0xff] %v920
      %966 = vst [vmem:[%s6 + $0xd0] sm:$0xff] %v923
      %967 = vst [vmem:[%s6 + $0xd8] sm:$0xff] %v926
      %968 = vst [vmem:[%s6 + $0xe0] sm:$0xff] %v929
      %969 = vst [vmem:[%s6 + $0xe8] sm:$0xff] %v932
      %970 = vst [vmem:[%s6 + $0xf0] sm:$0xff] %v935
      %971 = vst [vmem:[%s6 + $0xf8] sm:$0xff] %v938
    $region71: #{improved_gae_forward.7} parent=1 // pred_fallthru
      _
    // Predicated region
    $region72: #{improved_gae_forward.7} parent=1 // pred_check
      _
    $region73: #{improved_gae_forward.7} parent=1 // pred_check_branch
      %973 = sbr.rel (0) target = $region75
    $region74: #{improved_gae_forward.7} parent=1 // pred_region
      _
    $region75: #{improved_gae_forward.7} parent=1 // pred_fallthru
      _
    // Predicated region
    $region76: #{improved_gae_forward.7} parent=1 // pred_check
      _
    $region77: #{improved_gae_forward.7} parent=1 // pred_check_branch
      %975 = sbr.rel (0) target = $region79
    $region78: #{improved_gae_forward.7} parent=1 // pred_region
      _
    $region79: #{improved_gae_forward.7} parent=1 // pred_fallthru
      _

// kernel: improved_gae_forward.9
$region0: #{improved_gae_forward.9}
  #allocation0 [shape = 'u32[]', space=smem, size = 0x4, offset = 0x4, fixed_abs, tag = 'smem constant byte address 0x4 - core index']
  #allocation1 [shape = 'u32[72,128]{1,0:T(1,128)}', space=vmem, size = 0x9000, scoped, tag = 'internal scratch']
  %s0 = inlined_call_operand.vmem [shape: f32[256,128], index: 0, kind: input, shape index: {}]
  %s1 = inlined_call_operand.vmem [shape: f32[128,256], index: 1, kind: input, shape index: {}]
  %s2 = inlined_call_operand.hbm [shape: f32[256,256], index: 2, kind: output, shape index: {}]
  %s3 = sld [smem:[#allocation0]]
  $region18: #{improved_gae_forward.9} parent=0
    _
  %s5 = ssub.s32 1, %s3
  %s6 = scalar_select 0, %s5, %s3
  $region1: #{improved_gae_forward.9} parent=0
    #allocation2 [shape = 'u8[262144]{0}', space=vmem, size = 0x40000, scoped, tag = 'output window, operand 0, single buffered']
    #allocation3 [shape = 's32[1]{0}', space=sflag, size = 0x4, scoped, tag = 'scoped memory for improved_gae_forward.9']
    %7 = vsyncpa [#allocation3], 0
    // Predicated region
    $region2: #{improved_gae_forward.9} parent=1 // pred_check
      _
    $region3: #{improved_gae_forward.9} parent=1 // pred_check_branch
      %9 = sbr.rel (0) target = $region5
    $region4: #{improved_gae_forward.9} parent=1 // pred_region
      _
    $region5: #{improved_gae_forward.9} parent=1 // pred_fallthru
      _
    // Predicated region
    $region6: #{improved_gae_forward.9} parent=1 // pred_check
      _
    $region7: #{improved_gae_forward.9} parent=1 // pred_check_branch
      %11 = sbr.rel (0) target = $region9
    $region8: #{improved_gae_forward.9} parent=1 // pred_region
      _
    $region9: #{improved_gae_forward.9} parent=1 // pred_fallthru
      _
    %v12 = vld [vmem:[%s0] sm:$0xff]
    %v13 = vld [vmem:[%s0 + $0x8] sm:$0xff]
    %v14 = vld [vmem:[%s0 + $0x10] sm:$0xff]
    %v15 = vld [vmem:[%s0 + $0x18] sm:$0xff]
    %v16 = vld [vmem:[%s0 + $0x20] sm:$0xff]
    %v17 = vld [vmem:[%s0 + $0x28] sm:$0xff]
    %v18 = vld [vmem:[%s0 + $0x30] sm:$0xff]
    %v19 = vld [vmem:[%s0 + $0x38] sm:$0xff]
    %v20 = vld [vmem:[%s0 + $0x40] sm:$0xff]
    %v21 = vld [vmem:[%s0 + $0x48] sm:$0xff]
    %v22 = vld [vmem:[%s0 + $0x50] sm:$0xff]
    %v23 = vld [vmem:[%s0 + $0x58] sm:$0xff]
    %v24 = vld [vmem:[%s0 + $0x60] sm:$0xff]
    %v25 = vld [vmem:[%s0 + $0x68] sm:$0xff]
    %v26 = vld [vmem:[%s0 + $0x70] sm:$0xff]
    %v27 = vld [vmem:[%s0 + $0x78] sm:$0xff]
    %v28 = vld [vmem:[%s0 + $0x80] sm:$0xff]
    %v29 = vld [vmem:[%s0 + $0x88] sm:$0xff]
    %v30 = vld [vmem:[%s0 + $0x90] sm:$0xff]
    %v31 = vld [vmem:[%s0 + $0x98] sm:$0xff]
    %v32 = vld [vmem:[%s0 + $0xa0] sm:$0xff]
    %v33 = vld [vmem:[%s0 + $0xa8] sm:$0xff]
    %v34 = vld [vmem:[%s0 + $0xb0] sm:$0xff]
    %v35 = vld [vmem:[%s0 + $0xb8] sm:$0xff]
    %v36 = vld [vmem:[%s0 + $0xc0] sm:$0xff]
    %v37 = vld [vmem:[%s0 + $0xc8] sm:$0xff]
    %v38 = vld [vmem:[%s0 + $0xd0] sm:$0xff]
    %v39 = vld [vmem:[%s0 + $0xd8] sm:$0xff]
    %v40 = vld [vmem:[%s0 + $0xe0] sm:$0xff]
    %v41 = vld [vmem:[%s0 + $0xe8] sm:$0xff]
    %v42 = vld [vmem:[%s0 + $0xf0] sm:$0xff]
    %v43 = vld [vmem:[%s0 + $0xf8] sm:$0xff]
    %v44 = vld [vmem:[%s1] sm:$0xff]
    %v45 = vld [vmem:[%s1 + $0x8] sm:$0xff]
    %v46 = vld [vmem:[%s1 + $0x10] sm:$0xff]
    %v47 = vld [vmem:[%s1 + $0x18] sm:$0xff]
    %v48 = vld [vmem:[%s1 + $0x20] sm:$0xff]
    %v49 = vld [vmem:[%s1 + $0x28] sm:$0xff]
    %v50 = vld [vmem:[%s1 + $0x30] sm:$0xff]
    %v51 = vld [vmem:[%s1 + $0x38] sm:$0xff]
    %v52 = vld [vmem:[%s1 + $0x40] sm:$0xff]
    %v53 = vld [vmem:[%s1 + $0x48] sm:$0xff]
    %v54 = vld [vmem:[%s1 + $0x50] sm:$0xff]
    %v55 = vld [vmem:[%s1 + $0x58] sm:$0xff]
    %v56 = vld [vmem:[%s1 + $0x60] sm:$0xff]
    %v57 = vld [vmem:[%s1 + $0x68] sm:$0xff]
    %v58 = vld [vmem:[%s1 + $0x70] sm:$0xff]
    %v59 = vld [vmem:[%s1 + $0x78] sm:$0xff]
    %v60 = vld [vmem:[%s1 + $0x80] sm:$0xff]
    %v61 = vld [vmem:[%s1 + $0x88] sm:$0xff]
    %v62 = vld [vmem:[%s1 + $0x90] sm:$0xff]
    %v63 = vld [vmem:[%s1 + $0x98] sm:$0xff]
    %v64 = vld [vmem:[%s1 + $0xa0] sm:$0xff]
    %v65 = vld [vmem:[%s1 + $0xa8] sm:$0xff]
    %v66 = vld [vmem:[%s1 + $0xb0] sm:$0xff]
    %v67 = vld [vmem:[%s1 + $0xb8] sm:$0xff]
    %v68 = vld [vmem:[%s1 + $0xc0] sm:$0xff]
    %v69 = vld [vmem:[%s1 + $0xc8] sm:$0xff]
    %v70 = vld [vmem:[%s1 + $0xd0] sm:$0xff]
    %v71 = vld [vmem:[%s1 + $0xd8] sm:$0xff]
    %v72 = vld [vmem:[%s1 + $0xe0] sm:$0xff]
    %v73 = vld [vmem:[%s1 + $0xe8] sm:$0xff]
    %v74 = vld [vmem:[%s1 + $0xf0] sm:$0xff]
    %v75 = vld [vmem:[%s1 + $0xf8] sm:$0xff]
    %76 = vmatpush.msra.mxu0 %v74
    %77 = vmatpush.msra.mxu0 %v72
    %78 = vmatpush.msra.mxu0 %v70
    %79 = vmatpush.msra.mxu0 %v68
    %80 = vmatpush.msra.mxu0 %v66
    %81 = vmatpush.msra.mxu0 %v64
    %82 = vmatpush.msra.mxu0 %v62
    %83 = vmatpush.msra.mxu0 %v60
    %84 = vmatpush.msra.mxu0 %v58
    %85 = vmatpush.msra.mxu0 %v56
    %86 = vmatpush.msra.mxu0 %v54
    %87 = vmatpush.msra.mxu0 %v52
    %88 = vmatpush.msra.mxu0 %v50
    %89 = vmatpush.msra.mxu0 %v48
    %90 = vmatpush.msra.mxu0 %v46
    %91 = vmatpush.msra.mxu0 %v44
    %92 = vmatmul.f32.gmra.mxu0 %v12
    %v93 = vpop.f32.mrf.mxu0
    %v94 = vadd.f32 0.0, %v93
    %95 = vmatmul.f32.gmra.mxu0 %v13
    %v96 = vpop.f32.mrf.mxu0
    %v97 = vadd.f32 0.0, %v96
    %98 = vmatmul.f32.gmra.mxu0 %v14
    %v99 = vpop.f32.mrf.mxu0
    %v100 = vadd.f32 0.0, %v99
    %101 = vmatmul.f32.gmra.mxu0 %v15
    %v102 = vpop.f32.mrf.mxu0
    %v103 = vadd.f32 0.0, %v102
    %104 = vmatmul.f32.gmra.mxu0 %v16
    %v105 = vpop.f32.mrf.mxu0
    %v106 = vadd.f32 0.0, %v105
    %107 = vmatmul.f32.gmra.mxu0 %v17
    %v108 = vpop.f32.mrf.mxu0
    %v109 = vadd.f32 0.0, %v108
    %110 = vmatmul.f32.gmra.mxu0 %v18
    %v111 = vpop.f32.mrf.mxu0
    %v112 = vadd.f32 0.0, %v111
    %113 = vmatmul.f32.gmra.mxu0 %v19
    %v114 = vpop.f32.mrf.mxu0
    %v115 = vadd.f32 0.0, %v114
    %116 = vmatmul.f32.gmra.mxu0 %v20
    %v117 = vpop.f32.mrf.mxu0
    %v118 = vadd.f32 0.0, %v117
    %119 = vmatmul.f32.gmra.mxu0 %v21
    %v120 = vpop.f32.mrf.mxu0
    %v121 = vadd.f32 0.0, %v120
    %122 = vmatmul.f32.gmra.mxu0 %v22
    %v123 = vpop.f32.mrf.mxu0
    %v124 = vadd.f32 0.0, %v123
    %125 = vmatmul.f32.gmra.mxu0 %v23
    %v126 = vpop.f32.mrf.mxu0
    %v127 = vadd.f32 0.0, %v126
    %128 = vmatmul.f32.gmra.mxu0 %v24
    %v129 = vpop.f32.mrf.mxu0
    %v130 = vadd.f32 0.0, %v129
    %131 = vmatmul.f32.gmra.mxu0 %v25
    %v132 = vpop.f32.mrf.mxu0
    %v133 = vadd.f32 0.0, %v132
    %134 = vmatmul.f32.gmra.mxu0 %v26
    %v135 = vpop.f32.mrf.mxu0
    %v136 = vadd.f32 0.0, %v135
    %137 = vmatmul.f32.gmra.mxu0 %v27
    %v138 = vpop.f32.mrf.mxu0
    %v139 = vadd.f32 0.0, %v138
    %140 = vmatmul.f32.gmra.mxu0 %v28
    %v141 = vpop.f32.mrf.mxu0
    %v142 = vadd.f32 0.0, %v141
    %143 = vmatmul.f32.gmra.mxu0 %v29
    %v144 = vpop.f32.mrf.mxu0
    %v145 = vadd.f32 0.0, %v144
    %146 = vmatmul.f32.gmra.mxu0 %v30
    %v147 = vpop.f32.mrf.mxu0
    %v148 = vadd.f32 0.0, %v147
    %149 = vmatmul.f32.gmra.mxu0 %v31
    %v150 = vpop.f32.mrf.mxu0
    %v151 = vadd.f32 0.0, %v150
    %152 = vmatmul.f32.gmra.mxu0 %v32
    %v153 = vpop.f32.mrf.mxu0
    %v154 = vadd.f32 0.0, %v153
    %155 = vmatmul.f32.gmra.mxu0 %v33
    %v156 = vpop.f32.mrf.mxu0
    %v157 = vadd.f32 0.0, %v156
    %158 = vmatmul.f32.gmra.mxu0 %v34
    %v159 = vpop.f32.mrf.mxu0
    %v160 = vadd.f32 0.0, %v159
    %161 = vmatmul.f32.gmra.mxu0 %v35
    %v162 = vpop.f32.mrf.mxu0
    %v163 = vadd.f32 0.0, %v162
    %164 = vmatmul.f32.gmra.mxu0 %v36
    %v165 = vpop.f32.mrf.mxu0
    %v166 = vadd.f32 0.0, %v165
    %167 = vmatmul.f32.gmra.mxu0 %v37
    %v168 = vpop.f32.mrf.mxu0
    %v169 = vadd.f32 0.0, %v168
    %170 = vmatmul.f32.gmra.mxu0 %v38
    %v171 = vpop.f32.mrf.mxu0
    %v172 = vadd.f32 0.0, %v171
    %173 = vmatmul.f32.gmra.mxu0 %v39
    %v174 = vpop.f32.mrf.mxu0
    %v175 = vadd.f32 0.0, %v174
    %176 = vmatmul.f32.gmra.mxu0 %v40
    %v177 = vpop.f32.mrf.mxu0
    %v178 = vadd.f32 0.0, %v177
    %179 = vmatmul.f32.gmra.mxu0 %v41
    %v180 = vpop.f32.mrf.mxu0
    %v181 = vadd.f32 0.0, %v180
    %182 = vmatmul.f32.gmra.mxu0 %v42
    %v183 = vpop.f32.mrf.mxu0
    %v184 = vadd.f32 0.0, %v183
    %185 = vmatmul.f32.gmra.mxu0 %v43
    %v186 = vpop.f32.mrf.mxu0
    %v187 = vadd.f32 0.0, %v186
    %188 = vdwg.mxu0
    %189 = vmatpush.msra.mxu0 %v75
    %190 = vmatpush.msra.mxu0 %v73
    %191 = vmatpush.msra.mxu0 %v71
    %192 = vmatpush.msra.mxu0 %v69
    %193 = vmatpush.msra.mxu0 %v67
    %194 = vmatpush.msra.mxu0 %v65
    %195 = vmatpush.msra.mxu0 %v63
    %196 = vmatpush.msra.mxu0 %v61
    %197 = vmatpush.msra.mxu0 %v59
    %198 = vmatpush.msra.mxu0 %v57
    %199 = vmatpush.msra.mxu0 %v55
    %200 = vmatpush.msra.mxu0 %v53
    %201 = vmatpush.msra.mxu0 %v51
    %202 = vmatpush.msra.mxu0 %v49
    %203 = vmatpush.msra.mxu0 %v47
    %204 = vmatpush.msra.mxu0 %v45
    %205 = vmatmul.f32.gmra.mxu0 %v12
    %v206 = vpop.f32.mrf.mxu0
    %v207 = vadd.f32 0.0, %v206
    %208 = vmatmul.f32.gmra.mxu0 %v13
    %v209 = vpop.f32.mrf.mxu0
    %v210 = vadd.f32 0.0, %v209
    %211 = vmatmul.f32.gmra.mxu0 %v14
    %v212 = vpop.f32.mrf.mxu0
    %v213 = vadd.f32 0.0, %v212
    %214 = vmatmul.f32.gmra.mxu0 %v15
    %v215 = vpop.f32.mrf.mxu0
    %v216 = vadd.f32 0.0, %v215
    %217 = vmatmul.f32.gmra.mxu0 %v16
    %v218 = vpop.f32.mrf.mxu0
    %v219 = vadd.f32 0.0, %v218
    %220 = vmatmul.f32.gmra.mxu0 %v17
    %v221 = vpop.f32.mrf.mxu0
    %v222 = vadd.f32 0.0, %v221
    %223 = vmatmul.f32.gmra.mxu0 %v18
    %v224 = vpop.f32.mrf.mxu0
    %v225 = vadd.f32 0.0, %v224
    %226 = vmatmul.f32.gmra.mxu0 %v19
    %v227 = vpop.f32.mrf.mxu0
    %v228 = vadd.f32 0.0, %v227
    %229 = vmatmul.f32.gmra.mxu0 %v20
    %v230 = vpop.f32.mrf.mxu0
    %v231 = vadd.f32 0.0, %v230
    %232 = vmatmul.f32.gmra.mxu0 %v21
    %v233 = vpop.f32.mrf.mxu0
    %v234 = vadd.f32 0.0, %v233
    %235 = vmatmul.f32.gmra.mxu0 %v22
    %v236 = vpop.f32.mrf.mxu0
    %v237 = vadd.f32 0.0, %v236
    %238 = vmatmul.f32.gmra.mxu0 %v23
    %v239 = vpop.f32.mrf.mxu0
    %v240 = vadd.f32 0.0, %v239
    %241 = vmatmul.f32.gmra.mxu0 %v24
    %v242 = vpop.f32.mrf.mxu0
    %v243 = vadd.f32 0.0, %v242
    %244 = vmatmul.f32.gmra.mxu0 %v25
    %v245 = vpop.f32.mrf.mxu0
    %v246 = vadd.f32 0.0, %v245
    %247 = vmatmul.f32.gmra.mxu0 %v26
    %v248 = vpop.f32.mrf.mxu0
    %v249 = vadd.f32 0.0, %v248
    %250 = vmatmul.f32.gmra.mxu0 %v27
    %v251 = vpop.f32.mrf.mxu0
    %v252 = vadd.f32 0.0, %v251
    %253 = vmatmul.f32.gmra.mxu0 %v28
    %v254 = vpop.f32.mrf.mxu0
    %v255 = vadd.f32 0.0, %v254
    %256 = vmatmul.f32.gmra.mxu0 %v29
    %v257 = vpop.f32.mrf.mxu0
    %v258 = vadd.f32 0.0, %v257
    %259 = vmatmul.f32.gmra.mxu0 %v30
    %v260 = vpop.f32.mrf.mxu0
    %v261 = vadd.f32 0.0, %v260
    %262 = vmatmul.f32.gmra.mxu0 %v31
    %v263 = vpop.f32.mrf.mxu0
    %v264 = vadd.f32 0.0, %v263
    %265 = vmatmul.f32.gmra.mxu0 %v32
    %v266 = vpop.f32.mrf.mxu0
    %v267 = vadd.f32 0.0, %v266
    %268 = vmatmul.f32.gmra.mxu0 %v33
    %v269 = vpop.f32.mrf.mxu0
    %v270 = vadd.f32 0.0, %v269
    %271 = vmatmul.f32.gmra.mxu0 %v34
    %v272 = vpop.f32.mrf.mxu0
    %v273 = vadd.f32 0.0, %v272
    %274 = vmatmul.f32.gmra.mxu0 %v35
    %v275 = vpop.f32.mrf.mxu0
    %v276 = vadd.f32 0.0, %v275
    %277 = vmatmul.f32.gmra.mxu0 %v36
    %v278 = vpop.f32.mrf.mxu0
    %v279 = vadd.f32 0.0, %v278
    %280 = vmatmul.f32.gmra.mxu0 %v37
    %v281 = vpop.f32.mrf.mxu0
    %v282 = vadd.f32 0.0, %v281
    %283 = vmatmul.f32.gmra.mxu0 %v38
    %v284 = vpop.f32.mrf.mxu0
    %v285 = vadd.f32 0.0, %v284
    %286 = vmatmul.f32.gmra.mxu0 %v39
    %v287 = vpop.f32.mrf.mxu0
    %v288 = vadd.f32 0.0, %v287
    %289 = vmatmul.f32.gmra.mxu0 %v40
    %v290 = vpop.f32.mrf.mxu0
    %v291 = vadd.f32 0.0, %v290
    %292 = vmatmul.f32.gmra.mxu0 %v41
    %v293 = vpop.f32.mrf.mxu0
    %v294 = vadd.f32 0.0, %v293
    %295 = vmatmul.f32.gmra.mxu0 %v42
    %v296 = vpop.f32.mrf.mxu0
    %v297 = vadd.f32 0.0, %v296
    %298 = vmatmul.f32.gmra.mxu0 %v43
    %v299 = vpop.f32.mrf.mxu0
    %v300 = vadd.f32 0.0, %v299
    %301 = vdwg.mxu0
    %v302 = vxor.u32 %v94, 2147483648
    %v303 = vxor.u32 %v207, 2147483648
    %v304 = vxor.u32 %v97, 2147483648
    %v305 = vxor.u32 %v210, 2147483648
    %v306 = vxor.u32 %v100, 2147483648
    %v307 = vxor.u32 %v213, 2147483648
    %v308 = vxor.u32 %v103, 2147483648
    %v309 = vxor.u32 %v216, 2147483648
    %v310 = vxor.u32 %v106, 2147483648
    %v311 = vxor.u32 %v219, 2147483648
    %v312 = vxor.u32 %v109, 2147483648
    %v313 = vxor.u32 %v222, 2147483648
    %v314 = vxor.u32 %v112, 2147483648
    %v315 = vxor.u32 %v225, 2147483648
    %v316 = vxor.u32 %v115, 2147483648
    %v317 = vxor.u32 %v228, 2147483648
    %v318 = vxor.u32 %v118, 2147483648
    %v319 = vxor.u32 %v231, 2147483648
    %v320 = vxor.u32 %v121, 2147483648
    %v321 = vxor.u32 %v234, 2147483648
    %v322 = vxor.u32 %v124, 2147483648
    %v323 = vxor.u32 %v237, 2147483648
    %v324 = vxor.u32 %v127, 2147483648
    %v325 = vxor.u32 %v240, 2147483648
    %v326 = vxor.u32 %v130, 2147483648
    %v327 = vxor.u32 %v243, 2147483648
    %v328 = vxor.u32 %v133, 2147483648
    %v329 = vxor.u32 %v246, 2147483648
    %v330 = vxor.u32 %v136, 2147483648
    %v331 = vxor.u32 %v249, 2147483648
    %v332 = vxor.u32 %v139, 2147483648
    %v333 = vxor.u32 %v252, 2147483648
    %v334 = vxor.u32 %v142, 2147483648
    %v335 = vxor.u32 %v255, 2147483648
    %v336 = vxor.u32 %v145, 2147483648
    %v337 = vxor.u32 %v258, 2147483648
    %v338 = vxor.u32 %v148, 2147483648
    %v339 = vxor.u32 %v261, 2147483648
    %v340 = vxor.u32 %v151, 2147483648
    %v341 = vxor.u32 %v264, 2147483648
    %v342 = vxor.u32 %v154, 2147483648
    %v343 = vxor.u32 %v267, 2147483648
    %v344 = vxor.u32 %v157, 2147483648
    %v345 = vxor.u32 %v270, 2147483648
    %v346 = vxor.u32 %v160, 2147483648
    %v347 = vxor.u32 %v273, 2147483648
    %v348 = vxor.u32 %v163, 2147483648
    %v349 = vxor.u32 %v276, 2147483648
    %v350 = vxor.u32 %v166, 2147483648
    %v351 = vxor.u32 %v279, 2147483648
    %v352 = vxor.u32 %v169, 2147483648
    %v353 = vxor.u32 %v282, 2147483648
    %v354 = vxor.u32 %v172, 2147483648
    %v355 = vxor.u32 %v285, 2147483648
    %v356 = vxor.u32 %v175, 2147483648
    %v357 = vxor.u32 %v288, 2147483648
    %v358 = vxor.u32 %v178, 2147483648
    %v359 = vxor.u32 %v291, 2147483648
    %v360 = vxor.u32 %v181, 2147483648
    %v361 = vxor.u32 %v294, 2147483648
    %v362 = vxor.u32 %v184, 2147483648
    %v363 = vxor.u32 %v297, 2147483648
    %v364 = vxor.u32 %v187, 2147483648
    %v365 = vxor.u32 %v300, 2147483648
    %v366 = vmul.f32 %v302, 1.442695
    %v367 = vpow.pop %v366
    %v368 = vmul.f32 %v303, 1.442695
    %v369 = vpow.pop %v368
    %v370 = vmul.f32 %v304, 1.442695
    %v371 = vpow.pop %v370
    %v372 = vmul.f32 %v305, 1.442695
    %v373 = vpow.pop %v372
    %v374 = vmul.f32 %v306, 1.442695
    %v375 = vpow.pop %v374
    %v376 = vmul.f32 %v307, 1.442695
    %v377 = vpow.pop %v376
    %v378 = vmul.f32 %v308, 1.442695
    %v379 = vpow.pop %v378
    %v380 = vmul.f32 %v309, 1.442695
    %v381 = vpow.pop %v380
    %v382 = vmul.f32 %v310, 1.442695
    %v383 = vpow.pop %v382
    %v384 = vmul.f32 %v311, 1.442695
    %v385 = vpow.pop %v384
    %v386 = vmul.f32 %v312, 1.442695
    %v387 = vpow.pop %v386
    %v388 = vmul.f32 %v313, 1.442695
    %v389 = vpow.pop %v388
    %v390 = vmul.f32 %v314, 1.442695
    %v391 = vpow.pop %v390
    %v392 = vmul.f32 %v315, 1.442695
    %v393 = vpow.pop %v392
    %v394 = vmul.f32 %v316, 1.442695
    %v395 = vpow.pop %v394
    %v396 = vmul.f32 %v317, 1.442695
    %v397 = vpow.pop %v396
    %v398 = vmul.f32 %v318, 1.442695
    %v399 = vpow.pop %v398
    %v400 = vmul.f32 %v319, 1.442695
    %v401 = vpow.pop %v400
    %v402 = vmul.f32 %v320, 1.442695
    %v403 = vpow.pop %v402
    %v404 = vmul.f32 %v321, 1.442695
    %v405 = vpow.pop %v404
    %v406 = vmul.f32 %v322, 1.442695
    %v407 = vpow.pop %v406
    %v408 = vmul.f32 %v323, 1.442695
    %v409 = vpow.pop %v408
    %v410 = vmul.f32 %v324, 1.442695
    %v411 = vpow.pop %v410
    %v412 = vmul.f32 %v325, 1.442695
    %v413 = vpow.pop %v412
    %v414 = vmul.f32 %v326, 1.442695
    %v415 = vpow.pop %v414
    %v416 = vmul.f32 %v327, 1.442695
    %v417 = vpow.pop %v416
    %v418 = vmul.f32 %v328, 1.442695
    %v419 = vpow.pop %v418
    %v420 = vmul.f32 %v329, 1.442695
    %v421 = vpow.pop %v420
    %v422 = vmul.f32 %v330, 1.442695
    %v423 = vpow.pop %v422
    %v424 = vmul.f32 %v331, 1.442695
    %v425 = vpow.pop %v424
    %v426 = vmul.f32 %v332, 1.442695
    %v427 = vpow.pop %v426
    %v428 = vmul.f32 %v333, 1.442695
    %v429 = vpow.pop %v428
    %v430 = vmul.f32 %v334, 1.442695
    %v431 = vpow.pop %v430
    %v432 = vmul.f32 %v335, 1.442695
    %v433 = vpow.pop %v432
    %v434 = vmul.f32 %v336, 1.442695
    %v435 = vpow.pop %v434
    %v436 = vmul.f32 %v337, 1.442695
    %v437 = vpow.pop %v436
    %v438 = vmul.f32 %v338, 1.442695
    %v439 = vpow.pop %v438
    %v440 = vmul.f32 %v339, 1.442695
    %v441 = vpow.pop %v440
    %v442 = vmul.f32 %v340, 1.442695
    %v443 = vpow.pop %v442
    %v444 = vmul.f32 %v341, 1.442695
    %v445 = vpow.pop %v444
    %v446 = vmul.f32 %v342, 1.442695
    %v447 = vpow.pop %v446
    %v448 = vmul.f32 %v343, 1.442695
    %v449 = vpow.pop %v448
    %v450 = vmul.f32 %v344, 1.442695
    %v451 = vpow.pop %v450
    %v452 = vmul.f32 %v345, 1.442695
    %v453 = vpow.pop %v452
    %v454 = vmul.f32 %v346, 1.442695
    %v455 = vpow.pop %v454
    %v456 = vmul.f32 %v347, 1.442695
    %v457 = vpow.pop %v456
    %v458 = vmul.f32 %v348, 1.442695
    %v459 = vpow.pop %v458
    %v460 = vmul.f32 %v349, 1.442695
    %v461 = vpow.pop %v460
    %v462 = vmul.f32 %v350, 1.442695
    %v463 = vpow.pop %v462
    %v464 = vmul.f32 %v351, 1.442695
    %v465 = vpow.pop %v464
    %v466 = vmul.f32 %v352, 1.442695
    %v467 = vpow.pop %v466
    %v468 = vmul.f32 %v353, 1.442695
    %v469 = vpow.pop %v468
    %v470 = vmul.f32 %v354, 1.442695
    %v471 = vpow.pop %v470
    %v472 = vmul.f32 %v355, 1.442695
    %v473 = vpow.pop %v472
    %v474 = vmul.f32 %v356, 1.442695
    %v475 = vpow.pop %v474
    %v476 = vmul.f32 %v357, 1.442695
    %v477 = vpow.pop %v476
    %v478 = vmul.f32 %v358, 1.442695
    %v479 = vpow.pop %v478
    %v480 = vmul.f32 %v359, 1.442695
    %v481 = vpow.pop %v480
    %v482 = vmul.f32 %v360, 1.442695
    %v483 = vpow.pop %v482
    %v484 = vmul.f32 %v361, 1.442695
    %v485 = vpow.pop %v484
    %v486 = vmul.f32 %v362, 1.442695
    %v487 = vpow.pop %v486
    %v488 = vmul.f32 %v363, 1.442695
    %v489 = vpow.pop %v488
    %v490 = vmul.f32 %v364, 1.442695
    %v491 = vpow.pop %v490
    %v492 = vmul.f32 %v365, 1.442695
    %v493 = vpow.pop %v492
    %v494 = vadd.f32 %v367, 1.0
    %v495 = vadd.f32 %v369, 1.0
    %v496 = vadd.f32 %v371, 1.0
    %v497 = vadd.f32 %v373, 1.0
    %v498 = vadd.f32 %v375, 1.0
    %v499 = vadd.f32 %v377, 1.0
    %v500 = vadd.f32 %v379, 1.0
    %v501 = vadd.f32 %v381, 1.0
    %v502 = vadd.f32 %v383, 1.0
    %v503 = vadd.f32 %v385, 1.0
    %v504 = vadd.f32 %v387, 1.0
    %v505 = vadd.f32 %v389, 1.0
    %v506 = vadd.f32 %v391, 1.0
    %v507 = vadd.f32 %v393, 1.0
    %v508 = vadd.f32 %v395, 1.0
    %v509 = vadd.f32 %v397, 1.0
    %v510 = vadd.f32 %v399, 1.0
    %v511 = vadd.f32 %v401, 1.0
    %v512 = vadd.f32 %v403, 1.0
    %v513 = vadd.f32 %v405, 1.0
    %v514 = vadd.f32 %v407, 1.0
    %v515 = vadd.f32 %v409, 1.0
    %v516 = vadd.f32 %v411, 1.0
    %v517 = vadd.f32 %v413, 1.0
    %v518 = vadd.f32 %v415, 1.0
    %v519 = vadd.f32 %v417, 1.0
    %v520 = vadd.f32 %v419, 1.0
    %v521 = vadd.f32 %v421, 1.0
    %v522 = vadd.f32 %v423, 1.0
    %v523 = vadd.f32 %v425, 1.0
    %v524 = vadd.f32 %v427, 1.0
    %v525 = vadd.f32 %v429, 1.0
    %v526 = vadd.f32 %v431, 1.0
    %v527 = vadd.f32 %v433, 1.0
    %v528 = vadd.f32 %v435, 1.0
    %v529 = vadd.f32 %v437, 1.0
    %v530 = vadd.f32 %v439, 1.0
    %v531 = vadd.f32 %v441, 1.0
    %v532 = vadd.f32 %v443, 1.0
    %v533 = vadd.f32 %v445, 1.0
    %v534 = vadd.f32 %v447, 1.0
    %v535 = vadd.f32 %v449, 1.0
    %v536 = vadd.f32 %v451, 1.0
    %v537 = vadd.f32 %v453, 1.0
    %v538 = vadd.f32 %v455, 1.0
    %v539 = vadd.f32 %v457, 1.0
    %v540 = vadd.f32 %v459, 1.0
    %v541 = vadd.f32 %v461, 1.0
    %v542 = vadd.f32 %v463, 1.0
    %v543 = vadd.f32 %v465, 1.0
    %v544 = vadd.f32 %v467, 1.0
    %v545 = vadd.f32 %v469, 1.0
    %v546 = vadd.f32 %v471, 1.0
    %v547 = vadd.f32 %v473, 1.0
    %v548 = vadd.f32 %v475, 1.0
    %v549 = vadd.f32 %v477, 1.0
    %v550 = vadd.f32 %v479, 1.0
    %v551 = vadd.f32 %v481, 1.0
    %v552 = vadd.f32 %v483, 1.0
    %v553 = vadd.f32 %v485, 1.0
    %v554 = vadd.f32 %v487, 1.0
    %v555 = vadd.f32 %v489, 1.0
    %v556 = vadd.f32 %v491, 1.0
    %v557 = vadd.f32 %v493, 1.0
    %v558 = vrcp.pop %v494
    %v559 = vmul.f32 %v494, %v558
    %v560 = vsub.f32 1.0, %v559
    %v561 = vmul.f32 %v558, %v560
    %v562 = vadd.f32 %v558, %v561
    %vm563 = vweird.f32 %v494
    %vm564 = vweird.f32 %v558
    %vm565 = vmor %vm563, %vm564
    %v566 = vsel %vm565, %v558, %v562
    %v567 = vand.u32 2147483647, %v494
    %vm568 = vcmp.eq.f32.partialorder %v567, 8.507059e+37
    %v569 = vand.u32 %v494, 2147483648
    %v570 = vor.u32 1.1754944e-38, %v569
    %v571 = vsel %vm568, %v570, %v566
    %v572 = vmul.f32 1.0, %v571
    %v573 = vrcp.pop %v495
    %v574 = vmul.f32 %v495, %v573
    %v575 = vsub.f32 1.0, %v574
    %v576 = vmul.f32 %v573, %v575
    %v577 = vadd.f32 %v573, %v576
    %vm578 = vweird.f32 %v495
    %vm579 = vweird.f32 %v573
    %vm580 = vmor %vm578, %vm579
    %v581 = vsel %vm580, %v573, %v577
    %v582 = vand.u32 2147483647, %v495
    %vm583 = vcmp.eq.f32.partialorder %v582, 8.507059e+37
    %v584 = vand.u32 %v495, 2147483648
    %v585 = vor.u32 1.1754944e-38, %v584
    %v586 = vsel %vm583, %v585, %v581
    %v587 = vmul.f32 1.0, %v586
    %v588 = vrcp.pop %v496
    %v589 = vmul.f32 %v496, %v588
    %v590 = vsub.f32 1.0, %v589
    %v591 = vmul.f32 %v588, %v590
    %v592 = vadd.f32 %v588, %v591
    %vm593 = vweird.f32 %v496
    %vm594 = vweird.f32 %v588
    %vm595 = vmor %vm593, %vm594
    %v596 = vsel %vm595, %v588, %v592
    %v597 = vand.u32 2147483647, %v496
    %vm598 = vcmp.eq.f32.partialorder %v597, 8.507059e+37
    %v599 = vand.u32 %v496, 2147483648
    %v600 = vor.u32 1.1754944e-38, %v599
    %v601 = vsel %vm598, %v600, %v596
    %v602 = vmul.f32 1.0, %v601
    %v603 = vrcp.pop %v497
    %v604 = vmul.f32 %v497, %v603
    %v605 = vsub.f32 1.0, %v604
    %v606 = vmul.f32 %v603, %v605
    %v607 = vadd.f32 %v603, %v606
    %vm608 = vweird.f32 %v497
    %vm609 = vweird.f32 %v603
    %vm610 = vmor %vm608, %vm609
    %v611 = vsel %vm610, %v603, %v607
    %v612 = vand.u32 2147483647, %v497
    %vm613 = vcmp.eq.f32.partialorder %v612, 8.507059e+37
    %v614 = vand.u32 %v497, 2147483648
    %v615 = vor.u32 1.1754944e-38, %v614
    %v616 = vsel %vm613, %v615, %v611
    %v617 = vmul.f32 1.0, %v616
    %v618 = vrcp.pop %v498
    %v619 = vmul.f32 %v498, %v618
    %v620 = vsub.f32 1.0, %v619
    %v621 = vmul.f32 %v618, %v620
    %v622 = vadd.f32 %v618, %v621
    %vm623 = vweird.f32 %v498
    %vm624 = vweird.f32 %v618
    %vm625 = vmor %vm623, %vm624
    %v626 = vsel %vm625, %v618, %v622
    %v627 = vand.u32 2147483647, %v498
    %vm628 = vcmp.eq.f32.partialorder %v627, 8.507059e+37
    %v629 = vand.u32 %v498, 2147483648
    %v630 = vor.u32 1.1754944e-38, %v629
    %v631 = vsel %vm628, %v630, %v626
    %v632 = vmul.f32 1.0, %v631
    %v633 = vrcp.pop %v499
    %v634 = vmul.f32 %v499, %v633
    %v635 = vsub.f32 1.0, %v634
    %v636 = vmul.f32 %v633, %v635
    %v637 = vadd.f32 %v633, %v636
    %vm638 = vweird.f32 %v499
    %vm639 = vweird.f32 %v633
    %vm640 = vmor %vm638, %vm639
    %v641 = vsel %vm640, %v633, %v637
    %v642 = vand.u32 2147483647, %v499
    %vm643 = vcmp.eq.f32.partialorder %v642, 8.507059e+37
    %v644 = vand.u32 %v499, 2147483648
    %v645 = vor.u32 1.1754944e-38, %v644
    %v646 = vsel %vm643, %v645, %v641
    %v647 = vmul.f32 1.0, %v646
    %v648 = vrcp.pop %v500
    %v649 = vmul.f32 %v500, %v648
    %v650 = vsub.f32 1.0, %v649
    %v651 = vmul.f32 %v648, %v650
    %v652 = vadd.f32 %v648, %v651
    %vm653 = vweird.f32 %v500
    %vm654 = vweird.f32 %v648
    %vm655 = vmor %vm653, %vm654
    %v656 = vsel %vm655, %v648, %v652
    %v657 = vand.u32 2147483647, %v500
    %vm658 = vcmp.eq.f32.partialorder %v657, 8.507059e+37
    %v659 = vand.u32 %v500, 2147483648
    %v660 = vor.u32 1.1754944e-38, %v659
    %v661 = vsel %vm658, %v660, %v656
    %v662 = vmul.f32 1.0, %v661
    %v663 = vrcp.pop %v501
    %v664 = vmul.f32 %v501, %v663
    %v665 = vsub.f32 1.0, %v664
    %v666 = vmul.f32 %v663, %v665
    %v667 = vadd.f32 %v663, %v666
    %vm668 = vweird.f32 %v501
    %vm669 = vweird.f32 %v663
    %vm670 = vmor %vm668, %vm669
    %v671 = vsel %vm670, %v663, %v667
    %v672 = vand.u32 2147483647, %v501
    %vm673 = vcmp.eq.f32.partialorder %v672, 8.507059e+37
    %v674 = vand.u32 %v501, 2147483648
    %v675 = vor.u32 1.1754944e-38, %v674
    %v676 = vsel %vm673, %v675, %v671
    %v677 = vmul.f32 1.0, %v676
    %v678 = vrcp.pop %v502
    %v679 = vmul.f32 %v502, %v678
    %v680 = vsub.f32 1.0, %v679
    %v681 = vmul.f32 %v678, %v680
    %v682 = vadd.f32 %v678, %v681
    %vm683 = vweird.f32 %v502
    %vm684 = vweird.f32 %v678
    %vm685 = vmor %vm683, %vm684
    %v686 = vsel %vm685, %v678, %v682
    %v687 = vand.u32 2147483647, %v502
    %vm688 = vcmp.eq.f32.partialorder %v687, 8.507059e+37
    %v689 = vand.u32 %v502, 2147483648
    %v690 = vor.u32 1.1754944e-38, %v689
    %v691 = vsel %vm688, %v690, %v686
    %v692 = vmul.f32 1.0, %v691
    %v693 = vrcp.pop %v503
    %v694 = vmul.f32 %v503, %v693
    %v695 = vsub.f32 1.0, %v694
    %v696 = vmul.f32 %v693, %v695
    %v697 = vadd.f32 %v693, %v696
    %vm698 = vweird.f32 %v503
    %vm699 = vweird.f32 %v693
    %vm700 = vmor %vm698, %vm699
    %v701 = vsel %vm700, %v693, %v697
    %v702 = vand.u32 2147483647, %v503
    %vm703 = vcmp.eq.f32.partialorder %v702, 8.507059e+37
    %v704 = vand.u32 %v503, 2147483648
    %v705 = vor.u32 1.1754944e-38, %v704
    %v706 = vsel %vm703, %v705, %v701
    %v707 = vmul.f32 1.0, %v706
    %v708 = vrcp.pop %v504
    %v709 = vmul.f32 %v504, %v708
    %v710 = vsub.f32 1.0, %v709
    %v711 = vmul.f32 %v708, %v710
    %v712 = vadd.f32 %v708, %v711
    %vm713 = vweird.f32 %v504
    %vm714 = vweird.f32 %v708
    %vm715 = vmor %vm713, %vm714
    %v716 = vsel %vm715, %v708, %v712
    %v717 = vand.u32 2147483647, %v504
    %vm718 = vcmp.eq.f32.partialorder %v717, 8.507059e+37
    %v719 = vand.u32 %v504, 2147483648
    %v720 = vor.u32 1.1754944e-38, %v719
    %v721 = vsel %vm718, %v720, %v716
    %v722 = vmul.f32 1.0, %v721
    %v723 = vrcp.pop %v505
    %v724 = vmul.f32 %v505, %v723
    %v725 = vsub.f32 1.0, %v724
    %v726 = vmul.f32 %v723, %v725
    %v727 = vadd.f32 %v723, %v726
    %vm728 = vweird.f32 %v505
    %vm729 = vweird.f32 %v723
    %vm730 = vmor %vm728, %vm729
    %v731 = vsel %vm730, %v723, %v727
    %v732 = vand.u32 2147483647, %v505
    %vm733 = vcmp.eq.f32.partialorder %v732, 8.507059e+37
    %v734 = vand.u32 %v505, 2147483648
    %v735 = vor.u32 1.1754944e-38, %v734
    %v736 = vsel %vm733, %v735, %v731
    %v737 = vmul.f32 1.0, %v736
    %v738 = vrcp.pop %v506
    %v739 = vmul.f32 %v506, %v738
    %v740 = vsub.f32 1.0, %v739
    %v741 = vmul.f32 %v738, %v740
    %v742 = vadd.f32 %v738, %v741
    %vm743 = vweird.f32 %v506
    %vm744 = vweird.f32 %v738
    %vm745 = vmor %vm743, %vm744
    %v746 = vsel %vm745, %v738, %v742
    %v747 = vand.u32 2147483647, %v506
    %vm748 = vcmp.eq.f32.partialorder %v747, 8.507059e+37
    %v749 = vand.u32 %v506, 2147483648
    %v750 = vor.u32 1.1754944e-38, %v749
    %v751 = vsel %vm748, %v750, %v746
    %v752 = vmul.f32 1.0, %v751
    %v753 = vrcp.pop %v507
    %v754 = vmul.f32 %v507, %v753
    %v755 = vsub.f32 1.0, %v754
    %v756 = vmul.f32 %v753, %v755
    %v757 = vadd.f32 %v753, %v756
    %vm758 = vweird.f32 %v507
    %vm759 = vweird.f32 %v753
    %vm760 = vmor %vm758, %vm759
    %v761 = vsel %vm760, %v753, %v757
    %v762 = vand.u32 2147483647, %v507
    %vm763 = vcmp.eq.f32.partialorder %v762, 8.507059e+37
    %v764 = vand.u32 %v507, 2147483648
    %v765 = vor.u32 1.1754944e-38, %v764
    %v766 = vsel %vm763, %v765, %v761
    %v767 = vmul.f32 1.0, %v766
    %v768 = vrcp.pop %v508
    %v769 = vmul.f32 %v508, %v768
    %v770 = vsub.f32 1.0, %v769
    %v771 = vmul.f32 %v768, %v770
    %v772 = vadd.f32 %v768, %v771
    %vm773 = vweird.f32 %v508
    %vm774 = vweird.f32 %v768
    %vm775 = vmor %vm773, %vm774
    %v776 = vsel %vm775, %v768, %v772
    %v777 = vand.u32 2147483647, %v508
    %vm778 = vcmp.eq.f32.partialorder %v777, 8.507059e+37
    %v779 = vand.u32 %v508, 2147483648
    %v780 = vor.u32 1.1754944e-38, %v779
    %v781 = vsel %vm778, %v780, %v776
    %v782 = vmul.f32 1.0, %v781
    %v783 = vrcp.pop %v509
    %v784 = vmul.f32 %v509, %v783
    %v785 = vsub.f32 1.0, %v784
    %v786 = vmul.f32 %v783, %v785
    %v787 = vadd.f32 %v783, %v786
    %vm788 = vweird.f32 %v509
    %vm789 = vweird.f32 %v783
    %vm790 = vmor %vm788, %vm789
    %v791 = vsel %vm790, %v783, %v787
    %v792 = vand.u32 2147483647, %v509
    %vm793 = vcmp.eq.f32.partialorder %v792, 8.507059e+37
    %v794 = vand.u32 %v509, 2147483648
    %v795 = vor.u32 1.1754944e-38, %v794
    %v796 = vsel %vm793, %v795, %v791
    %v797 = vmul.f32 1.0, %v796
    %v798 = vrcp.pop %v510
    %v799 = vmul.f32 %v510, %v798
    %v800 = vsub.f32 1.0, %v799
    %v801 = vmul.f32 %v798, %v800
    %v802 = vadd.f32 %v798, %v801
    %vm803 = vweird.f32 %v510
    %vm804 = vweird.f32 %v798
    %vm805 = vmor %vm803, %vm804
    %v806 = vsel %vm805, %v798, %v802
    %v807 = vand.u32 2147483647, %v510
    %vm808 = vcmp.eq.f32.partialorder %v807, 8.507059e+37
    %v809 = vand.u32 %v510, 2147483648
    %v810 = vor.u32 1.1754944e-38, %v809
    %v811 = vsel %vm808, %v810, %v806
    %v812 = vmul.f32 1.0, %v811
    %v813 = vrcp.pop %v511
    %v814 = vmul.f32 %v511, %v813
    %v815 = vsub.f32 1.0, %v814
    %v816 = vmul.f32 %v813, %v815
    %v817 = vadd.f32 %v813, %v816
    %vm818 = vweird.f32 %v511
    %vm819 = vweird.f32 %v813
    %vm820 = vmor %vm818, %vm819
    %v821 = vsel %vm820, %v813, %v817
    %v822 = vand.u32 2147483647, %v511
    %vm823 = vcmp.eq.f32.partialorder %v822, 8.507059e+37
    %v824 = vand.u32 %v511, 2147483648
    %v825 = vor.u32 1.1754944e-38, %v824
    %v826 = vsel %vm823, %v825, %v821
    %v827 = vmul.f32 1.0, %v826
    %v828 = vrcp.pop %v512
    %v829 = vmul.f32 %v512, %v828
    %v830 = vsub.f32 1.0, %v829
    %v831 = vmul.f32 %v828, %v830
    %v832 = vadd.f32 %v828, %v831
    %vm833 = vweird.f32 %v512
    %vm834 = vweird.f32 %v828
    %vm835 = vmor %vm833, %vm834
    %v836 = vsel %vm835, %v828, %v832
    %v837 = vand.u32 2147483647, %v512
    %vm838 = vcmp.eq.f32.partialorder %v837, 8.507059e+37
    %v839 = vand.u32 %v512, 2147483648
    %v840 = vor.u32 1.1754944e-38, %v839
    %v841 = vsel %vm838, %v840, %v836
    %v842 = vmul.f32 1.0, %v841
    %v843 = vrcp.pop %v513
    %v844 = vmul.f32 %v513, %v843
    %v845 = vsub.f32 1.0, %v844
    %v846 = vmul.f32 %v843, %v845
    %v847 = vadd.f32 %v843, %v846
    %vm848 = vweird.f32 %v513
    %vm849 = vweird.f32 %v843
    %vm850 = vmor %vm848, %vm849
    %v851 = vsel %vm850, %v843, %v847
    %v852 = vand.u32 2147483647, %v513
    %vm853 = vcmp.eq.f32.partialorder %v852, 8.507059e+37
    %v854 = vand.u32 %v513, 2147483648
    %v855 = vor.u32 1.1754944e-38, %v854
    %v856 = vsel %vm853, %v855, %v851
    %v857 = vmul.f32 1.0, %v856
    %v858 = vrcp.pop %v514
    %v859 = vmul.f32 %v514, %v858
    %v860 = vsub.f32 1.0, %v859
    %v861 = vmul.f32 %v858, %v860
    %v862 = vadd.f32 %v858, %v861
    %vm863 = vweird.f32 %v514
    %vm864 = vweird.f32 %v858
    %vm865 = vmor %vm863, %vm864
    %v866 = vsel %vm865, %v858, %v862
    %v867 = vand.u32 2147483647, %v514
    %vm868 = vcmp.eq.f32.partialorder %v867, 8.507059e+37
    %v869 = vand.u32 %v514, 2147483648
    %v870 = vor.u32 1.1754944e-38, %v869
    %v871 = vsel %vm868, %v870, %v866
    %v872 = vmul.f32 1.0, %v871
    %v873 = vrcp.pop %v515
    %v874 = vmul.f32 %v515, %v873
    %v875 = vsub.f32 1.0, %v874
    %v876 = vmul.f32 %v873, %v875
    %v877 = vadd.f32 %v873, %v876
    %vm878 = vweird.f32 %v515
    %vm879 = vweird.f32 %v873
    %vm880 = vmor %vm878, %vm879
    %v881 = vsel %vm880, %v873, %v877
    %v882 = vand.u32 2147483647, %v515
    %vm883 = vcmp.eq.f32.partialorder %v882, 8.507059e+37
    %v884 = vand.u32 %v515, 2147483648
    %v885 = vor.u32 1.1754944e-38, %v884
    %v886 = vsel %vm883, %v885, %v881
    %v887 = vmul.f32 1.0, %v886
    %v888 = vrcp.pop %v516
    %v889 = vmul.f32 %v516, %v888
    %v890 = vsub.f32 1.0, %v889
    %v891 = vmul.f32 %v888, %v890
    %v892 = vadd.f32 %v888, %v891
    %vm893 = vweird.f32 %v516
    %vm894 = vweird.f32 %v888
    %vm895 = vmor %vm893, %vm894
    %v896 = vsel %vm895, %v888, %v892
    %v897 = vand.u32 2147483647, %v516
    %vm898 = vcmp.eq.f32.partialorder %v897, 8.507059e+37
    %v899 = vand.u32 %v516, 2147483648
    %v900 = vor.u32 1.1754944e-38, %v899
    %v901 = vsel %vm898, %v900, %v896
    %v902 = vmul.f32 1.0, %v901
    %v903 = vrcp.pop %v517
    %v904 = vmul.f32 %v517, %v903
    %v905 = vsub.f32 1.0, %v904
    %v906 = vmul.f32 %v903, %v905
    %v907 = vadd.f32 %v903, %v906
    %vm908 = vweird.f32 %v517
    %vm909 = vweird.f32 %v903
    %vm910 = vmor %vm908, %vm909
    %v911 = vsel %vm910, %v903, %v907
    %v912 = vand.u32 2147483647, %v517
    %vm913 = vcmp.eq.f32.partialorder %v912, 8.507059e+37
    %v914 = vand.u32 %v517, 2147483648
    %v915 = vor.u32 1.1754944e-38, %v914
    %v916 = vsel %vm913, %v915, %v911
    %v917 = vmul.f32 1.0, %v916
    %v918 = vrcp.pop %v518
    %v919 = vmul.f32 %v518, %v918
    %v920 = vsub.f32 1.0, %v919
    %v921 = vmul.f32 %v918, %v920
    %v922 = vadd.f32 %v918, %v921
    %vm923 = vweird.f32 %v518
    %vm924 = vweird.f32 %v918
    %vm925 = vmor %vm923, %vm924
    %v926 = vsel %vm925, %v918, %v922
    %v927 = vand.u32 2147483647, %v518
    %vm928 = vcmp.eq.f32.partialorder %v927, 8.507059e+37
    %v929 = vand.u32 %v518, 2147483648
    %v930 = vor.u32 1.1754944e-38, %v929
    %v931 = vsel %vm928, %v930, %v926
    %v932 = vmul.f32 1.0, %v931
    %v933 = vrcp.pop %v519
    %v934 = vmul.f32 %v519, %v933
    %v935 = vsub.f32 1.0, %v934
    %v936 = vmul.f32 %v933, %v935
    %v937 = vadd.f32 %v933, %v936
    %vm938 = vweird.f32 %v519
    %vm939 = vweird.f32 %v933
    %vm940 = vmor %vm938, %vm939
    %v941 = vsel %vm940, %v933, %v937
    %v942 = vand.u32 2147483647, %v519
    %vm943 = vcmp.eq.f32.partialorder %v942, 8.507059e+37
    %v944 = vand.u32 %v519, 2147483648
    %v945 = vor.u32 1.1754944e-38, %v944
    %v946 = vsel %vm943, %v945, %v941
    %v947 = vmul.f32 1.0, %v946
    %v948 = vrcp.pop %v520
    %v949 = vmul.f32 %v520, %v948
    %v950 = vsub.f32 1.0, %v949
    %v951 = vmul.f32 %v948, %v950
    %v952 = vadd.f32 %v948, %v951
    %vm953 = vweird.f32 %v520
    %vm954 = vweird.f32 %v948
    %vm955 = vmor %vm953, %vm954
    %v956 = vsel %vm955, %v948, %v952
    %v957 = vand.u32 2147483647, %v520
    %vm958 = vcmp.eq.f32.partialorder %v957, 8.507059e+37
    %v959 = vand.u32 %v520, 2147483648
    %v960 = vor.u32 1.1754944e-38, %v959
    %v961 = vsel %vm958, %v960, %v956
    %v962 = vmul.f32 1.0, %v961
    %v963 = vrcp.pop %v521
    %v964 = vmul.f32 %v521, %v963
    %v965 = vsub.f32 1.0, %v964
    %v966 = vmul.f32 %v963, %v965
    %v967 = vadd.f32 %v963, %v966
    %vm968 = vweird.f32 %v521
    %vm969 = vweird.f32 %v963
    %vm970 = vmor %vm968, %vm969
    %v971 = vsel %vm970, %v963, %v967
    %v972 = vand.u32 2147483647, %v521
    %vm973 = vcmp.eq.f32.partialorder %v972, 8.507059e+37
    %v974 = vand.u32 %v521, 2147483648
    %v975 = vor.u32 1.1754944e-38, %v974
    %v976 = vsel %vm973, %v975, %v971
    %v977 = vmul.f32 1.0, %v976
    %v978 = vrcp.pop %v522
    %v979 = vmul.f32 %v522, %v978
    %v980 = vsub.f32 1.0, %v979
    %v981 = vmul.f32 %v978, %v980
    %v982 = vadd.f32 %v978, %v981
    %vm983 = vweird.f32 %v522
    %vm984 = vweird.f32 %v978
    %vm985 = vmor %vm983, %vm984
    %v986 = vsel %vm985, %v978, %v982
    %v987 = vand.u32 2147483647, %v522
    %vm988 = vcmp.eq.f32.partialorder %v987, 8.507059e+37
    %v989 = vand.u32 %v522, 2147483648
    %v990 = vor.u32 1.1754944e-38, %v989
    %v991 = vsel %vm988, %v990, %v986
    %v992 = vmul.f32 1.0, %v991
    %v993 = vrcp.pop %v523
    %v994 = vmul.f32 %v523, %v993
    %v995 = vsub.f32 1.0, %v994
    %v996 = vmul.f32 %v993, %v995
    %v997 = vadd.f32 %v993, %v996
    %vm998 = vweird.f32 %v523
    %vm999 = vweird.f32 %v993
    %vm1000 = vmor %vm998, %vm999
    %v1001 = vsel %vm1000, %v993, %v997
    %v1002 = vand.u32 2147483647, %v523
    %vm1003 = vcmp.eq.f32.partialorder %v1002, 8.507059e+37
    %v1004 = vand.u32 %v523, 2147483648
    %v1005 = vor.u32 1.1754944e-38, %v1004
    %v1006 = vsel %vm1003, %v1005, %v1001
    %v1007 = vmul.f32 1.0, %v1006
    %v1008 = vrcp.pop %v524
    %v1009 = vmul.f32 %v524, %v1008
    %v1010 = vsub.f32 1.0, %v1009
    %v1011 = vmul.f32 %v1008, %v1010
    %v1012 = vadd.f32 %v1008, %v1011
    %vm1013 = vweird.f32 %v524
    %vm1014 = vweird.f32 %v1008
    %vm1015 = vmor %vm1013, %vm1014
    %v1016 = vsel %vm1015, %v1008, %v1012
    %v1017 = vand.u32 2147483647, %v524
    %vm1018 = vcmp.eq.f32.partialorder %v1017, 8.507059e+37
    %v1019 = vand.u32 %v524, 2147483648
    %v1020 = vor.u32 1.1754944e-38, %v1019
    %v1021 = vsel %vm1018, %v1020, %v1016
    %v1022 = vmul.f32 1.0, %v1021
    %v1023 = vrcp.pop %v525
    %v1024 = vmul.f32 %v525, %v1023
    %v1025 = vsub.f32 1.0, %v1024
    %v1026 = vmul.f32 %v1023, %v1025
    %v1027 = vadd.f32 %v1023, %v1026
    %vm1028 = vweird.f32 %v525
    %vm1029 = vweird.f32 %v1023
    %vm1030 = vmor %vm1028, %vm1029
    %v1031 = vsel %vm1030, %v1023, %v1027
    %v1032 = vand.u32 2147483647, %v525
    %vm1033 = vcmp.eq.f32.partialorder %v1032, 8.507059e+37
    %v1034 = vand.u32 %v525, 2147483648
    %v1035 = vor.u32 1.1754944e-38, %v1034
    %v1036 = vsel %vm1033, %v1035, %v1031
    %v1037 = vmul.f32 1.0, %v1036
    %v1038 = vrcp.pop %v526
    %v1039 = vmul.f32 %v526, %v1038
    %v1040 = vsub.f32 1.0, %v1039
    %v1041 = vmul.f32 %v1038, %v1040
    %v1042 = vadd.f32 %v1038, %v1041
    %vm1043 = vweird.f32 %v526
    %vm1044 = vweird.f32 %v1038
    %vm1045 = vmor %vm1043, %vm1044
    %v1046 = vsel %vm1045, %v1038, %v1042
    %v1047 = vand.u32 2147483647, %v526
    %vm1048 = vcmp.eq.f32.partialorder %v1047, 8.507059e+37
    %v1049 = vand.u32 %v526, 2147483648
    %v1050 = vor.u32 1.1754944e-38, %v1049
    %v1051 = vsel %vm1048, %v1050, %v1046
    %v1052 = vmul.f32 1.0, %v1051
    %v1053 = vrcp.pop %v527
    %v1054 = vmul.f32 %v527, %v1053
    %v1055 = vsub.f32 1.0, %v1054
    %v1056 = vmul.f32 %v1053, %v1055
    %v1057 = vadd.f32 %v1053, %v1056
    %vm1058 = vweird.f32 %v527
    %vm1059 = vweird.f32 %v1053
    %vm1060 = vmor %vm1058, %vm1059
    %v1061 = vsel %vm1060, %v1053, %v1057
    %v1062 = vand.u32 2147483647, %v527
    %vm1063 = vcmp.eq.f32.partialorder %v1062, 8.507059e+37
    %v1064 = vand.u32 %v527, 2147483648
    %v1065 = vor.u32 1.1754944e-38, %v1064
    %v1066 = vsel %vm1063, %v1065, %v1061
    %v1067 = vmul.f32 1.0, %v1066
    %v1068 = vrcp.pop %v528
    %v1069 = vmul.f32 %v528, %v1068
    %v1070 = vsub.f32 1.0, %v1069
    %v1071 = vmul.f32 %v1068, %v1070
    %v1072 = vadd.f32 %v1068, %v1071
    %vm1073 = vweird.f32 %v528
    %vm1074 = vweird.f32 %v1068
    %vm1075 = vmor %vm1073, %vm1074
    %v1076 = vsel %vm1075, %v1068, %v1072
    %v1077 = vand.u32 2147483647, %v528
    %vm1078 = vcmp.eq.f32.partialorder %v1077, 8.507059e+37
    %v1079 = vand.u32 %v528, 2147483648
    %v1080 = vor.u32 1.1754944e-38, %v1079
    %v1081 = vsel %vm1078, %v1080, %v1076
    %v1082 = vmul.f32 1.0, %v1081
    %v1083 = vrcp.pop %v529
    %v1084 = vmul.f32 %v529, %v1083
    %v1085 = vsub.f32 1.0, %v1084
    %v1086 = vmul.f32 %v1083, %v1085
    %v1087 = vadd.f32 %v1083, %v1086
    %vm1088 = vweird.f32 %v529
    %vm1089 = vweird.f32 %v1083
    %vm1090 = vmor %vm1088, %vm1089
    %v1091 = vsel %vm1090, %v1083, %v1087
    %v1092 = vand.u32 2147483647, %v529
    %vm1093 = vcmp.eq.f32.partialorder %v1092, 8.507059e+37
    %v1094 = vand.u32 %v529, 2147483648
    %v1095 = vor.u32 1.1754944e-38, %v1094
    %v1096 = vsel %vm1093, %v1095, %v1091
    %v1097 = vmul.f32 1.0, %v1096
    %v1098 = vrcp.pop %v530
    %v1099 = vmul.f32 %v530, %v1098
    %v1100 = vsub.f32 1.0, %v1099
    %v1101 = vmul.f32 %v1098, %v1100
    %v1102 = vadd.f32 %v1098, %v1101
    %vm1103 = vweird.f32 %v530
    %vm1104 = vweird.f32 %v1098
    %vm1105 = vmor %vm1103, %vm1104
    %v1106 = vsel %vm1105, %v1098, %v1102
    %v1107 = vand.u32 2147483647, %v530
    %vm1108 = vcmp.eq.f32.partialorder %v1107, 8.507059e+37
    %v1109 = vand.u32 %v530, 2147483648
    %v1110 = vor.u32 1.1754944e-38, %v1109
    %v1111 = vsel %vm1108, %v1110, %v1106
    %v1112 = vmul.f32 1.0, %v1111
    %v1113 = vrcp.pop %v531
    %v1114 = vmul.f32 %v531, %v1113
    %v1115 = vsub.f32 1.0, %v1114
    %v1116 = vmul.f32 %v1113, %v1115
    %v1117 = vadd.f32 %v1113, %v1116
    %vm1118 = vweird.f32 %v531
    %vm1119 = vweird.f32 %v1113
    %vm1120 = vmor %vm1118, %vm1119
    %v1121 = vsel %vm1120, %v1113, %v1117
    %v1122 = vand.u32 2147483647, %v531
    %vm1123 = vcmp.eq.f32.partialorder %v1122, 8.507059e+37
    %v1124 = vand.u32 %v531, 2147483648
    %v1125 = vor.u32 1.1754944e-38, %v1124
    %v1126 = vsel %vm1123, %v1125, %v1121
    %v1127 = vmul.f32 1.0, %v1126
    %v1128 = vrcp.pop %v532
    %v1129 = vmul.f32 %v532, %v1128
    %v1130 = vsub.f32 1.0, %v1129
    %v1131 = vmul.f32 %v1128, %v1130
    %v1132 = vadd.f32 %v1128, %v1131
    %vm1133 = vweird.f32 %v532
    %vm1134 = vweird.f32 %v1128
    %vm1135 = vmor %vm1133, %vm1134
    %v1136 = vsel %vm1135, %v1128, %v1132
    %v1137 = vand.u32 2147483647, %v532
    %vm1138 = vcmp.eq.f32.partialorder %v1137, 8.507059e+37
    %v1139 = vand.u32 %v532, 2147483648
    %v1140 = vor.u32 1.1754944e-38, %v1139
    %v1141 = vsel %vm1138, %v1140, %v1136
    %v1142 = vmul.f32 1.0, %v1141
    %v1143 = vrcp.pop %v533
    %v1144 = vmul.f32 %v533, %v1143
    %v1145 = vsub.f32 1.0, %v1144
    %v1146 = vmul.f32 %v1143, %v1145
    %v1147 = vadd.f32 %v1143, %v1146
    %vm1148 = vweird.f32 %v533
    %vm1149 = vweird.f32 %v1143
    %vm1150 = vmor %vm1148, %vm1149
    %v1151 = vsel %vm1150, %v1143, %v1147
    %v1152 = vand.u32 2147483647, %v533
    %vm1153 = vcmp.eq.f32.partialorder %v1152, 8.507059e+37
    %v1154 = vand.u32 %v533, 2147483648
    %v1155 = vor.u32 1.1754944e-38, %v1154
    %v1156 = vsel %vm1153, %v1155, %v1151
    %v1157 = vmul.f32 1.0, %v1156
    %v1158 = vrcp.pop %v534
    %v1159 = vmul.f32 %v534, %v1158
    %v1160 = vsub.f32 1.0, %v1159
    %v1161 = vmul.f32 %v1158, %v1160
    %v1162 = vadd.f32 %v1158, %v1161
    %vm1163 = vweird.f32 %v534
    %vm1164 = vweird.f32 %v1158
    %vm1165 = vmor %vm1163, %vm1164
    %v1166 = vsel %vm1165, %v1158, %v1162
    %v1167 = vand.u32 2147483647, %v534
    %vm1168 = vcmp.eq.f32.partialorder %v1167, 8.507059e+37
    %v1169 = vand.u32 %v534, 2147483648
    %v1170 = vor.u32 1.1754944e-38, %v1169
    %v1171 = vsel %vm1168, %v1170, %v1166
    %v1172 = vmul.f32 1.0, %v1171
    %v1173 = vrcp.pop %v535
    %v1174 = vmul.f32 %v535, %v1173
    %v1175 = vsub.f32 1.0, %v1174
    %v1176 = vmul.f32 %v1173, %v1175
    %v1177 = vadd.f32 %v1173, %v1176
    %vm1178 = vweird.f32 %v535
    %vm1179 = vweird.f32 %v1173
    %vm1180 = vmor %vm1178, %vm1179
    %v1181 = vsel %vm1180, %v1173, %v1177
    %v1182 = vand.u32 2147483647, %v535
    %vm1183 = vcmp.eq.f32.partialorder %v1182, 8.507059e+37
    %v1184 = vand.u32 %v535, 2147483648
    %v1185 = vor.u32 1.1754944e-38, %v1184
    %v1186 = vsel %vm1183, %v1185, %v1181
    %v1187 = vmul.f32 1.0, %v1186
    %v1188 = vrcp.pop %v536
    %v1189 = vmul.f32 %v536, %v1188
    %v1190 = vsub.f32 1.0, %v1189
    %v1191 = vmul.f32 %v1188, %v1190
    %v1192 = vadd.f32 %v1188, %v1191
    %vm1193 = vweird.f32 %v536
    %vm1194 = vweird.f32 %v1188
    %vm1195 = vmor %vm1193, %vm1194
    %v1196 = vsel %vm1195, %v1188, %v1192
    %v1197 = vand.u32 2147483647, %v536
    %vm1198 = vcmp.eq.f32.partialorder %v1197, 8.507059e+37
    %v1199 = vand.u32 %v536, 2147483648
    %v1200 = vor.u32 1.1754944e-38, %v1199
    %v1201 = vsel %vm1198, %v1200, %v1196
    %v1202 = vmul.f32 1.0, %v1201
    %v1203 = vrcp.pop %v537
    %v1204 = vmul.f32 %v537, %v1203
    %v1205 = vsub.f32 1.0, %v1204
    %v1206 = vmul.f32 %v1203, %v1205
    %v1207 = vadd.f32 %v1203, %v1206
    %vm1208 = vweird.f32 %v537
    %vm1209 = vweird.f32 %v1203
    %vm1210 = vmor %vm1208, %vm1209
    %v1211 = vsel %vm1210, %v1203, %v1207
    %v1212 = vand.u32 2147483647, %v537
    %vm1213 = vcmp.eq.f32.partialorder %v1212, 8.507059e+37
    %v1214 = vand.u32 %v537, 2147483648
    %v1215 = vor.u32 1.1754944e-38, %v1214
    %v1216 = vsel %vm1213, %v1215, %v1211
    %v1217 = vmul.f32 1.0, %v1216
    %v1218 = vrcp.pop %v538
    %v1219 = vmul.f32 %v538, %v1218
    %v1220 = vsub.f32 1.0, %v1219
    %v1221 = vmul.f32 %v1218, %v1220
    %v1222 = vadd.f32 %v1218, %v1221
    %vm1223 = vweird.f32 %v538
    %vm1224 = vweird.f32 %v1218
    %vm1225 = vmor %vm1223, %vm1224
    %v1226 = vsel %vm1225, %v1218, %v1222
    %v1227 = vand.u32 2147483647, %v538
    %vm1228 = vcmp.eq.f32.partialorder %v1227, 8.507059e+37
    %v1229 = vand.u32 %v538, 2147483648
    %v1230 = vor.u32 1.1754944e-38, %v1229
    %v1231 = vsel %vm1228, %v1230, %v1226
    %v1232 = vmul.f32 1.0, %v1231
    %v1233 = vrcp.pop %v539
    %v1234 = vmul.f32 %v539, %v1233
    %v1235 = vsub.f32 1.0, %v1234
    %v1236 = vmul.f32 %v1233, %v1235
    %v1237 = vadd.f32 %v1233, %v1236
    %vm1238 = vweird.f32 %v539
    %vm1239 = vweird.f32 %v1233
    %vm1240 = vmor %vm1238, %vm1239
    %v1241 = vsel %vm1240, %v1233, %v1237
    %v1242 = vand.u32 2147483647, %v539
    %vm1243 = vcmp.eq.f32.partialorder %v1242, 8.507059e+37
    %v1244 = vand.u32 %v539, 2147483648
    %v1245 = vor.u32 1.1754944e-38, %v1244
    %v1246 = vsel %vm1243, %v1245, %v1241
    %v1247 = vmul.f32 1.0, %v1246
    %v1248 = vrcp.pop %v540
    %v1249 = vmul.f32 %v540, %v1248
    %v1250 = vsub.f32 1.0, %v1249
    %v1251 = vmul.f32 %v1248, %v1250
    %v1252 = vadd.f32 %v1248, %v1251
    %vm1253 = vweird.f32 %v540
    %vm1254 = vweird.f32 %v1248
    %vm1255 = vmor %vm1253, %vm1254
    %v1256 = vsel %vm1255, %v1248, %v1252
    %v1257 = vand.u32 2147483647, %v540
    %vm1258 = vcmp.eq.f32.partialorder %v1257, 8.507059e+37
    %v1259 = vand.u32 %v540, 2147483648
    %v1260 = vor.u32 1.1754944e-38, %v1259
    %v1261 = vsel %vm1258, %v1260, %v1256
    %v1262 = vmul.f32 1.0, %v1261
    %v1263 = vrcp.pop %v541
    %v1264 = vmul.f32 %v541, %v1263
    %v1265 = vsub.f32 1.0, %v1264
    %v1266 = vmul.f32 %v1263, %v1265
    %v1267 = vadd.f32 %v1263, %v1266
    %vm1268 = vweird.f32 %v541
    %vm1269 = vweird.f32 %v1263
    %vm1270 = vmor %vm1268, %vm1269
    %v1271 = vsel %vm1270, %v1263, %v1267
    %v1272 = vand.u32 2147483647, %v541
    %vm1273 = vcmp.eq.f32.partialorder %v1272, 8.507059e+37
    %v1274 = vand.u32 %v541, 2147483648
    %v1275 = vor.u32 1.1754944e-38, %v1274
    %v1276 = vsel %vm1273, %v1275, %v1271
    %v1277 = vmul.f32 1.0, %v1276
    %v1278 = vrcp.pop %v542
    %v1279 = vmul.f32 %v542, %v1278
    %v1280 = vsub.f32 1.0, %v1279
    %v1281 = vmul.f32 %v1278, %v1280
    %v1282 = vadd.f32 %v1278, %v1281
    %vm1283 = vweird.f32 %v542
    %vm1284 = vweird.f32 %v1278
    %vm1285 = vmor %vm1283, %vm1284
    %v1286 = vsel %vm1285, %v1278, %v1282
    %v1287 = vand.u32 2147483647, %v542
    %vm1288 = vcmp.eq.f32.partialorder %v1287, 8.507059e+37
    %v1289 = vand.u32 %v542, 2147483648
    %v1290 = vor.u32 1.1754944e-38, %v1289
    %v1291 = vsel %vm1288, %v1290, %v1286
    %v1292 = vmul.f32 1.0, %v1291
    %v1293 = vrcp.pop %v543
    %v1294 = vmul.f32 %v543, %v1293
    %v1295 = vsub.f32 1.0, %v1294
    %v1296 = vmul.f32 %v1293, %v1295
    %v1297 = vadd.f32 %v1293, %v1296
    %vm1298 = vweird.f32 %v543
    %vm1299 = vweird.f32 %v1293
    %vm1300 = vmor %vm1298, %vm1299
    %v1301 = vsel %vm1300, %v1293, %v1297
    %v1302 = vand.u32 2147483647, %v543
    %vm1303 = vcmp.eq.f32.partialorder %v1302, 8.507059e+37
    %v1304 = vand.u32 %v543, 2147483648
    %v1305 = vor.u32 1.1754944e-38, %v1304
    %v1306 = vsel %vm1303, %v1305, %v1301
    %v1307 = vmul.f32 1.0, %v1306
    %v1308 = vrcp.pop %v544
    %v1309 = vmul.f32 %v544, %v1308
    %v1310 = vsub.f32 1.0, %v1309
    %v1311 = vmul.f32 %v1308, %v1310
    %v1312 = vadd.f32 %v1308, %v1311
    %vm1313 = vweird.f32 %v544
    %vm1314 = vweird.f32 %v1308
    %vm1315 = vmor %vm1313, %vm1314
    %v1316 = vsel %vm1315, %v1308, %v1312
    %v1317 = vand.u32 2147483647, %v544
    %vm1318 = vcmp.eq.f32.partialorder %v1317, 8.507059e+37
    %v1319 = vand.u32 %v544, 2147483648
    %v1320 = vor.u32 1.1754944e-38, %v1319
    %v1321 = vsel %vm1318, %v1320, %v1316
    %v1322 = vmul.f32 1.0, %v1321
    %v1323 = vrcp.pop %v545
    %v1324 = vmul.f32 %v545, %v1323
    %v1325 = vsub.f32 1.0, %v1324
    %v1326 = vmul.f32 %v1323, %v1325
    %v1327 = vadd.f32 %v1323, %v1326
    %vm1328 = vweird.f32 %v545
    %vm1329 = vweird.f32 %v1323
    %vm1330 = vmor %vm1328, %vm1329
    %v1331 = vsel %vm1330, %v1323, %v1327
    %v1332 = vand.u32 2147483647, %v545
    %vm1333 = vcmp.eq.f32.partialorder %v1332, 8.507059e+37
    %v1334 = vand.u32 %v545, 2147483648
    %v1335 = vor.u32 1.1754944e-38, %v1334
    %v1336 = vsel %vm1333, %v1335, %v1331
    %v1337 = vmul.f32 1.0, %v1336
    %v1338 = vrcp.pop %v546
    %v1339 = vmul.f32 %v546, %v1338
    %v1340 = vsub.f32 1.0, %v1339
    %v1341 = vmul.f32 %v1338, %v1340
    %v1342 = vadd.f32 %v1338, %v1341
    %vm1343 = vweird.f32 %v546
    %vm1344 = vweird.f32 %v1338
    %vm1345 = vmor %vm1343, %vm1344
    %v1346 = vsel %vm1345, %v1338, %v1342
    %v1347 = vand.u32 2147483647, %v546
    %vm1348 = vcmp.eq.f32.partialorder %v1347, 8.507059e+37
    %v1349 = vand.u32 %v546, 2147483648
    %v1350 = vor.u32 1.1754944e-38, %v1349
    %v1351 = vsel %vm1348, %v1350, %v1346
    %v1352 = vmul.f32 1.0, %v1351
    %v1353 = vrcp.pop %v547
    %v1354 = vmul.f32 %v547, %v1353
    %v1355 = vsub.f32 1.0, %v1354
    %v1356 = vmul.f32 %v1353, %v1355
    %v1357 = vadd.f32 %v1353, %v1356
    %vm1358 = vweird.f32 %v547
    %vm1359 = vweird.f32 %v1353
    %vm1360 = vmor %vm1358, %vm1359
    %v1361 = vsel %vm1360, %v1353, %v1357
    %v1362 = vand.u32 2147483647, %v547
    %vm1363 = vcmp.eq.f32.partialorder %v1362, 8.507059e+37
    %v1364 = vand.u32 %v547, 2147483648
    %v1365 = vor.u32 1.1754944e-38, %v1364
    %v1366 = vsel %vm1363, %v1365, %v1361
    %v1367 = vmul.f32 1.0, %v1366
    %v1368 = vrcp.pop %v548
    %v1369 = vmul.f32 %v548, %v1368
    %v1370 = vsub.f32 1.0, %v1369
    %v1371 = vmul.f32 %v1368, %v1370
    %v1372 = vadd.f32 %v1368, %v1371
    %vm1373 = vweird.f32 %v548
    %vm1374 = vweird.f32 %v1368
    %vm1375 = vmor %vm1373, %vm1374
    %v1376 = vsel %vm1375, %v1368, %v1372
    %v1377 = vand.u32 2147483647, %v548
    %vm1378 = vcmp.eq.f32.partialorder %v1377, 8.507059e+37
    %v1379 = vand.u32 %v548, 2147483648
    %v1380 = vor.u32 1.1754944e-38, %v1379
    %v1381 = vsel %vm1378, %v1380, %v1376
    %v1382 = vmul.f32 1.0, %v1381
    %v1383 = vrcp.pop %v549
    %v1384 = vmul.f32 %v549, %v1383
    %v1385 = vsub.f32 1.0, %v1384
    %v1386 = vmul.f32 %v1383, %v1385
    %v1387 = vadd.f32 %v1383, %v1386
    %vm1388 = vweird.f32 %v549
    %vm1389 = vweird.f32 %v1383
    %vm1390 = vmor %vm1388, %vm1389
    %v1391 = vsel %vm1390, %v1383, %v1387
    %v1392 = vand.u32 2147483647, %v549
    %vm1393 = vcmp.eq.f32.partialorder %v1392, 8.507059e+37
    %v1394 = vand.u32 %v549, 2147483648
    %v1395 = vor.u32 1.1754944e-38, %v1394
    %v1396 = vsel %vm1393, %v1395, %v1391
    %v1397 = vmul.f32 1.0, %v1396
    %v1398 = vrcp.pop %v550
    %v1399 = vmul.f32 %v550, %v1398
    %v1400 = vsub.f32 1.0, %v1399
    %v1401 = vmul.f32 %v1398, %v1400
    %v1402 = vadd.f32 %v1398, %v1401
    %vm1403 = vweird.f32 %v550
    %vm1404 = vweird.f32 %v1398
    %vm1405 = vmor %vm1403, %vm1404
    %v1406 = vsel %vm1405, %v1398, %v1402
    %v1407 = vand.u32 2147483647, %v550
    %vm1408 = vcmp.eq.f32.partialorder %v1407, 8.507059e+37
    %v1409 = vand.u32 %v550, 2147483648
    %v1410 = vor.u32 1.1754944e-38, %v1409
    %v1411 = vsel %vm1408, %v1410, %v1406
    %v1412 = vmul.f32 1.0, %v1411
    %v1413 = vrcp.pop %v551
    %v1414 = vmul.f32 %v551, %v1413
    %v1415 = vsub.f32 1.0, %v1414
    %v1416 = vmul.f32 %v1413, %v1415
    %v1417 = vadd.f32 %v1413, %v1416
    %vm1418 = vweird.f32 %v551
    %vm1419 = vweird.f32 %v1413
    %vm1420 = vmor %vm1418, %vm1419
    %v1421 = vsel %vm1420, %v1413, %v1417
    %v1422 = vand.u32 2147483647, %v551
    %vm1423 = vcmp.eq.f32.partialorder %v1422, 8.507059e+37
    %v1424 = vand.u32 %v551, 2147483648
    %v1425 = vor.u32 1.1754944e-38, %v1424
    %v1426 = vsel %vm1423, %v1425, %v1421
    %v1427 = vmul.f32 1.0, %v1426
    %v1428 = vrcp.pop %v552
    %v1429 = vmul.f32 %v552, %v1428
    %v1430 = vsub.f32 1.0, %v1429
    %v1431 = vmul.f32 %v1428, %v1430
    %v1432 = vadd.f32 %v1428, %v1431
    %vm1433 = vweird.f32 %v552
    %vm1434 = vweird.f32 %v1428
    %vm1435 = vmor %vm1433, %vm1434
    %v1436 = vsel %vm1435, %v1428, %v1432
    %v1437 = vand.u32 2147483647, %v552
    %vm1438 = vcmp.eq.f32.partialorder %v1437, 8.507059e+37
    %v1439 = vand.u32 %v552, 2147483648
    %v1440 = vor.u32 1.1754944e-38, %v1439
    %v1441 = vsel %vm1438, %v1440, %v1436
    %v1442 = vmul.f32 1.0, %v1441
    %v1443 = vrcp.pop %v553
    %v1444 = vmul.f32 %v553, %v1443
    %v1445 = vsub.f32 1.0, %v1444
    %v1446 = vmul.f32 %v1443, %v1445
    %v1447 = vadd.f32 %v1443, %v1446
    %vm1448 = vweird.f32 %v553
    %vm1449 = vweird.f32 %v1443
    %vm1450 = vmor %vm1448, %vm1449
    %v1451 = vsel %vm1450, %v1443, %v1447
    %v1452 = vand.u32 2147483647, %v553
    %vm1453 = vcmp.eq.f32.partialorder %v1452, 8.507059e+37
    %v1454 = vand.u32 %v553, 2147483648
    %v1455 = vor.u32 1.1754944e-38, %v1454
    %v1456 = vsel %vm1453, %v1455, %v1451
    %v1457 = vmul.f32 1.0, %v1456
    %v1458 = vrcp.pop %v554
    %v1459 = vmul.f32 %v554, %v1458
    %v1460 = vsub.f32 1.0, %v1459
    %v1461 = vmul.f32 %v1458, %v1460
    %v1462 = vadd.f32 %v1458, %v1461
    %vm1463 = vweird.f32 %v554
    %vm1464 = vweird.f32 %v1458
    %vm1465 = vmor %vm1463, %vm1464
    %v1466 = vsel %vm1465, %v1458, %v1462
    %v1467 = vand.u32 2147483647, %v554
    %vm1468 = vcmp.eq.f32.partialorder %v1467, 8.507059e+37
    %v1469 = vand.u32 %v554, 2147483648
    %v1470 = vor.u32 1.1754944e-38, %v1469
    %v1471 = vsel %vm1468, %v1470, %v1466
    %v1472 = vmul.f32 1.0, %v1471
    %v1473 = vrcp.pop %v555
    %v1474 = vmul.f32 %v555, %v1473
    %v1475 = vsub.f32 1.0, %v1474
    %v1476 = vmul.f32 %v1473, %v1475
    %v1477 = vadd.f32 %v1473, %v1476
    %vm1478 = vweird.f32 %v555
    %vm1479 = vweird.f32 %v1473
    %vm1480 = vmor %vm1478, %vm1479
    %v1481 = vsel %vm1480, %v1473, %v1477
    %v1482 = vand.u32 2147483647, %v555
    %vm1483 = vcmp.eq.f32.partialorder %v1482, 8.507059e+37
    %v1484 = vand.u32 %v555, 2147483648
    %v1485 = vor.u32 1.1754944e-38, %v1484
    %v1486 = vsel %vm1483, %v1485, %v1481
    %v1487 = vmul.f32 1.0, %v1486
    %v1488 = vrcp.pop %v556
    %v1489 = vmul.f32 %v556, %v1488
    %v1490 = vsub.f32 1.0, %v1489
    %v1491 = vmul.f32 %v1488, %v1490
    %v1492 = vadd.f32 %v1488, %v1491
    %vm1493 = vweird.f32 %v556
    %vm1494 = vweird.f32 %v1488
    %vm1495 = vmor %vm1493, %vm1494
    %v1496 = vsel %vm1495, %v1488, %v1492
    %v1497 = vand.u32 2147483647, %v556
    %vm1498 = vcmp.eq.f32.partialorder %v1497, 8.507059e+37
    %v1499 = vand.u32 %v556, 2147483648
    %v1500 = vor.u32 1.1754944e-38, %v1499
    %v1501 = vsel %vm1498, %v1500, %v1496
    %v1502 = vmul.f32 1.0, %v1501
    %v1503 = vrcp.pop %v557
    %v1504 = vmul.f32 %v557, %v1503
    %v1505 = vsub.f32 1.0, %v1504
    %v1506 = vmul.f32 %v1503, %v1505
    %v1507 = vadd.f32 %v1503, %v1506
    %vm1508 = vweird.f32 %v557
    %vm1509 = vweird.f32 %v1503
    %vm1510 = vmor %vm1508, %vm1509
    %v1511 = vsel %vm1510, %v1503, %v1507
    %v1512 = vand.u32 2147483647, %v557
    %vm1513 = vcmp.eq.f32.partialorder %v1512, 8.507059e+37
    %v1514 = vand.u32 %v557, 2147483648
    %v1515 = vor.u32 1.1754944e-38, %v1514
    %v1516 = vsel %vm1513, %v1515, %v1511
    %v1517 = vmul.f32 1.0, %v1516
    %1518 = vst [vmem:[#allocation2] sm:$0xff] %v572
    %1519 = vst [vmem:[#allocation2 + $0x8] sm:$0xff] %v587
    %1520 = vst [vmem:[#allocation2 + $0x10] sm:$0xff] %v602
    %1521 = vst [vmem:[#allocation2 + $0x18] sm:$0xff] %v617
    %1522 = vst [vmem:[#allocation2 + $0x20] sm:$0xff] %v632
    %1523 = vst [vmem:[#allocation2 + $0x28] sm:$0xff] %v647
    %1524 = vst [vmem:[#allocation2 + $0x30] sm:$0xff] %v662
    %1525 = vst [vmem:[#allocation2 + $0x38] sm:$0xff] %v677
    %1526 = vst [vmem:[#allocation2 + $0x40] sm:$0xff] %v692
    %1527 = vst [vmem:[#allocation2 + $0x48] sm:$0xff] %v707
    %1528 = vst [vmem:[#allocation2 + $0x50] sm:$0xff] %v722
    %1529 = vst [vmem:[#allocation2 + $0x58] sm:$0xff] %v737
    %1530 = vst [vmem:[#allocation2 + $0x60] sm:$0xff] %v752
    %1531 = vst [vmem:[#allocation2 + $0x68] sm:$0xff] %v767
    %1532 = vst [vmem:[#allocation2 + $0x70] sm:$0xff] %v782
    %1533 = vst [vmem:[#allocation2 + $0x78] sm:$0xff] %v797
    %1534 = vst [vmem:[#allocation2 + $0x80] sm:$0xff] %v812
    %1535 = vst [vmem:[#allocation2 + $0x88] sm:$0xff] %v827
    %1536 = vst [vmem:[#allocation2 + $0x90] sm:$0xff] %v842
    %1537 = vst [vmem:[#allocation2 + $0x98] sm:$0xff] %v857
    %1538 = vst [vmem:[#allocation2 + $0xa0] sm:$0xff] %v872
    %1539 = vst [vmem:[#allocation2 + $0xa8] sm:$0xff] %v887
    %1540 = vst [vmem:[#allocation2 + $0xb0] sm:$0xff] %v902
    %1541 = vst [vmem:[#allocation2 + $0xb8] sm:$0xff] %v917
    %1542 = vst [vmem:[#allocation2 + $0xc0] sm:$0xff] %v932
    %1543 = vst [vmem:[#allocation2 + $0xc8] sm:$0xff] %v947
    %1544 = vst [vmem:[#allocation2 + $0xd0] sm:$0xff] %v962
    %1545 = vst [vmem:[#allocation2 + $0xd8] sm:$0xff] %v977
    %1546 = vst [vmem:[#allocation2 + $0xe0] sm:$0xff] %v992
    %1547 = vst [vmem:[#allocation2 + $0xe8] sm:$0xff] %v1007
    %1548 = vst [vmem:[#allocation2 + $0xf0] sm:$0xff] %v1022
    %1549 = vst [vmem:[#allocation2 + $0xf8] sm:$0xff] %v1037
    %1550 = vst [vmem:[#allocation2 + $0x100] sm:$0xff] %v1052
    %1551 = vst [vmem:[#allocation2 + $0x108] sm:$0xff] %v1067
    %1552 = vst [vmem:[#allocation2 + $0x110] sm:$0xff] %v1082
    %1553 = vst [vmem:[#allocation2 + $0x118] sm:$0xff] %v1097
    %1554 = vst [vmem:[#allocation2 + $0x120] sm:$0xff] %v1112
    %1555 = vst [vmem:[#allocation2 + $0x128] sm:$0xff] %v1127
    %1556 = vst [vmem:[#allocation2 + $0x130] sm:$0xff] %v1142
    %1557 = vst [vmem:[#allocation2 + $0x138] sm:$0xff] %v1157
    %1558 = vst [vmem:[#allocation2 + $0x140] sm:$0xff] %v1172
    %1559 = vst [vmem:[#allocation2 + $0x148] sm:$0xff] %v1187
    %1560 = vst [vmem:[#allocation2 + $0x150] sm:$0xff] %v1202
    %1561 = vst [vmem:[#allocation2 + $0x158] sm:$0xff] %v1217
    %1562 = vst [vmem:[#allocation2 + $0x160] sm:$0xff] %v1232
    %1563 = vst [vmem:[#allocation2 + $0x168] sm:$0xff] %v1247
    %1564 = vst [vmem:[#allocation2 + $0x170] sm:$0xff] %v1262
    %1565 = vst [vmem:[#allocation2 + $0x178] sm:$0xff] %v1277
    %1566 = vst [vmem:[#allocation2 + $0x180] sm:$0xff] %v1292
    %1567 = vst [vmem:[#allocation2 + $0x188] sm:$0xff] %v1307
    %1568 = vst [vmem:[#allocation2 + $0x190] sm:$0xff] %v1322
    %1569 = vst [vmem:[#allocation2 + $0x198] sm:$0xff] %v1337
    %1570 = vst [vmem:[#allocation2 + $0x1a0] sm:$0xff] %v1352
    %1571 = vst [vmem:[#allocation2 + $0x1a8] sm:$0xff] %v1367
    %1572 = vst [vmem:[#allocation2 + $0x1b0] sm:$0xff] %v1382
    %1573 = vst [vmem:[#allocation2 + $0x1b8] sm:$0xff] %v1397
    %1574 = vst [vmem:[#allocation2 + $0x1c0] sm:$0xff] %v1412
    %1575 = vst [vmem:[#allocation2 + $0x1c8] sm:$0xff] %v1427
    %1576 = vst [vmem:[#allocation2 + $0x1d0] sm:$0xff] %v1442
    %1577 = vst [vmem:[#allocation2 + $0x1d8] sm:$0xff] %v1457
    %1578 = vst [vmem:[#allocation2 + $0x1e0] sm:$0xff] %v1472
    %1579 = vst [vmem:[#allocation2 + $0x1e8] sm:$0xff] %v1487
    %1580 = vst [vmem:[#allocation2 + $0x1f0] sm:$0xff] %v1502
    %1581 = vst [vmem:[#allocation2 + $0x1f8] sm:$0xff] %v1517
    // Predicated region
    $region10: #{improved_gae_forward.9} parent=1 // pred_check
      _
    $region11: #{improved_gae_forward.9} parent=1 // pred_check_branch
      %1583 = sbr.rel (0) target = $region13
    $region12: #{improved_gae_forward.9} parent=1 // pred_region
      %1585 = vsyncadd [#allocation3], 0
      %s1586 = sshll.u32 [#allocation2], 4
      %s1587 = int_to_ptr.vmem [resolvable:$true] %s1586
      %s1588 = sshll.u32 %s2, 4
      %s1589 = int_to_ptr.hbm [resolvable:$true] %s1588
      %1594 = dma.vmem_to_hbm [thread:$0]  %s1587, 8192, %s1589, [#allocation3], 256, 256, 16
    $region13: #{improved_gae_forward.9} parent=1 // pred_fallthru
      _
    // Predicated region
    $region14: #{improved_gae_forward.9} parent=1 // pred_check
      _
    $region15: #{improved_gae_forward.9} parent=1 // pred_check_branch
      %1596 = sbr.rel (0) target = $region17
    $region16: #{improved_gae_forward.9} parent=1 // pred_region
      %1598 = dma.done [#allocation3], 8192
    $region17: #{improved_gae_forward.9} parent=1 // pred_fallthru
      _
    %1599 = vsyncpa [#allocation3], 1

// kernel: improved_gae_forward.6
$region0: #{improved_gae_forward.6}
  #allocation0 [shape = 'u32[]', space=smem, size = 0x4, offset = 0x4, fixed_abs, tag = 'smem constant byte address 0x4 - core index']
  #allocation1 [shape = 'u32[72,128]{1,0:T(1,128)}', space=vmem, size = 0x9000, scoped, tag = 'internal scratch']
  #allocation2 [shape = 'f32[256,128]{1,0:T(8,128)}', space=vmem, size = 0x20000, scoped, tag = 'scratch operand']
  %s0 = inlined_call_operand.vmem [shape: f32[256,256], index: 0, kind: input, shape index: {}]
  %s1 = inlined_call_operand.vmem [shape: f32[256,256], index: 1, kind: input, shape index: {}, may-alias: {1,2}]
  %s2 = inlined_call_operand.vmem [shape: f32[256,256], index: 2, kind: input, shape index: {}, may-alias: {1,2}]
  %s3 = inlined_call_operand.vmem [shape: f32[1,128], index: 3, kind: input, shape index: {}]
  %s4 = inlined_call_operand.vmem [shape: f32[1,128], index: 4, kind: input, shape index: {}]
  %s5 = inlined_call_operand.vmem [shape: f32[1,128], index: 5, kind: input, shape index: {}]
  %s6 = inlined_call_operand.vmem [shape: f32[128,256], index: 6, kind: input, shape index: {}]
  %s7 = inlined_call_operand.vmem [shape: f32[256,256], index: 7, kind: output, shape index: {}]
  %s8 = sld [smem:[#allocation0]]
  $region122: #{improved_gae_forward.6} parent=0
    _
  %s10 = ssub.s32 1, %s8
  %s11 = scalar_select 0, %s10, %s8
  $region1: #{improved_gae_forward.6} parent=0
    #allocation3 [shape = 'u8[131072]{0}', space=vmem, size = 0x20000, scoped, tag = 'input window, operand 1, single buffered']
    #allocation4 [shape = 'u8[131072]{0}', space=vmem, size = 0x20000, scoped, tag = 'input window, operand 2, single buffered']
    // Predicated region
    $region2: #{improved_gae_forward.6} parent=1 // pred_check
      _
    $region3: #{improved_gae_forward.6} parent=1 // pred_check_branch
      %13 = sbr.rel (0) target = $region5
    $region4: #{improved_gae_forward.6} parent=1 // pred_region
      _
    $region5: #{improved_gae_forward.6} parent=1 // pred_fallthru
      _
    // Predicated region
    $region6: #{improved_gae_forward.6} parent=1 // pred_check
      _
    $region7: #{improved_gae_forward.6} parent=1 // pred_check_branch
      %15 = sbr.rel (0) target = $region9
    $region8: #{improved_gae_forward.6} parent=1 // pred_region
      // Predicated region
      $region10: #{improved_gae_forward.6} parent=8 // pred_check
        _
      $region11: #{improved_gae_forward.6} parent=8 // pred_check_branch
        %17 = sbr.rel (0) target = $region13
      $region12: #{improved_gae_forward.6} parent=8 // pred_region
        // Predicated region
        $region14: #{improved_gae_forward.6} parent=12 // pred_check
          _
        $region15: #{improved_gae_forward.6} parent=12 // pred_check_branch
          %19 = sbr.rel (0) target = $region17
        $region16: #{improved_gae_forward.6} parent=12 // pred_region
          // Predicated region
          $region29: #{improved_gae_forward.6} parent=16 // pred_check
            _
          $region30: #{improved_gae_forward.6} parent=16 // pred_check_branch
            %97 = sbr.rel (0) target = $region32
          $region31: #{improved_gae_forward.6} parent=16 // pred_region
            loop: start=0, step=1, limit=1
            $region33: #{improved_gae_forward.6} parent=31 // loop_pre_header
              _
            $region34: #{improved_gae_forward.6} parent=31 // loop_header
              %s99 = sphi 0, %s103
              %p100 = scmp.ge.s32.totalorder %s99, 1
              %s104 = sphi %s1, %s1
              %s105 = sphi [#allocation3], [#allocation3]
            $region35: #{improved_gae_forward.6} parent=31 // loop_header_branch
              %102 = sbr.rel (%p100) target = $region39
            $region36: #{improved_gae_forward.6} parent=31 // loop_body
              %v106 = vld [vmem:[%s104] sm:$0xff]
              %107 = vst [vmem:[%s105] sm:$0xff] %v106
              %v108 = vld [vmem:[%s104 + $0x10] sm:$0xff]
              %109 = vst [vmem:[%s105 + $0x8] sm:$0xff] %v108
              %v110 = vld [vmem:[%s104 + $0x20] sm:$0xff]
              %111 = vst [vmem:[%s105 + $0x10] sm:$0xff] %v110
              %v112 = vld [vmem:[%s104 + $0x30] sm:$0xff]
              %113 = vst [vmem:[%s105 + $0x18] sm:$0xff] %v112
              %v114 = vld [vmem:[%s104 + $0x40] sm:$0xff]
              %115 = vst [vmem:[%s105 + $0x20] sm:$0xff] %v114
              %v116 = vld [vmem:[%s104 + $0x50] sm:$0xff]
              %117 = vst [vmem:[%s105 + $0x28] sm:$0xff] %v116
              %v118 = vld [vmem:[%s104 + $0x60] sm:$0xff]
              %119 = vst [vmem:[%s105 + $0x30] sm:$0xff] %v118
              %v120 = vld [vmem:[%s104 + $0x70] sm:$0xff]
              %121 = vst [vmem:[%s105 + $0x38] sm:$0xff] %v120
              %v122 = vld [vmem:[%s104 + $0x80] sm:$0xff]
              %123 = vst [vmem:[%s105 + $0x40] sm:$0xff] %v122
              %v124 = vld [vmem:[%s104 + $0x90] sm:$0xff]
              %125 = vst [vmem:[%s105 + $0x48] sm:$0xff] %v124
              %v126 = vld [vmem:[%s104 + $0xa0] sm:$0xff]
              %127 = vst [vmem:[%s105 + $0x50] sm:$0xff] %v126
              %v128 = vld [vmem:[%s104 + $0xb0] sm:$0xff]
              %129 = vst [vmem:[%s105 + $0x58] sm:$0xff] %v128
              %v130 = vld [vmem:[%s104 + $0xc0] sm:$0xff]
              %131 = vst [vmem:[%s105 + $0x60] sm:$0xff] %v130
              %v132 = vld [vmem:[%s104 + $0xd0] sm:$0xff]
              %133 = vst [vmem:[%s105 + $0x68] sm:$0xff] %v132
              %v134 = vld [vmem:[%s104 + $0xe0] sm:$0xff]
              %135 = vst [vmem:[%s105 + $0x70] sm:$0xff] %v134
              %v136 = vld [vmem:[%s104 + $0xf0] sm:$0xff]
              %137 = vst [vmem:[%s105 + $0x78] sm:$0xff] %v136
              %v138 = vld [vmem:[%s104 + $0x100] sm:$0xff]
              %139 = vst [vmem:[%s105 + $0x80] sm:$0xff] %v138
              %v140 = vld [vmem:[%s104 + $0x110] sm:$0xff]
              %141 = vst [vmem:[%s105 + $0x88] sm:$0xff] %v140
              %v142 = vld [vmem:[%s104 + $0x120] sm:$0xff]
              %143 = vst [vmem:[%s105 + $0x90] sm:$0xff] %v142
              %v144 = vld [vmem:[%s104 + $0x130] sm:$0xff]
              %145 = vst [vmem:[%s105 + $0x98] sm:$0xff] %v144
              %v146 = vld [vmem:[%s104 + $0x140] sm:$0xff]
              %147 = vst [vmem:[%s105 + $0xa0] sm:$0xff] %v146
              %v148 = vld [vmem:[%s104 + $0x150] sm:$0xff]
              %149 = vst [vmem:[%s105 + $0xa8] sm:$0xff] %v148
              %v150 = vld [vmem:[%s104 + $0x160] sm:$0xff]
              %151 = vst [vmem:[%s105 + $0xb0] sm:$0xff] %v150
              %v152 = vld [vmem:[%s104 + $0x170] sm:$0xff]
              %153 = vst [vmem:[%s105 + $0xb8] sm:$0xff] %v152
              %v154 = vld [vmem:[%s104 + $0x180] sm:$0xff]
              %155 = vst [vmem:[%s105 + $0xc0] sm:$0xff] %v154
              %v156 = vld [vmem:[%s104 + $0x190] sm:$0xff]
              %157 = vst [vmem:[%s105 + $0xc8] sm:$0xff] %v156
              %v158 = vld [vmem:[%s104 + $0x1a0] sm:$0xff]
              %159 = vst [vmem:[%s105 + $0xd0] sm:$0xff] %v158
              %v160 = vld [vmem:[%s104 + $0x1b0] sm:$0xff]
              %161 = vst [vmem:[%s105 + $0xd8] sm:$0xff] %v160
              %v162 = vld [vmem:[%s104 + $0x1c0] sm:$0xff]
              %163 = vst [vmem:[%s105 + $0xe0] sm:$0xff] %v162
              %v164 = vld [vmem:[%s104 + $0x1d0] sm:$0xff]
              %165 = vst [vmem:[%s105 + $0xe8] sm:$0xff] %v164
              %v166 = vld [vmem:[%s104 + $0x1e0] sm:$0xff]
              %167 = vst [vmem:[%s105 + $0xf0] sm:$0xff] %v166
              %v168 = vld [vmem:[%s104 + $0x1f0] sm:$0xff]
              %169 = vst [vmem:[%s105 + $0xf8] sm:$0xff] %v168
            $region37: #{improved_gae_forward.6} parent=31 // loop_footer
              %s103 = sadd.s32 1, %s99
            $region38: #{improved_gae_forward.6} parent=31 // loop_footer_branch
              %98 = sbr.rel target = $region34
            $region39: #{improved_gae_forward.6} parent=31 // loop_exit
              _
          $region32: #{improved_gae_forward.6} parent=16 // pred_fallthru
            _
          // Predicated region
          $region40: #{improved_gae_forward.6} parent=16 // pred_check
            _
          $region41: #{improved_gae_forward.6} parent=16 // pred_check_branch
            %171 = sbr.rel target = $region43
          $region42: #{improved_gae_forward.6} parent=16 // pred_region
            _
          $region43: #{improved_gae_forward.6} parent=16 // pred_fallthru
            _
        $region17: #{improved_gae_forward.6} parent=12 // pred_fallthru
          _
        // Predicated region
        $region18: #{improved_gae_forward.6} parent=12 // pred_check
          _
        $region19: #{improved_gae_forward.6} parent=12 // pred_check_branch
          %21 = sbr.rel target = $region21
        $region20: #{improved_gae_forward.6} parent=12 // pred_region
          %s23 = ssub.s32 256, 1
          loop: start=0, step=1, limit=1
          $region22: #{improved_gae_forward.6} parent=20 // loop_pre_header
            _
          $region23: #{improved_gae_forward.6} parent=20 // loop_header
            %s25 = sphi 0, %s29
            %p26 = scmp.ge.s32.totalorder %s25, 1
            %s30 = sphi %s1, %s1
            %s31 = sphi [#allocation3], [#allocation3]
          $region24: #{improved_gae_forward.6} parent=20 // loop_header_branch
            %28 = sbr.rel (%p26) target = $region28
          $region25: #{improved_gae_forward.6} parent=20 // loop_body
            %v32 = vld [vmem:[%s30] sm:%s23]
            %33 = vst [vmem:[%s31] sm:%s23] %v32
            %v34 = vld [vmem:[%s30 + $0x10] sm:%s23]
            %35 = vst [vmem:[%s31 + $0x8] sm:%s23] %v34
            %v36 = vld [vmem:[%s30 + $0x20] sm:%s23]
            %37 = vst [vmem:[%s31 + $0x10] sm:%s23] %v36
            %v38 = vld [vmem:[%s30 + $0x30] sm:%s23]
            %39 = vst [vmem:[%s31 + $0x18] sm:%s23] %v38
            %v40 = vld [vmem:[%s30 + $0x40] sm:%s23]
            %41 = vst [vmem:[%s31 + $0x20] sm:%s23] %v40
            %v42 = vld [vmem:[%s30 + $0x50] sm:%s23]
            %43 = vst [vmem:[%s31 + $0x28] sm:%s23] %v42
            %v44 = vld [vmem:[%s30 + $0x60] sm:%s23]
            %45 = vst [vmem:[%s31 + $0x30] sm:%s23] %v44
            %v46 = vld [vmem:[%s30 + $0x70] sm:%s23]
            %47 = vst [vmem:[%s31 + $0x38] sm:%s23] %v46
            %v48 = vld [vmem:[%s30 + $0x80] sm:%s23]
            %49 = vst [vmem:[%s31 + $0x40] sm:%s23] %v48
            %v50 = vld [vmem:[%s30 + $0x90] sm:%s23]
            %51 = vst [vmem:[%s31 + $0x48] sm:%s23] %v50
            %v52 = vld [vmem:[%s30 + $0xa0] sm:%s23]
            %53 = vst [vmem:[%s31 + $0x50] sm:%s23] %v52
            %v54 = vld [vmem:[%s30 + $0xb0] sm:%s23]
            %55 = vst [vmem:[%s31 + $0x58] sm:%s23] %v54
            %v56 = vld [vmem:[%s30 + $0xc0] sm:%s23]
            %57 = vst [vmem:[%s31 + $0x60] sm:%s23] %v56
            %v58 = vld [vmem:[%s30 + $0xd0] sm:%s23]
            %59 = vst [vmem:[%s31 + $0x68] sm:%s23] %v58
            %v60 = vld [vmem:[%s30 + $0xe0] sm:%s23]
            %61 = vst [vmem:[%s31 + $0x70] sm:%s23] %v60
            %v62 = vld [vmem:[%s30 + $0xf0] sm:%s23]
            %63 = vst [vmem:[%s31 + $0x78] sm:%s23] %v62
            %v64 = vld [vmem:[%s30 + $0x100] sm:%s23]
            %65 = vst [vmem:[%s31 + $0x80] sm:%s23] %v64
            %v66 = vld [vmem:[%s30 + $0x110] sm:%s23]
            %67 = vst [vmem:[%s31 + $0x88] sm:%s23] %v66
            %v68 = vld [vmem:[%s30 + $0x120] sm:%s23]
            %69 = vst [vmem:[%s31 + $0x90] sm:%s23] %v68
            %v70 = vld [vmem:[%s30 + $0x130] sm:%s23]
            %71 = vst [vmem:[%s31 + $0x98] sm:%s23] %v70
            %v72 = vld [vmem:[%s30 + $0x140] sm:%s23]
            %73 = vst [vmem:[%s31 + $0xa0] sm:%s23] %v72
            %v74 = vld [vmem:[%s30 + $0x150] sm:%s23]
            %75 = vst [vmem:[%s31 + $0xa8] sm:%s23] %v74
            %v76 = vld [vmem:[%s30 + $0x160] sm:%s23]
            %77 = vst [vmem:[%s31 + $0xb0] sm:%s23] %v76
            %v78 = vld [vmem:[%s30 + $0x170] sm:%s23]
            %79 = vst [vmem:[%s31 + $0xb8] sm:%s23] %v78
            %v80 = vld [vmem:[%s30 + $0x180] sm:%s23]
            %81 = vst [vmem:[%s31 + $0xc0] sm:%s23] %v80
            %v82 = vld [vmem:[%s30 + $0x190] sm:%s23]
            %83 = vst [vmem:[%s31 + $0xc8] sm:%s23] %v82
            %v84 = vld [vmem:[%s30 + $0x1a0] sm:%s23]
            %85 = vst [vmem:[%s31 + $0xd0] sm:%s23] %v84
            %v86 = vld [vmem:[%s30 + $0x1b0] sm:%s23]
            %87 = vst [vmem:[%s31 + $0xd8] sm:%s23] %v86
            %v88 = vld [vmem:[%s30 + $0x1c0] sm:%s23]
            %89 = vst [vmem:[%s31 + $0xe0] sm:%s23] %v88
            %v90 = vld [vmem:[%s30 + $0x1d0] sm:%s23]
            %91 = vst [vmem:[%s31 + $0xe8] sm:%s23] %v90
            %v92 = vld [vmem:[%s30 + $0x1e0] sm:%s23]
            %93 = vst [vmem:[%s31 + $0xf0] sm:%s23] %v92
            %v94 = vld [vmem:[%s30 + $0x1f0] sm:%s23]
            %95 = vst [vmem:[%s31 + $0xf8] sm:%s23] %v94
          $region26: #{improved_gae_forward.6} parent=20 // loop_footer
            %s29 = sadd.s32 1, %s25
          $region27: #{improved_gae_forward.6} parent=20 // loop_footer_branch
            %24 = sbr.rel target = $region23
          $region28: #{improved_gae_forward.6} parent=20 // loop_exit
            _
        $region21: #{improved_gae_forward.6} parent=12 // pred_fallthru
          _
      $region13: #{improved_gae_forward.6} parent=8 // pred_fallthru
        _
      %172 = vnop
    $region9: #{improved_gae_forward.6} parent=1 // pred_fallthru
      _
    // Predicated region
    $region44: #{improved_gae_forward.6} parent=1 // pred_check
      _
    $region45: #{improved_gae_forward.6} parent=1 // pred_check_branch
      %174 = sbr.rel (0) target = $region47
    $region46: #{improved_gae_forward.6} parent=1 // pred_region
      %s175 = scalar_lea.vmem %s2, 8
      // Predicated region
      $region48: #{improved_gae_forward.6} parent=46 // pred_check
        _
      $region49: #{improved_gae_forward.6} parent=46 // pred_check_branch
        %177 = sbr.rel (0) target = $region51
      $region50: #{improved_gae_forward.6} parent=46 // pred_region
        // Predicated region
        $region52: #{improved_gae_forward.6} parent=50 // pred_check
          _
        $region53: #{improved_gae_forward.6} parent=50 // pred_check_branch
          %179 = sbr.rel (0) target = $region55
        $region54: #{improved_gae_forward.6} parent=50 // pred_region
          // Predicated region
          $region67: #{improved_gae_forward.6} parent=54 // pred_check
            _
          $region68: #{improved_gae_forward.6} parent=54 // pred_check_branch
            %257 = sbr.rel (0) target = $region70
          $region69: #{improved_gae_forward.6} parent=54 // pred_region
            loop: start=0, step=1, limit=1
            $region71: #{improved_gae_forward.6} parent=69 // loop_pre_header
              _
            $region72: #{improved_gae_forward.6} parent=69 // loop_header
              %s259 = sphi 0, %s263
              %p260 = scmp.ge.s32.totalorder %s259, 1
              %s264 = sphi %s175, %s175
              %s265 = sphi [#allocation4], [#allocation4]
            $region73: #{improved_gae_forward.6} parent=69 // loop_header_branch
              %262 = sbr.rel (%p260) target = $region77
            $region74: #{improved_gae_forward.6} parent=69 // loop_body
              %v266 = vld [vmem:[%s264] sm:$0xff]
              %267 = vst [vmem:[%s265] sm:$0xff] %v266
              %v268 = vld [vmem:[%s264 + $0x10] sm:$0xff]
              %269 = vst [vmem:[%s265 + $0x8] sm:$0xff] %v268
              %v270 = vld [vmem:[%s264 + $0x20] sm:$0xff]
              %271 = vst [vmem:[%s265 + $0x10] sm:$0xff] %v270
              %v272 = vld [vmem:[%s264 + $0x30] sm:$0xff]
              %273 = vst [vmem:[%s265 + $0x18] sm:$0xff] %v272
              %v274 = vld [vmem:[%s264 + $0x40] sm:$0xff]
              %275 = vst [vmem:[%s265 + $0x20] sm:$0xff] %v274
              %v276 = vld [vmem:[%s264 + $0x50] sm:$0xff]
              %277 = vst [vmem:[%s265 + $0x28] sm:$0xff] %v276
              %v278 = vld [vmem:[%s264 + $0x60] sm:$0xff]
              %279 = vst [vmem:[%s265 + $0x30] sm:$0xff] %v278
              %v280 = vld [vmem:[%s264 + $0x70] sm:$0xff]
              %281 = vst [vmem:[%s265 + $0x38] sm:$0xff] %v280
              %v282 = vld [vmem:[%s264 + $0x80] sm:$0xff]
              %283 = vst [vmem:[%s265 + $0x40] sm:$0xff] %v282
              %v284 = vld [vmem:[%s264 + $0x90] sm:$0xff]
              %285 = vst [vmem:[%s265 + $0x48] sm:$0xff] %v284
              %v286 = vld [vmem:[%s264 + $0xa0] sm:$0xff]
              %287 = vst [vmem:[%s265 + $0x50] sm:$0xff] %v286
              %v288 = vld [vmem:[%s264 + $0xb0] sm:$0xff]
              %289 = vst [vmem:[%s265 + $0x58] sm:$0xff] %v288
              %v290 = vld [vmem:[%s264 + $0xc0] sm:$0xff]
              %291 = vst [vmem:[%s265 + $0x60] sm:$0xff] %v290
              %v292 = vld [vmem:[%s264 + $0xd0] sm:$0xff]
              %293 = vst [vmem:[%s265 + $0x68] sm:$0xff] %v292
              %v294 = vld [vmem:[%s264 + $0xe0] sm:$0xff]
              %295 = vst [vmem:[%s265 + $0x70] sm:$0xff] %v294
              %v296 = vld [vmem:[%s264 + $0xf0] sm:$0xff]
              %297 = vst [vmem:[%s265 + $0x78] sm:$0xff] %v296
              %v298 = vld [vmem:[%s264 + $0x100] sm:$0xff]
              %299 = vst [vmem:[%s265 + $0x80] sm:$0xff] %v298
              %v300 = vld [vmem:[%s264 + $0x110] sm:$0xff]
              %301 = vst [vmem:[%s265 + $0x88] sm:$0xff] %v300
              %v302 = vld [vmem:[%s264 + $0x120] sm:$0xff]
              %303 = vst [vmem:[%s265 + $0x90] sm:$0xff] %v302
              %v304 = vld [vmem:[%s264 + $0x130] sm:$0xff]
              %305 = vst [vmem:[%s265 + $0x98] sm:$0xff] %v304
              %v306 = vld [vmem:[%s264 + $0x140] sm:$0xff]
              %307 = vst [vmem:[%s265 + $0xa0] sm:$0xff] %v306
              %v308 = vld [vmem:[%s264 + $0x150] sm:$0xff]
              %309 = vst [vmem:[%s265 + $0xa8] sm:$0xff] %v308
              %v310 = vld [vmem:[%s264 + $0x160] sm:$0xff]
              %311 = vst [vmem:[%s265 + $0xb0] sm:$0xff] %v310
              %v312 = vld [vmem:[%s264 + $0x170] sm:$0xff]
              %313 = vst [vmem:[%s265 + $0xb8] sm:$0xff] %v312
              %v314 = vld [vmem:[%s264 + $0x180] sm:$0xff]
              %315 = vst [vmem:[%s265 + $0xc0] sm:$0xff] %v314
              %v316 = vld [vmem:[%s264 + $0x190] sm:$0xff]
              %317 = vst [vmem:[%s265 + $0xc8] sm:$0xff] %v316
              %v318 = vld [vmem:[%s264 + $0x1a0] sm:$0xff]
              %319 = vst [vmem:[%s265 + $0xd0] sm:$0xff] %v318
              %v320 = vld [vmem:[%s264 + $0x1b0] sm:$0xff]
              %321 = vst [vmem:[%s265 + $0xd8] sm:$0xff] %v320
              %v322 = vld [vmem:[%s264 + $0x1c0] sm:$0xff]
              %323 = vst [vmem:[%s265 + $0xe0] sm:$0xff] %v322
              %v324 = vld [vmem:[%s264 + $0x1d0] sm:$0xff]
              %325 = vst [vmem:[%s265 + $0xe8] sm:$0xff] %v324
              %v326 = vld [vmem:[%s264 + $0x1e0] sm:$0xff]
              %327 = vst [vmem:[%s265 + $0xf0] sm:$0xff] %v326
              %v328 = vld [vmem:[%s264 + $0x1f0] sm:$0xff]
              %329 = vst [vmem:[%s265 + $0xf8] sm:$0xff] %v328
            $region75: #{improved_gae_forward.6} parent=69 // loop_footer
              %s263 = sadd.s32 1, %s259
            $region76: #{improved_gae_forward.6} parent=69 // loop_footer_branch
              %258 = sbr.rel target = $region72
            $region77: #{improved_gae_forward.6} parent=69 // loop_exit
              _
          $region70: #{improved_gae_forward.6} parent=54 // pred_fallthru
            _
          // Predicated region
          $region78: #{improved_gae_forward.6} parent=54 // pred_check
            _
          $region79: #{improved_gae_forward.6} parent=54 // pred_check_branch
            %331 = sbr.rel target = $region81
          $region80: #{improved_gae_forward.6} parent=54 // pred_region
            _
          $region81: #{improved_gae_forward.6} parent=54 // pred_fallthru
            _
        $region55: #{improved_gae_forward.6} parent=50 // pred_fallthru
          _
        // Predicated region
        $region56: #{improved_gae_forward.6} parent=50 // pred_check
          _
        $region57: #{improved_gae_forward.6} parent=50 // pred_check_branch
          %181 = sbr.rel target = $region59
        $region58: #{improved_gae_forward.6} parent=50 // pred_region
          %s183 = ssub.s32 256, 1
          loop: start=0, step=1, limit=1
          $region60: #{improved_gae_forward.6} parent=58 // loop_pre_header
            _
          $region61: #{improved_gae_forward.6} parent=58 // loop_header
            %s185 = sphi 0, %s189
            %p186 = scmp.ge.s32.totalorder %s185, 1
            %s190 = sphi %s175, %s175
            %s191 = sphi [#allocation4], [#allocation4]
          $region62: #{improved_gae_forward.6} parent=58 // loop_header_branch
            %188 = sbr.rel (%p186) target = $region66
          $region63: #{improved_gae_forward.6} parent=58 // loop_body
            %v192 = vld [vmem:[%s190] sm:%s183]
            %193 = vst [vmem:[%s191] sm:%s183] %v192
            %v194 = vld [vmem:[%s190 + $0x10] sm:%s183]
            %195 = vst [vmem:[%s191 + $0x8] sm:%s183] %v194
            %v196 = vld [vmem:[%s190 + $0x20] sm:%s183]
            %197 = vst [vmem:[%s191 + $0x10] sm:%s183] %v196
            %v198 = vld [vmem:[%s190 + $0x30] sm:%s183]
            %199 = vst [vmem:[%s191 + $0x18] sm:%s183] %v198
            %v200 = vld [vmem:[%s190 + $0x40] sm:%s183]
            %201 = vst [vmem:[%s191 + $0x20] sm:%s183] %v200
            %v202 = vld [vmem:[%s190 + $0x50] sm:%s183]
            %203 = vst [vmem:[%s191 + $0x28] sm:%s183] %v202
            %v204 = vld [vmem:[%s190 + $0x60] sm:%s183]
            %205 = vst [vmem:[%s191 + $0x30] sm:%s183] %v204
            %v206 = vld [vmem:[%s190 + $0x70] sm:%s183]
            %207 = vst [vmem:[%s191 + $0x38] sm:%s183] %v206
            %v208 = vld [vmem:[%s190 + $0x80] sm:%s183]
            %209 = vst [vmem:[%s191 + $0x40] sm:%s183] %v208
            %v210 = vld [vmem:[%s190 + $0x90] sm:%s183]
            %211 = vst [vmem:[%s191 + $0x48] sm:%s183] %v210
            %v212 = vld [vmem:[%s190 + $0xa0] sm:%s183]
            %213 = vst [vmem:[%s191 + $0x50] sm:%s183] %v212
            %v214 = vld [vmem:[%s190 + $0xb0] sm:%s183]
            %215 = vst [vmem:[%s191 + $0x58] sm:%s183] %v214
            %v216 = vld [vmem:[%s190 + $0xc0] sm:%s183]
            %217 = vst [vmem:[%s191 + $0x60] sm:%s183] %v216
            %v218 = vld [vmem:[%s190 + $0xd0] sm:%s183]
            %219 = vst [vmem:[%s191 + $0x68] sm:%s183] %v218
            %v220 = vld [vmem:[%s190 + $0xe0] sm:%s183]
            %221 = vst [vmem:[%s191 + $0x70] sm:%s183] %v220
            %v222 = vld [vmem:[%s190 + $0xf0] sm:%s183]
            %223 = vst [vmem:[%s191 + $0x78] sm:%s183] %v222
            %v224 = vld [vmem:[%s190 + $0x100] sm:%s183]
            %225 = vst [vmem:[%s191 + $0x80] sm:%s183] %v224
            %v226 = vld [vmem:[%s190 + $0x110] sm:%s183]
            %227 = vst [vmem:[%s191 + $0x88] sm:%s183] %v226
            %v228 = vld [vmem:[%s190 + $0x120] sm:%s183]
            %229 = vst [vmem:[%s191 + $0x90] sm:%s183] %v228
            %v230 = vld [vmem:[%s190 + $0x130] sm:%s183]
            %231 = vst [vmem:[%s191 + $0x98] sm:%s183] %v230
            %v232 = vld [vmem:[%s190 + $0x140] sm:%s183]
            %233 = vst [vmem:[%s191 + $0xa0] sm:%s183] %v232
            %v234 = vld [vmem:[%s190 + $0x150] sm:%s183]
            %235 = vst [vmem:[%s191 + $0xa8] sm:%s183] %v234
            %v236 = vld [vmem:[%s190 + $0x160] sm:%s183]
            %237 = vst [vmem:[%s191 + $0xb0] sm:%s183] %v236
            %v238 = vld [vmem:[%s190 + $0x170] sm:%s183]
            %239 = vst [vmem:[%s191 + $0xb8] sm:%s183] %v238
            %v240 = vld [vmem:[%s190 + $0x180] sm:%s183]
            %241 = vst [vmem:[%s191 + $0xc0] sm:%s183] %v240
            %v242 = vld [vmem:[%s190 + $0x190] sm:%s183]
            %243 = vst [vmem:[%s191 + $0xc8] sm:%s183] %v242
            %v244 = vld [vmem:[%s190 + $0x1a0] sm:%s183]
            %245 = vst [vmem:[%s191 + $0xd0] sm:%s183] %v244
            %v246 = vld [vmem:[%s190 + $0x1b0] sm:%s183]
            %247 = vst [vmem:[%s191 + $0xd8] sm:%s183] %v246
            %v248 = vld [vmem:[%s190 + $0x1c0] sm:%s183]
            %249 = vst [vmem:[%s191 + $0xe0] sm:%s183] %v248
            %v250 = vld [vmem:[%s190 + $0x1d0] sm:%s183]
            %251 = vst [vmem:[%s191 + $0xe8] sm:%s183] %v250
            %v252 = vld [vmem:[%s190 + $0x1e0] sm:%s183]
            %253 = vst [vmem:[%s191 + $0xf0] sm:%s183] %v252
            %v254 = vld [vmem:[%s190 + $0x1f0] sm:%s183]
            %255 = vst [vmem:[%s191 + $0xf8] sm:%s183] %v254
          $region64: #{improved_gae_forward.6} parent=58 // loop_footer
            %s189 = sadd.s32 1, %s185
          $region65: #{improved_gae_forward.6} parent=58 // loop_footer_branch
            %184 = sbr.rel target = $region61
          $region66: #{improved_gae_forward.6} parent=58 // loop_exit
            _
        $region59: #{improved_gae_forward.6} parent=50 // pred_fallthru
          _
      $region51: #{improved_gae_forward.6} parent=46 // pred_fallthru
        _
      %332 = vnop
    $region47: #{improved_gae_forward.6} parent=1 // pred_fallthru
      _
    // Predicated region
    $region82: #{improved_gae_forward.6} parent=1 // pred_check
      _
    $region83: #{improved_gae_forward.6} parent=1 // pred_check_branch
      %334 = sbr.rel (0) target = $region85
    $region84: #{improved_gae_forward.6} parent=1 // pred_region
      _
    $region85: #{improved_gae_forward.6} parent=1 // pred_fallthru
      _
    // Predicated region
    $region86: #{improved_gae_forward.6} parent=1 // pred_check
      _
    $region87: #{improved_gae_forward.6} parent=1 // pred_check_branch
      %336 = sbr.rel (0) target = $region89
    $region88: #{improved_gae_forward.6} parent=1 // pred_region
      _
    $region89: #{improved_gae_forward.6} parent=1 // pred_fallthru
      _
    // Predicated region
    $region90: #{improved_gae_forward.6} parent=1 // pred_check
      _
    $region91: #{improved_gae_forward.6} parent=1 // pred_check_branch
      %338 = sbr.rel (0) target = $region93
    $region92: #{improved_gae_forward.6} parent=1 // pred_region
      _
    $region93: #{improved_gae_forward.6} parent=1 // pred_fallthru
      _
    // Predicated region
    $region94: #{improved_gae_forward.6} parent=1 // pred_check
      _
    $region95: #{improved_gae_forward.6} parent=1 // pred_check_branch
      %340 = sbr.rel (0) target = $region97
    $region96: #{improved_gae_forward.6} parent=1 // pred_region
      _
    $region97: #{improved_gae_forward.6} parent=1 // pred_fallthru
      _
    // Predicated region
    $region98: #{improved_gae_forward.6} parent=1 // pred_check
      _
    $region99: #{improved_gae_forward.6} parent=1 // pred_check_branch
      %342 = sbr.rel (0) target = $region101
    $region100: #{improved_gae_forward.6} parent=1 // pred_region
      _
    $region101: #{improved_gae_forward.6} parent=1 // pred_fallthru
      _
    // Predicated region
    $region102: #{improved_gae_forward.6} parent=1 // pred_check
      _
    $region103: #{improved_gae_forward.6} parent=1 // pred_check_branch
      %344 = sbr.rel (0) target = $region105
    $region104: #{improved_gae_forward.6} parent=1 // pred_region
      _
    $region105: #{improved_gae_forward.6} parent=1 // pred_fallthru
      _
    %p345 = scmp.eq.s32.totalorder 0, 0
    // Predicated region
    $region106: #{improved_gae_forward.6} parent=1 // pred_check
      %p346 = pneg %p345
    $region107: #{improved_gae_forward.6} parent=1 // pred_check_branch
      %348 = sbr.rel (%p346) target = $region109
    $region108: #{improved_gae_forward.6} parent=1 // pred_region
      %349 = vst [vmem:[#allocation2] sm:$0xff] 0.0
      %350 = vst [vmem:[#allocation2 + $0x8] sm:$0xff] 0.0
      %351 = vst [vmem:[#allocation2 + $0x10] sm:$0xff] 0.0
      %352 = vst [vmem:[#allocation2 + $0x18] sm:$0xff] 0.0
      %353 = vst [vmem:[#allocation2 + $0x20] sm:$0xff] 0.0
      %354 = vst [vmem:[#allocation2 + $0x28] sm:$0xff] 0.0
      %355 = vst [vmem:[#allocation2 + $0x30] sm:$0xff] 0.0
      %356 = vst [vmem:[#allocation2 + $0x38] sm:$0xff] 0.0
      %357 = vst [vmem:[#allocation2 + $0x40] sm:$0xff] 0.0
      %358 = vst [vmem:[#allocation2 + $0x48] sm:$0xff] 0.0
      %359 = vst [vmem:[#allocation2 + $0x50] sm:$0xff] 0.0
      %360 = vst [vmem:[#allocation2 + $0x58] sm:$0xff] 0.0
      %361 = vst [vmem:[#allocation2 + $0x60] sm:$0xff] 0.0
      %362 = vst [vmem:[#allocation2 + $0x68] sm:$0xff] 0.0
      %363 = vst [vmem:[#allocation2 + $0x70] sm:$0xff] 0.0
      %364 = vst [vmem:[#allocation2 + $0x78] sm:$0xff] 0.0
      %365 = vst [vmem:[#allocation2 + $0x80] sm:$0xff] 0.0
      %366 = vst [vmem:[#allocation2 + $0x88] sm:$0xff] 0.0
      %367 = vst [vmem:[#allocation2 + $0x90] sm:$0xff] 0.0
      %368 = vst [vmem:[#allocation2 + $0x98] sm:$0xff] 0.0
      %369 = vst [vmem:[#allocation2 + $0xa0] sm:$0xff] 0.0
      %370 = vst [vmem:[#allocation2 + $0xa8] sm:$0xff] 0.0
      %371 = vst [vmem:[#allocation2 + $0xb0] sm:$0xff] 0.0
      %372 = vst [vmem:[#allocation2 + $0xb8] sm:$0xff] 0.0
      %373 = vst [vmem:[#allocation2 + $0xc0] sm:$0xff] 0.0
      %374 = vst [vmem:[#allocation2 + $0xc8] sm:$0xff] 0.0
      %375 = vst [vmem:[#allocation2 + $0xd0] sm:$0xff] 0.0
      %376 = vst [vmem:[#allocation2 + $0xd8] sm:$0xff] 0.0
      %377 = vst [vmem:[#allocation2 + $0xe0] sm:$0xff] 0.0
      %378 = vst [vmem:[#allocation2 + $0xe8] sm:$0xff] 0.0
      %379 = vst [vmem:[#allocation2 + $0xf0] sm:$0xff] 0.0
      %380 = vst [vmem:[#allocation2 + $0xf8] sm:$0xff] 0.0
    $region109: #{improved_gae_forward.6} parent=1 // pred_fallthru
      _
    %v381 = vld [vmem:[#allocation2] sm:$0xff]
    %v382 = vld [vmem:[#allocation2 + $0x8] sm:$0xff]
    %v383 = vld [vmem:[#allocation2 + $0x10] sm:$0xff]
    %v384 = vld [vmem:[#allocation2 + $0x18] sm:$0xff]
    %v385 = vld [vmem:[#allocation2 + $0x20] sm:$0xff]
    %v386 = vld [vmem:[#allocation2 + $0x28] sm:$0xff]
    %v387 = vld [vmem:[#allocation2 + $0x30] sm:$0xff]
    %v388 = vld [vmem:[#allocation2 + $0x38] sm:$0xff]
    %v389 = vld [vmem:[#allocation2 + $0x40] sm:$0xff]
    %v390 = vld [vmem:[#allocation2 + $0x48] sm:$0xff]
    %v391 = vld [vmem:[#allocation2 + $0x50] sm:$0xff]
    %v392 = vld [vmem:[#allocation2 + $0x58] sm:$0xff]
    %v393 = vld [vmem:[#allocation2 + $0x60] sm:$0xff]
    %v394 = vld [vmem:[#allocation2 + $0x68] sm:$0xff]
    %v395 = vld [vmem:[#allocation2 + $0x70] sm:$0xff]
    %v396 = vld [vmem:[#allocation2 + $0x78] sm:$0xff]
    %v397 = vld [vmem:[#allocation2 + $0x80] sm:$0xff]
    %v398 = vld [vmem:[#allocation2 + $0x88] sm:$0xff]
    %v399 = vld [vmem:[#allocation2 + $0x90] sm:$0xff]
    %v400 = vld [vmem:[#allocation2 + $0x98] sm:$0xff]
    %v401 = vld [vmem:[#allocation2 + $0xa0] sm:$0xff]
    %v402 = vld [vmem:[#allocation2 + $0xa8] sm:$0xff]
    %v403 = vld [vmem:[#allocation2 + $0xb0] sm:$0xff]
    %v404 = vld [vmem:[#allocation2 + $0xb8] sm:$0xff]
    %v405 = vld [vmem:[#allocation2 + $0xc0] sm:$0xff]
    %v406 = vld [vmem:[#allocation2 + $0xc8] sm:$0xff]
    %v407 = vld [vmem:[#allocation2 + $0xd0] sm:$0xff]
    %v408 = vld [vmem:[#allocation2 + $0xd8] sm:$0xff]
    %v409 = vld [vmem:[#allocation2 + $0xe0] sm:$0xff]
    %v410 = vld [vmem:[#allocation2 + $0xe8] sm:$0xff]
    %v411 = vld [vmem:[#allocation2 + $0xf0] sm:$0xff]
    %v412 = vld [vmem:[#allocation2 + $0xf8] sm:$0xff]
    %v413 = vld [vmem:[%s0] sm:$0xff]
    %v414 = vld [vmem:[%s0 + $0x8] sm:$0xff]
    %v415 = vld [vmem:[%s0 + $0x10] sm:$0xff]
    %v416 = vld [vmem:[%s0 + $0x18] sm:$0xff]
    %v417 = vld [vmem:[%s0 + $0x20] sm:$0xff]
    %v418 = vld [vmem:[%s0 + $0x28] sm:$0xff]
    %v419 = vld [vmem:[%s0 + $0x30] sm:$0xff]
    %v420 = vld [vmem:[%s0 + $0x38] sm:$0xff]
    %v421 = vld [vmem:[%s0 + $0x40] sm:$0xff]
    %v422 = vld [vmem:[%s0 + $0x48] sm:$0xff]
    %v423 = vld [vmem:[%s0 + $0x50] sm:$0xff]
    %v424 = vld [vmem:[%s0 + $0x58] sm:$0xff]
    %v425 = vld [vmem:[%s0 + $0x60] sm:$0xff]
    %v426 = vld [vmem:[%s0 + $0x68] sm:$0xff]
    %v427 = vld [vmem:[%s0 + $0x70] sm:$0xff]
    %v428 = vld [vmem:[%s0 + $0x78] sm:$0xff]
    %v429 = vld [vmem:[%s0 + $0x80] sm:$0xff]
    %v430 = vld [vmem:[%s0 + $0x88] sm:$0xff]
    %v431 = vld [vmem:[%s0 + $0x90] sm:$0xff]
    %v432 = vld [vmem:[%s0 + $0x98] sm:$0xff]
    %v433 = vld [vmem:[%s0 + $0xa0] sm:$0xff]
    %v434 = vld [vmem:[%s0 + $0xa8] sm:$0xff]
    %v435 = vld [vmem:[%s0 + $0xb0] sm:$0xff]
    %v436 = vld [vmem:[%s0 + $0xb8] sm:$0xff]
    %v437 = vld [vmem:[%s0 + $0xc0] sm:$0xff]
    %v438 = vld [vmem:[%s0 + $0xc8] sm:$0xff]
    %v439 = vld [vmem:[%s0 + $0xd0] sm:$0xff]
    %v440 = vld [vmem:[%s0 + $0xd8] sm:$0xff]
    %v441 = vld [vmem:[%s0 + $0xe0] sm:$0xff]
    %v442 = vld [vmem:[%s0 + $0xe8] sm:$0xff]
    %v443 = vld [vmem:[%s0 + $0xf0] sm:$0xff]
    %v444 = vld [vmem:[%s0 + $0xf8] sm:$0xff]
    %v445 = vld [vmem:[%s0 + $0x100] sm:$0xff]
    %v446 = vld [vmem:[%s0 + $0x108] sm:$0xff]
    %v447 = vld [vmem:[%s0 + $0x110] sm:$0xff]
    %v448 = vld [vmem:[%s0 + $0x118] sm:$0xff]
    %v449 = vld [vmem:[%s0 + $0x120] sm:$0xff]
    %v450 = vld [vmem:[%s0 + $0x128] sm:$0xff]
    %v451 = vld [vmem:[%s0 + $0x130] sm:$0xff]
    %v452 = vld [vmem:[%s0 + $0x138] sm:$0xff]
    %v453 = vld [vmem:[%s0 + $0x140] sm:$0xff]
    %v454 = vld [vmem:[%s0 + $0x148] sm:$0xff]
    %v455 = vld [vmem:[%s0 + $0x150] sm:$0xff]
    %v456 = vld [vmem:[%s0 + $0x158] sm:$0xff]
    %v457 = vld [vmem:[%s0 + $0x160] sm:$0xff]
    %v458 = vld [vmem:[%s0 + $0x168] sm:$0xff]
    %v459 = vld [vmem:[%s0 + $0x170] sm:$0xff]
    %v460 = vld [vmem:[%s0 + $0x178] sm:$0xff]
    %v461 = vld [vmem:[%s0 + $0x180] sm:$0xff]
    %v462 = vld [vmem:[%s0 + $0x188] sm:$0xff]
    %v463 = vld [vmem:[%s0 + $0x190] sm:$0xff]
    %v464 = vld [vmem:[%s0 + $0x198] sm:$0xff]
    %v465 = vld [vmem:[%s0 + $0x1a0] sm:$0xff]
    %v466 = vld [vmem:[%s0 + $0x1a8] sm:$0xff]
    %v467 = vld [vmem:[%s0 + $0x1b0] sm:$0xff]
    %v468 = vld [vmem:[%s0 + $0x1b8] sm:$0xff]
    %v469 = vld [vmem:[%s0 + $0x1c0] sm:$0xff]
    %v470 = vld [vmem:[%s0 + $0x1c8] sm:$0xff]
    %v471 = vld [vmem:[%s0 + $0x1d0] sm:$0xff]
    %v472 = vld [vmem:[%s0 + $0x1d8] sm:$0xff]
    %v473 = vld [vmem:[%s0 + $0x1e0] sm:$0xff]
    %v474 = vld [vmem:[%s0 + $0x1e8] sm:$0xff]
    %v475 = vld [vmem:[%s0 + $0x1f0] sm:$0xff]
    %v476 = vld [vmem:[%s0 + $0x1f8] sm:$0xff]
    %v477 = vld [vmem:[#allocation3] sm:$0xff]
    %v478 = vld [vmem:[#allocation3 + $0x8] sm:$0xff]
    %v479 = vld [vmem:[#allocation3 + $0x10] sm:$0xff]
    %v480 = vld [vmem:[#allocation3 + $0x18] sm:$0xff]
    %v481 = vld [vmem:[#allocation3 + $0x20] sm:$0xff]
    %v482 = vld [vmem:[#allocation3 + $0x28] sm:$0xff]
    %v483 = vld [vmem:[#allocation3 + $0x30] sm:$0xff]
    %v484 = vld [vmem:[#allocation3 + $0x38] sm:$0xff]
    %v485 = vld [vmem:[#allocation3 + $0x40] sm:$0xff]
    %v486 = vld [vmem:[#allocation3 + $0x48] sm:$0xff]
    %v487 = vld [vmem:[#allocation3 + $0x50] sm:$0xff]
    %v488 = vld [vmem:[#allocation3 + $0x58] sm:$0xff]
    %v489 = vld [vmem:[#allocation3 + $0x60] sm:$0xff]
    %v490 = vld [vmem:[#allocation3 + $0x68] sm:$0xff]
    %v491 = vld [vmem:[#allocation3 + $0x70] sm:$0xff]
    %v492 = vld [vmem:[#allocation3 + $0x78] sm:$0xff]
    %v493 = vld [vmem:[#allocation3 + $0x80] sm:$0xff]
    %v494 = vld [vmem:[#allocation3 + $0x88] sm:$0xff]
    %v495 = vld [vmem:[#allocation3 + $0x90] sm:$0xff]
    %v496 = vld [vmem:[#allocation3 + $0x98] sm:$0xff]
    %v497 = vld [vmem:[#allocation3 + $0xa0] sm:$0xff]
    %v498 = vld [vmem:[#allocation3 + $0xa8] sm:$0xff]
    %v499 = vld [vmem:[#allocation3 + $0xb0] sm:$0xff]
    %v500 = vld [vmem:[#allocation3 + $0xb8] sm:$0xff]
    %v501 = vld [vmem:[#allocation3 + $0xc0] sm:$0xff]
    %v502 = vld [vmem:[#allocation3 + $0xc8] sm:$0xff]
    %v503 = vld [vmem:[#allocation3 + $0xd0] sm:$0xff]
    %v504 = vld [vmem:[#allocation3 + $0xd8] sm:$0xff]
    %v505 = vld [vmem:[#allocation3 + $0xe0] sm:$0xff]
    %v506 = vld [vmem:[#allocation3 + $0xe8] sm:$0xff]
    %v507 = vld [vmem:[#allocation3 + $0xf0] sm:$0xff]
    %v508 = vld [vmem:[#allocation3 + $0xf8] sm:$0xff]
    %509 = vmatpush.msra.mxu0 %v492
    %510 = vmatpush.msra.mxu0 %v491
    %511 = vmatpush.msra.mxu0 %v490
    %512 = vmatpush.msra.mxu0 %v489
    %513 = vmatpush.msra.mxu0 %v488
    %514 = vmatpush.msra.mxu0 %v487
    %515 = vmatpush.msra.mxu0 %v486
    %516 = vmatpush.msra.mxu0 %v485
    %517 = vmatpush.msra.mxu0 %v484
    %518 = vmatpush.msra.mxu0 %v483
    %519 = vmatpush.msra.mxu0 %v482
    %520 = vmatpush.msra.mxu0 %v481
    %521 = vmatpush.msra.mxu0 %v480
    %522 = vmatpush.msra.mxu0 %v479
    %523 = vmatpush.msra.mxu0 %v478
    %524 = vmatpush.msra.mxu0 %v477
    %525 = vmatmul.f32.gmra.mxu0 %v413
    %v526 = vpop.f32.mrf.mxu0
    %v527 = vadd.f32 0.0, %v526
    %528 = vmatmul.f32.gmra.mxu0 %v415
    %v529 = vpop.f32.mrf.mxu0
    %v530 = vadd.f32 0.0, %v529
    %531 = vmatmul.f32.gmra.mxu0 %v417
    %v532 = vpop.f32.mrf.mxu0
    %v533 = vadd.f32 0.0, %v532
    %534 = vmatmul.f32.gmra.mxu0 %v419
    %v535 = vpop.f32.mrf.mxu0
    %v536 = vadd.f32 0.0, %v535
    %537 = vmatmul.f32.gmra.mxu0 %v421
    %v538 = vpop.f32.mrf.mxu0
    %v539 = vadd.f32 0.0, %v538
    %540 = vmatmul.f32.gmra.mxu0 %v423
    %v541 = vpop.f32.mrf.mxu0
    %v542 = vadd.f32 0.0, %v541
    %543 = vmatmul.f32.gmra.mxu0 %v425
    %v544 = vpop.f32.mrf.mxu0
    %v545 = vadd.f32 0.0, %v544
    %546 = vmatmul.f32.gmra.mxu0 %v427
    %v547 = vpop.f32.mrf.mxu0
    %v548 = vadd.f32 0.0, %v547
    %549 = vmatmul.f32.gmra.mxu0 %v429
    %v550 = vpop.f32.mrf.mxu0
    %v551 = vadd.f32 0.0, %v550
    %552 = vmatmul.f32.gmra.mxu0 %v431
    %v553 = vpop.f32.mrf.mxu0
    %v554 = vadd.f32 0.0, %v553
    %555 = vmatmul.f32.gmra.mxu0 %v433
    %v556 = vpop.f32.mrf.mxu0
    %v557 = vadd.f32 0.0, %v556
    %558 = vmatmul.f32.gmra.mxu0 %v435
    %v559 = vpop.f32.mrf.mxu0
    %v560 = vadd.f32 0.0, %v559
    %561 = vmatmul.f32.gmra.mxu0 %v437
    %v562 = vpop.f32.mrf.mxu0
    %v563 = vadd.f32 0.0, %v562
    %564 = vmatmul.f32.gmra.mxu0 %v439
    %v565 = vpop.f32.mrf.mxu0
    %v566 = vadd.f32 0.0, %v565
    %567 = vmatmul.f32.gmra.mxu0 %v441
    %v568 = vpop.f32.mrf.mxu0
    %v569 = vadd.f32 0.0, %v568
    %570 = vmatmul.f32.gmra.mxu0 %v443
    %v571 = vpop.f32.mrf.mxu0
    %v572 = vadd.f32 0.0, %v571
    %573 = vmatmul.f32.gmra.mxu0 %v445
    %v574 = vpop.f32.mrf.mxu0
    %v575 = vadd.f32 0.0, %v574
    %576 = vmatmul.f32.gmra.mxu0 %v447
    %v577 = vpop.f32.mrf.mxu0
    %v578 = vadd.f32 0.0, %v577
    %579 = vmatmul.f32.gmra.mxu0 %v449
    %v580 = vpop.f32.mrf.mxu0
    %v581 = vadd.f32 0.0, %v580
    %582 = vmatmul.f32.gmra.mxu0 %v451
    %v583 = vpop.f32.mrf.mxu0
    %v584 = vadd.f32 0.0, %v583
    %585 = vmatmul.f32.gmra.mxu0 %v453
    %v586 = vpop.f32.mrf.mxu0
    %v587 = vadd.f32 0.0, %v586
    %588 = vmatmul.f32.gmra.mxu0 %v455
    %v589 = vpop.f32.mrf.mxu0
    %v590 = vadd.f32 0.0, %v589
    %591 = vmatmul.f32.gmra.mxu0 %v457
    %v592 = vpop.f32.mrf.mxu0
    %v593 = vadd.f32 0.0, %v592
    %594 = vmatmul.f32.gmra.mxu0 %v459
    %v595 = vpop.f32.mrf.mxu0
    %v596 = vadd.f32 0.0, %v595
    %597 = vmatmul.f32.gmra.mxu0 %v461
    %v598 = vpop.f32.mrf.mxu0
    %v599 = vadd.f32 0.0, %v598
    %600 = vmatmul.f32.gmra.mxu0 %v463
    %v601 = vpop.f32.mrf.mxu0
    %v602 = vadd.f32 0.0, %v601
    %603 = vmatmul.f32.gmra.mxu0 %v465
    %v604 = vpop.f32.mrf.mxu0
    %v605 = vadd.f32 0.0, %v604
    %606 = vmatmul.f32.gmra.mxu0 %v467
    %v607 = vpop.f32.mrf.mxu0
    %v608 = vadd.f32 0.0, %v607
    %609 = vmatmul.f32.gmra.mxu0 %v469
    %v610 = vpop.f32.mrf.mxu0
    %v611 = vadd.f32 0.0, %v610
    %612 = vmatmul.f32.gmra.mxu0 %v471
    %v613 = vpop.f32.mrf.mxu0
    %v614 = vadd.f32 0.0, %v613
    %615 = vmatmul.f32.gmra.mxu0 %v473
    %v616 = vpop.f32.mrf.mxu0
    %v617 = vadd.f32 0.0, %v616
    %618 = vmatmul.f32.gmra.mxu0 %v475
    %v619 = vpop.f32.mrf.mxu0
    %v620 = vadd.f32 0.0, %v619
    %621 = vdwg.mxu0
    %622 = vmatpush.msra.mxu0 %v508
    %623 = vmatpush.msra.mxu0 %v507
    %624 = vmatpush.msra.mxu0 %v506
    %625 = vmatpush.msra.mxu0 %v505
    %626 = vmatpush.msra.mxu0 %v504
    %627 = vmatpush.msra.mxu0 %v503
    %628 = vmatpush.msra.mxu0 %v502
    %629 = vmatpush.msra.mxu0 %v501
    %630 = vmatpush.msra.mxu0 %v500
    %631 = vmatpush.msra.mxu0 %v499
    %632 = vmatpush.msra.mxu0 %v498
    %633 = vmatpush.msra.mxu0 %v497
    %634 = vmatpush.msra.mxu0 %v496
    %635 = vmatpush.msra.mxu0 %v495
    %636 = vmatpush.msra.mxu0 %v494
    %637 = vmatpush.msra.mxu0 %v493
    %638 = vmatmul.f32.gmra.mxu0 %v414
    %v639 = vpop.f32.mrf.mxu0
    %v640 = vadd.f32 %v527, %v639
    %641 = vmatmul.f32.gmra.mxu0 %v416
    %v642 = vpop.f32.mrf.mxu0
    %v643 = vadd.f32 %v530, %v642
    %644 = vmatmul.f32.gmra.mxu0 %v418
    %v645 = vpop.f32.mrf.mxu0
    %v646 = vadd.f32 %v533, %v645
    %647 = vmatmul.f32.gmra.mxu0 %v420
    %v648 = vpop.f32.mrf.mxu0
    %v649 = vadd.f32 %v536, %v648
    %650 = vmatmul.f32.gmra.mxu0 %v422
    %v651 = vpop.f32.mrf.mxu0
    %v652 = vadd.f32 %v539, %v651
    %653 = vmatmul.f32.gmra.mxu0 %v424
    %v654 = vpop.f32.mrf.mxu0
    %v655 = vadd.f32 %v542, %v654
    %656 = vmatmul.f32.gmra.mxu0 %v426
    %v657 = vpop.f32.mrf.mxu0
    %v658 = vadd.f32 %v545, %v657
    %659 = vmatmul.f32.gmra.mxu0 %v428
    %v660 = vpop.f32.mrf.mxu0
    %v661 = vadd.f32 %v548, %v660
    %662 = vmatmul.f32.gmra.mxu0 %v430
    %v663 = vpop.f32.mrf.mxu0
    %v664 = vadd.f32 %v551, %v663
    %665 = vmatmul.f32.gmra.mxu0 %v432
    %v666 = vpop.f32.mrf.mxu0
    %v667 = vadd.f32 %v554, %v666
    %668 = vmatmul.f32.gmra.mxu0 %v434
    %v669 = vpop.f32.mrf.mxu0
    %v670 = vadd.f32 %v557, %v669
    %671 = vmatmul.f32.gmra.mxu0 %v436
    %v672 = vpop.f32.mrf.mxu0
    %v673 = vadd.f32 %v560, %v672
    %674 = vmatmul.f32.gmra.mxu0 %v438
    %v675 = vpop.f32.mrf.mxu0
    %v676 = vadd.f32 %v563, %v675
    %677 = vmatmul.f32.gmra.mxu0 %v440
    %v678 = vpop.f32.mrf.mxu0
    %v679 = vadd.f32 %v566, %v678
    %680 = vmatmul.f32.gmra.mxu0 %v442
    %v681 = vpop.f32.mrf.mxu0
    %v682 = vadd.f32 %v569, %v681
    %683 = vmatmul.f32.gmra.mxu0 %v444
    %v684 = vpop.f32.mrf.mxu0
    %v685 = vadd.f32 %v572, %v684
    %686 = vmatmul.f32.gmra.mxu0 %v446
    %v687 = vpop.f32.mrf.mxu0
    %v688 = vadd.f32 %v575, %v687
    %689 = vmatmul.f32.gmra.mxu0 %v448
    %v690 = vpop.f32.mrf.mxu0
    %v691 = vadd.f32 %v578, %v690
    %692 = vmatmul.f32.gmra.mxu0 %v450
    %v693 = vpop.f32.mrf.mxu0
    %v694 = vadd.f32 %v581, %v693
    %695 = vmatmul.f32.gmra.mxu0 %v452
    %v696 = vpop.f32.mrf.mxu0
    %v697 = vadd.f32 %v584, %v696
    %698 = vmatmul.f32.gmra.mxu0 %v454
    %v699 = vpop.f32.mrf.mxu0
    %v700 = vadd.f32 %v587, %v699
    %701 = vmatmul.f32.gmra.mxu0 %v456
    %v702 = vpop.f32.mrf.mxu0
    %v703 = vadd.f32 %v590, %v702
    %704 = vmatmul.f32.gmra.mxu0 %v458
    %v705 = vpop.f32.mrf.mxu0
    %v706 = vadd.f32 %v593, %v705
    %707 = vmatmul.f32.gmra.mxu0 %v460
    %v708 = vpop.f32.mrf.mxu0
    %v709 = vadd.f32 %v596, %v708
    %710 = vmatmul.f32.gmra.mxu0 %v462
    %v711 = vpop.f32.mrf.mxu0
    %v712 = vadd.f32 %v599, %v711
    %713 = vmatmul.f32.gmra.mxu0 %v464
    %v714 = vpop.f32.mrf.mxu0
    %v715 = vadd.f32 %v602, %v714
    %716 = vmatmul.f32.gmra.mxu0 %v466
    %v717 = vpop.f32.mrf.mxu0
    %v718 = vadd.f32 %v605, %v717
    %719 = vmatmul.f32.gmra.mxu0 %v468
    %v720 = vpop.f32.mrf.mxu0
    %v721 = vadd.f32 %v608, %v720
    %722 = vmatmul.f32.gmra.mxu0 %v470
    %v723 = vpop.f32.mrf.mxu0
    %v724 = vadd.f32 %v611, %v723
    %725 = vmatmul.f32.gmra.mxu0 %v472
    %v726 = vpop.f32.mrf.mxu0
    %v727 = vadd.f32 %v614, %v726
    %728 = vmatmul.f32.gmra.mxu0 %v474
    %v729 = vpop.f32.mrf.mxu0
    %v730 = vadd.f32 %v617, %v729
    %731 = vmatmul.f32.gmra.mxu0 %v476
    %v732 = vpop.f32.mrf.mxu0
    %v733 = vadd.f32 %v620, %v732
    %734 = vdwg.mxu0
    %v735 = vadd.f32 %v381, %v640
    %v736 = vadd.f32 %v382, %v643
    %v737 = vadd.f32 %v383, %v646
    %v738 = vadd.f32 %v384, %v649
    %v739 = vadd.f32 %v385, %v652
    %v740 = vadd.f32 %v386, %v655
    %v741 = vadd.f32 %v387, %v658
    %v742 = vadd.f32 %v388, %v661
    %v743 = vadd.f32 %v389, %v664
    %v744 = vadd.f32 %v390, %v667
    %v745 = vadd.f32 %v391, %v670
    %v746 = vadd.f32 %v392, %v673
    %v747 = vadd.f32 %v393, %v676
    %v748 = vadd.f32 %v394, %v679
    %v749 = vadd.f32 %v395, %v682
    %v750 = vadd.f32 %v396, %v685
    %v751 = vadd.f32 %v397, %v688
    %v752 = vadd.f32 %v398, %v691
    %v753 = vadd.f32 %v399, %v694
    %v754 = vadd.f32 %v400, %v697
    %v755 = vadd.f32 %v401, %v700
    %v756 = vadd.f32 %v402, %v703
    %v757 = vadd.f32 %v403, %v706
    %v758 = vadd.f32 %v404, %v709
    %v759 = vadd.f32 %v405, %v712
    %v760 = vadd.f32 %v406, %v715
    %v761 = vadd.f32 %v407, %v718
    %v762 = vadd.f32 %v408, %v721
    %v763 = vadd.f32 %v409, %v724
    %v764 = vadd.f32 %v410, %v727
    %v765 = vadd.f32 %v411, %v730
    %v766 = vadd.f32 %v412, %v733
    %767 = vst [vmem:[#allocation2] sm:$0xff] %v735
    %768 = vst [vmem:[#allocation2 + $0x8] sm:$0xff] %v736
    %769 = vst [vmem:[#allocation2 + $0x10] sm:$0xff] %v737
    %770 = vst [vmem:[#allocation2 + $0x18] sm:$0xff] %v738
    %771 = vst [vmem:[#allocation2 + $0x20] sm:$0xff] %v739
    %772 = vst [vmem:[#allocation2 + $0x28] sm:$0xff] %v740
    %773 = vst [vmem:[#allocation2 + $0x30] sm:$0xff] %v741
    %774 = vst [vmem:[#allocation2 + $0x38] sm:$0xff] %v742
    %775 = vst [vmem:[#allocation2 + $0x40] sm:$0xff] %v743
    %776 = vst [vmem:[#allocation2 + $0x48] sm:$0xff] %v744
    %777 = vst [vmem:[#allocation2 + $0x50] sm:$0xff] %v745
    %778 = vst [vmem:[#allocation2 + $0x58] sm:$0xff] %v746
    %779 = vst [vmem:[#allocation2 + $0x60] sm:$0xff] %v747
    %780 = vst [vmem:[#allocation2 + $0x68] sm:$0xff] %v748
    %781 = vst [vmem:[#allocation2 + $0x70] sm:$0xff] %v749
    %782 = vst [vmem:[#allocation2 + $0x78] sm:$0xff] %v750
    %783 = vst [vmem:[#allocation2 + $0x80] sm:$0xff] %v751
    %784 = vst [vmem:[#allocation2 + $0x88] sm:$0xff] %v752
    %785 = vst [vmem:[#allocation2 + $0x90] sm:$0xff] %v753
    %786 = vst [vmem:[#allocation2 + $0x98] sm:$0xff] %v754
    %787 = vst [vmem:[#allocation2 + $0xa0] sm:$0xff] %v755
    %788 = vst [vmem:[#allocation2 + $0xa8] sm:$0xff] %v756
    %789 = vst [vmem:[#allocation2 + $0xb0] sm:$0xff] %v757
    %790 = vst [vmem:[#allocation2 + $0xb8] sm:$0xff] %v758
    %791 = vst [vmem:[#allocation2 + $0xc0] sm:$0xff] %v759
    %792 = vst [vmem:[#allocation2 + $0xc8] sm:$0xff] %v760
    %793 = vst [vmem:[#allocation2 + $0xd0] sm:$0xff] %v761
    %794 = vst [vmem:[#allocation2 + $0xd8] sm:$0xff] %v762
    %795 = vst [vmem:[#allocation2 + $0xe0] sm:$0xff] %v763
    %796 = vst [vmem:[#allocation2 + $0xe8] sm:$0xff] %v764
    %797 = vst [vmem:[#allocation2 + $0xf0] sm:$0xff] %v765
    %798 = vst [vmem:[#allocation2 + $0xf8] sm:$0xff] %v766
    // Predicated region
    $region110: #{improved_gae_forward.6} parent=1 // pred_check
      %p799 = pneg %p345
    $region111: #{improved_gae_forward.6} parent=1 // pred_check_branch
      %801 = sbr.rel (%p799) target = $region113
    $region112: #{improved_gae_forward.6} parent=1 // pred_region
      %v802 = vld [vmem:[#allocation2] sm:$0xff]
      %v803 = vld [vmem:[#allocation2 + $0x8] sm:$0xff]
      %v804 = vld [vmem:[#allocation2 + $0x10] sm:$0xff]
      %v805 = vld [vmem:[#allocation2 + $0x18] sm:$0xff]
      %v806 = vld [vmem:[#allocation2 + $0x20] sm:$0xff]
      %v807 = vld [vmem:[#allocation2 + $0x28] sm:$0xff]
      %v808 = vld [vmem:[#allocation2 + $0x30] sm:$0xff]
      %v809 = vld [vmem:[#allocation2 + $0x38] sm:$0xff]
      %v810 = vld [vmem:[#allocation2 + $0x40] sm:$0xff]
      %v811 = vld [vmem:[#allocation2 + $0x48] sm:$0xff]
      %v812 = vld [vmem:[#allocation2 + $0x50] sm:$0xff]
      %v813 = vld [vmem:[#allocation2 + $0x58] sm:$0xff]
      %v814 = vld [vmem:[#allocation2 + $0x60] sm:$0xff]
      %v815 = vld [vmem:[#allocation2 + $0x68] sm:$0xff]
      %v816 = vld [vmem:[#allocation2 + $0x70] sm:$0xff]
      %v817 = vld [vmem:[#allocation2 + $0x78] sm:$0xff]
      %v818 = vld [vmem:[#allocation2 + $0x80] sm:$0xff]
      %v819 = vld [vmem:[#allocation2 + $0x88] sm:$0xff]
      %v820 = vld [vmem:[#allocation2 + $0x90] sm:$0xff]
      %v821 = vld [vmem:[#allocation2 + $0x98] sm:$0xff]
      %v822 = vld [vmem:[#allocation2 + $0xa0] sm:$0xff]
      %v823 = vld [vmem:[#allocation2 + $0xa8] sm:$0xff]
      %v824 = vld [vmem:[#allocation2 + $0xb0] sm:$0xff]
      %v825 = vld [vmem:[#allocation2 + $0xb8] sm:$0xff]
      %v826 = vld [vmem:[#allocation2 + $0xc0] sm:$0xff]
      %v827 = vld [vmem:[#allocation2 + $0xc8] sm:$0xff]
      %v828 = vld [vmem:[#allocation2 + $0xd0] sm:$0xff]
      %v829 = vld [vmem:[#allocation2 + $0xd8] sm:$0xff]
      %v830 = vld [vmem:[#allocation2 + $0xe0] sm:$0xff]
      %v831 = vld [vmem:[#allocation2 + $0xe8] sm:$0xff]
      %v832 = vld [vmem:[#allocation2 + $0xf0] sm:$0xff]
      %v833 = vld [vmem:[#allocation2 + $0xf8] sm:$0xff]
      %v834 = vld [vmem:[%s3] sm:$0x1]
      %v835 = vld [vmem:[%s4] sm:$0x1]
      %v836 = vld [vmem:[%s5] sm:$0x1]
      %v837 = vld [vmem:[#allocation4] sm:$0xff]
      %v838 = vld [vmem:[#allocation4 + $0x8] sm:$0xff]
      %v839 = vld [vmem:[#allocation4 + $0x10] sm:$0xff]
      %v840 = vld [vmem:[#allocation4 + $0x18] sm:$0xff]
      %v841 = vld [vmem:[#allocation4 + $0x20] sm:$0xff]
      %v842 = vld [vmem:[#allocation4 + $0x28] sm:$0xff]
      %v843 = vld [vmem:[#allocation4 + $0x30] sm:$0xff]
      %v844 = vld [vmem:[#allocation4 + $0x38] sm:$0xff]
      %v845 = vld [vmem:[#allocation4 + $0x40] sm:$0xff]
      %v846 = vld [vmem:[#allocation4 + $0x48] sm:$0xff]
      %v847 = vld [vmem:[#allocation4 + $0x50] sm:$0xff]
      %v848 = vld [vmem:[#allocation4 + $0x58] sm:$0xff]
      %v849 = vld [vmem:[#allocation4 + $0x60] sm:$0xff]
      %v850 = vld [vmem:[#allocation4 + $0x68] sm:$0xff]
      %v851 = vld [vmem:[#allocation4 + $0x70] sm:$0xff]
      %v852 = vld [vmem:[#allocation4 + $0x78] sm:$0xff]
      %v853 = vld [vmem:[#allocation4 + $0x80] sm:$0xff]
      %v854 = vld [vmem:[#allocation4 + $0x88] sm:$0xff]
      %v855 = vld [vmem:[#allocation4 + $0x90] sm:$0xff]
      %v856 = vld [vmem:[#allocation4 + $0x98] sm:$0xff]
      %v857 = vld [vmem:[#allocation4 + $0xa0] sm:$0xff]
      %v858 = vld [vmem:[#allocation4 + $0xa8] sm:$0xff]
      %v859 = vld [vmem:[#allocation4 + $0xb0] sm:$0xff]
      %v860 = vld [vmem:[#allocation4 + $0xb8] sm:$0xff]
      %v861 = vld [vmem:[#allocation4 + $0xc0] sm:$0xff]
      %v862 = vld [vmem:[#allocation4 + $0xc8] sm:$0xff]
      %v863 = vld [vmem:[#allocation4 + $0xd0] sm:$0xff]
      %v864 = vld [vmem:[#allocation4 + $0xd8] sm:$0xff]
      %v865 = vld [vmem:[#allocation4 + $0xe0] sm:$0xff]
      %v866 = vld [vmem:[#allocation4 + $0xe8] sm:$0xff]
      %v867 = vld [vmem:[#allocation4 + $0xf0] sm:$0xff]
      %v868 = vld [vmem:[#allocation4 + $0xf8] sm:$0xff]
      %v870 = vperm.slane %v834, 0
      %v872 = vadd.f32 %v802, %v870
      %v873 = vadd.f32 %v803, %v870
      %v874 = vadd.f32 %v804, %v870
      %v875 = vadd.f32 %v805, %v870
      %v876 = vadd.f32 %v806, %v870
      %v877 = vadd.f32 %v807, %v870
      %v878 = vadd.f32 %v808, %v870
      %v879 = vadd.f32 %v809, %v870
      %v880 = vadd.f32 %v810, %v870
      %v881 = vadd.f32 %v811, %v870
      %v882 = vadd.f32 %v812, %v870
      %v883 = vadd.f32 %v813, %v870
      %v884 = vadd.f32 %v814, %v870
      %v885 = vadd.f32 %v815, %v870
      %v886 = vadd.f32 %v816, %v870
      %v887 = vadd.f32 %v817, %v870
      %v888 = vadd.f32 %v818, %v870
      %v889 = vadd.f32 %v819, %v870
      %v890 = vadd.f32 %v820, %v870
      %v891 = vadd.f32 %v821, %v870
      %v892 = vadd.f32 %v822, %v870
      %v893 = vadd.f32 %v823, %v870
      %v894 = vadd.f32 %v824, %v870
      %v895 = vadd.f32 %v825, %v870
      %v896 = vadd.f32 %v826, %v870
      %v897 = vadd.f32 %v827, %v870
      %v898 = vadd.f32 %v828, %v870
      %v899 = vadd.f32 %v829, %v870
      %v900 = vadd.f32 %v830, %v870
      %v901 = vadd.f32 %v831, %v870
      %v902 = vadd.f32 %v832, %v870
      %v903 = vadd.f32 %v833, %v870
      %v904 = vmax.f32 %v872, 0.0
      %v905 = vmax.f32 %v873, 0.0
      %v906 = vmax.f32 %v874, 0.0
      %v907 = vmax.f32 %v875, 0.0
      %v908 = vmax.f32 %v876, 0.0
      %v909 = vmax.f32 %v877, 0.0
      %v910 = vmax.f32 %v878, 0.0
      %v911 = vmax.f32 %v879, 0.0
      %v912 = vmax.f32 %v880, 0.0
      %v913 = vmax.f32 %v881, 0.0
      %v914 = vmax.f32 %v882, 0.0
      %v915 = vmax.f32 %v883, 0.0
      %v916 = vmax.f32 %v884, 0.0
      %v917 = vmax.f32 %v885, 0.0
      %v918 = vmax.f32 %v886, 0.0
      %v919 = vmax.f32 %v887, 0.0
      %v920 = vmax.f32 %v888, 0.0
      %v921 = vmax.f32 %v889, 0.0
      %v922 = vmax.f32 %v890, 0.0
      %v923 = vmax.f32 %v891, 0.0
      %v924 = vmax.f32 %v892, 0.0
      %v925 = vmax.f32 %v893, 0.0
      %v926 = vmax.f32 %v894, 0.0
      %v927 = vmax.f32 %v895, 0.0
      %v928 = vmax.f32 %v896, 0.0
      %v929 = vmax.f32 %v897, 0.0
      %v930 = vmax.f32 %v898, 0.0
      %v931 = vmax.f32 %v899, 0.0
      %v932 = vmax.f32 %v900, 0.0
      %v933 = vmax.f32 %v901, 0.0
      %v934 = vmax.f32 %v902, 0.0
      %v935 = vmax.f32 %v903, 0.0
      %v937 = vperm.slane %v835, 0
      %v939 = vmul.f32 %v904, %v937
      %v940 = vmul.f32 %v905, %v937
      %v941 = vmul.f32 %v906, %v937
      %v942 = vmul.f32 %v907, %v937
      %v943 = vmul.f32 %v908, %v937
      %v944 = vmul.f32 %v909, %v937
      %v945 = vmul.f32 %v910, %v937
      %v946 = vmul.f32 %v911, %v937
      %v947 = vmul.f32 %v912, %v937
      %v948 = vmul.f32 %v913, %v937
      %v949 = vmul.f32 %v914, %v937
      %v950 = vmul.f32 %v915, %v937
      %v951 = vmul.f32 %v916, %v937
      %v952 = vmul.f32 %v917, %v937
      %v953 = vmul.f32 %v918, %v937
      %v954 = vmul.f32 %v919, %v937
      %v955 = vmul.f32 %v920, %v937
      %v956 = vmul.f32 %v921, %v937
      %v957 = vmul.f32 %v922, %v937
      %v958 = vmul.f32 %v923, %v937
      %v959 = vmul.f32 %v924, %v937
      %v960 = vmul.f32 %v925, %v937
      %v961 = vmul.f32 %v926, %v937
      %v962 = vmul.f32 %v927, %v937
      %v963 = vmul.f32 %v928, %v937
      %v964 = vmul.f32 %v929, %v937
      %v965 = vmul.f32 %v930, %v937
      %v966 = vmul.f32 %v931, %v937
      %v967 = vmul.f32 %v932, %v937
      %v968 = vmul.f32 %v933, %v937
      %v969 = vmul.f32 %v934, %v937
      %v970 = vmul.f32 %v935, %v937
      %v972 = vperm.slane %v836, 0
      %v974 = vadd.f32 %v939, %v972
      %v975 = vadd.f32 %v940, %v972
      %v976 = vadd.f32 %v941, %v972
      %v977 = vadd.f32 %v942, %v972
      %v978 = vadd.f32 %v943, %v972
      %v979 = vadd.f32 %v944, %v972
      %v980 = vadd.f32 %v945, %v972
      %v981 = vadd.f32 %v946, %v972
      %v982 = vadd.f32 %v947, %v972
      %v983 = vadd.f32 %v948, %v972
      %v984 = vadd.f32 %v949, %v972
      %v985 = vadd.f32 %v950, %v972
      %v986 = vadd.f32 %v951, %v972
      %v987 = vadd.f32 %v952, %v972
      %v988 = vadd.f32 %v953, %v972
      %v989 = vadd.f32 %v954, %v972
      %v990 = vadd.f32 %v955, %v972
      %v991 = vadd.f32 %v956, %v972
      %v992 = vadd.f32 %v957, %v972
      %v993 = vadd.f32 %v958, %v972
      %v994 = vadd.f32 %v959, %v972
      %v995 = vadd.f32 %v960, %v972
      %v996 = vadd.f32 %v961, %v972
      %v997 = vadd.f32 %v962, %v972
      %v998 = vadd.f32 %v963, %v972
      %v999 = vadd.f32 %v964, %v972
      %v1000 = vadd.f32 %v965, %v972
      %v1001 = vadd.f32 %v966, %v972
      %v1002 = vadd.f32 %v967, %v972
      %v1003 = vadd.f32 %v968, %v972
      %v1004 = vadd.f32 %v969, %v972
      %v1005 = vadd.f32 %v970, %v972
      %v1006 = vadd.f32 %v974, %v837
      %v1007 = vadd.f32 %v975, %v838
      %v1008 = vadd.f32 %v976, %v839
      %v1009 = vadd.f32 %v977, %v840
      %v1010 = vadd.f32 %v978, %v841
      %v1011 = vadd.f32 %v979, %v842
      %v1012 = vadd.f32 %v980, %v843
      %v1013 = vadd.f32 %v981, %v844
      %v1014 = vadd.f32 %v982, %v845
      %v1015 = vadd.f32 %v983, %v846
      %v1016 = vadd.f32 %v984, %v847
      %v1017 = vadd.f32 %v985, %v848
      %v1018 = vadd.f32 %v986, %v849
      %v1019 = vadd.f32 %v987, %v850
      %v1020 = vadd.f32 %v988, %v851
      %v1021 = vadd.f32 %v989, %v852
      %v1022 = vadd.f32 %v990, %v853
      %v1023 = vadd.f32 %v991, %v854
      %v1024 = vadd.f32 %v992, %v855
      %v1025 = vadd.f32 %v993, %v856
      %v1026 = vadd.f32 %v994, %v857
      %v1027 = vadd.f32 %v995, %v858
      %v1028 = vadd.f32 %v996, %v859
      %v1029 = vadd.f32 %v997, %v860
      %v1030 = vadd.f32 %v998, %v861
      %v1031 = vadd.f32 %v999, %v862
      %v1032 = vadd.f32 %v1000, %v863
      %v1033 = vadd.f32 %v1001, %v864
      %v1034 = vadd.f32 %v1002, %v865
      %v1035 = vadd.f32 %v1003, %v866
      %v1036 = vadd.f32 %v1004, %v867
      %v1037 = vadd.f32 %v1005, %v868
      %v1038 = vld [vmem:[%s6] sm:$0xff]
      %v1039 = vld [vmem:[%s6 + $0x8] sm:$0xff]
      %v1040 = vld [vmem:[%s6 + $0x10] sm:$0xff]
      %v1041 = vld [vmem:[%s6 + $0x18] sm:$0xff]
      %v1042 = vld [vmem:[%s6 + $0x20] sm:$0xff]
      %v1043 = vld [vmem:[%s6 + $0x28] sm:$0xff]
      %v1044 = vld [vmem:[%s6 + $0x30] sm:$0xff]
      %v1045 = vld [vmem:[%s6 + $0x38] sm:$0xff]
      %v1046 = vld [vmem:[%s6 + $0x40] sm:$0xff]
      %v1047 = vld [vmem:[%s6 + $0x48] sm:$0xff]
      %v1048 = vld [vmem:[%s6 + $0x50] sm:$0xff]
      %v1049 = vld [vmem:[%s6 + $0x58] sm:$0xff]
      %v1050 = vld [vmem:[%s6 + $0x60] sm:$0xff]
      %v1051 = vld [vmem:[%s6 + $0x68] sm:$0xff]
      %v1052 = vld [vmem:[%s6 + $0x70] sm:$0xff]
      %v1053 = vld [vmem:[%s6 + $0x78] sm:$0xff]
      %v1054 = vld [vmem:[%s6 + $0x80] sm:$0xff]
      %v1055 = vld [vmem:[%s6 + $0x88] sm:$0xff]
      %v1056 = vld [vmem:[%s6 + $0x90] sm:$0xff]
      %v1057 = vld [vmem:[%s6 + $0x98] sm:$0xff]
      %v1058 = vld [vmem:[%s6 + $0xa0] sm:$0xff]
      %v1059 = vld [vmem:[%s6 + $0xa8] sm:$0xff]
      %v1060 = vld [vmem:[%s6 + $0xb0] sm:$0xff]
      %v1061 = vld [vmem:[%s6 + $0xb8] sm:$0xff]
      %v1062 = vld [vmem:[%s6 + $0xc0] sm:$0xff]
      %v1063 = vld [vmem:[%s6 + $0xc8] sm:$0xff]
      %v1064 = vld [vmem:[%s6 + $0xd0] sm:$0xff]
      %v1065 = vld [vmem:[%s6 + $0xd8] sm:$0xff]
      %v1066 = vld [vmem:[%s6 + $0xe0] sm:$0xff]
      %v1067 = vld [vmem:[%s6 + $0xe8] sm:$0xff]
      %v1068 = vld [vmem:[%s6 + $0xf0] sm:$0xff]
      %v1069 = vld [vmem:[%s6 + $0xf8] sm:$0xff]
      %1070 = vmatpush.msra.mxu0 %v1068
      %1071 = vmatpush.msra.mxu0 %v1066
      %1072 = vmatpush.msra.mxu0 %v1064
      %1073 = vmatpush.msra.mxu0 %v1062
      %1074 = vmatpush.msra.mxu0 %v1060
      %1075 = vmatpush.msra.mxu0 %v1058
      %1076 = vmatpush.msra.mxu0 %v1056
      %1077 = vmatpush.msra.mxu0 %v1054
      %1078 = vmatpush.msra.mxu0 %v1052
      %1079 = vmatpush.msra.mxu0 %v1050
      %1080 = vmatpush.msra.mxu0 %v1048
      %1081 = vmatpush.msra.mxu0 %v1046
      %1082 = vmatpush.msra.mxu0 %v1044
      %1083 = vmatpush.msra.mxu0 %v1042
      %1084 = vmatpush.msra.mxu0 %v1040
      %1085 = vmatpush.msra.mxu0 %v1038
      %1086 = vmatmul.f32.gmra.mxu0 %v1006
      %v1087 = vpop.f32.mrf.mxu0
      %v1088 = vadd.f32 0.0, %v1087
      %1089 = vmatmul.f32.gmra.mxu0 %v1007
      %v1090 = vpop.f32.mrf.mxu0
      %v1091 = vadd.f32 0.0, %v1090
      %1092 = vmatmul.f32.gmra.mxu0 %v1008
      %v1093 = vpop.f32.mrf.mxu0
      %v1094 = vadd.f32 0.0, %v1093
      %1095 = vmatmul.f32.gmra.mxu0 %v1009
      %v1096 = vpop.f32.mrf.mxu0
      %v1097 = vadd.f32 0.0, %v1096
      %1098 = vmatmul.f32.gmra.mxu0 %v1010
      %v1099 = vpop.f32.mrf.mxu0
      %v1100 = vadd.f32 0.0, %v1099
      %1101 = vmatmul.f32.gmra.mxu0 %v1011
      %v1102 = vpop.f32.mrf.mxu0
      %v1103 = vadd.f32 0.0, %v1102
      %1104 = vmatmul.f32.gmra.mxu0 %v1012
      %v1105 = vpop.f32.mrf.mxu0
      %v1106 = vadd.f32 0.0, %v1105
      %1107 = vmatmul.f32.gmra.mxu0 %v1013
      %v1108 = vpop.f32.mrf.mxu0
      %v1109 = vadd.f32 0.0, %v1108
      %1110 = vmatmul.f32.gmra.mxu0 %v1014
      %v1111 = vpop.f32.mrf.mxu0
      %v1112 = vadd.f32 0.0, %v1111
      %1113 = vmatmul.f32.gmra.mxu0 %v1015
      %v1114 = vpop.f32.mrf.mxu0
      %v1115 = vadd.f32 0.0, %v1114
      %1116 = vmatmul.f32.gmra.mxu0 %v1016
      %v1117 = vpop.f32.mrf.mxu0
      %v1118 = vadd.f32 0.0, %v1117
      %1119 = vmatmul.f32.gmra.mxu0 %v1017
      %v1120 = vpop.f32.mrf.mxu0
      %v1121 = vadd.f32 0.0, %v1120
      %1122 = vmatmul.f32.gmra.mxu0 %v1018
      %v1123 = vpop.f32.mrf.mxu0
      %v1124 = vadd.f32 0.0, %v1123
      %1125 = vmatmul.f32.gmra.mxu0 %v1019
      %v1126 = vpop.f32.mrf.mxu0
      %v1127 = vadd.f32 0.0, %v1126
      %1128 = vmatmul.f32.gmra.mxu0 %v1020
      %v1129 = vpop.f32.mrf.mxu0
      %v1130 = vadd.f32 0.0, %v1129
      %1131 = vmatmul.f32.gmra.mxu0 %v1021
      %v1132 = vpop.f32.mrf.mxu0
      %v1133 = vadd.f32 0.0, %v1132
      %1134 = vmatmul.f32.gmra.mxu0 %v1022
      %v1135 = vpop.f32.mrf.mxu0
      %v1136 = vadd.f32 0.0, %v1135
      %1137 = vmatmul.f32.gmra.mxu0 %v1023
      %v1138 = vpop.f32.mrf.mxu0
      %v1139 = vadd.f32 0.0, %v1138
      %1140 = vmatmul.f32.gmra.mxu0 %v1024
      %v1141 = vpop.f32.mrf.mxu0
      %v1142 = vadd.f32 0.0, %v1141
      %1143 = vmatmul.f32.gmra.mxu0 %v1025
      %v1144 = vpop.f32.mrf.mxu0
      %v1145 = vadd.f32 0.0, %v1144
      %1146 = vmatmul.f32.gmra.mxu0 %v1026
      %v1147 = vpop.f32.mrf.mxu0
      %v1148 = vadd.f32 0.0, %v1147
      %1149 = vmatmul.f32.gmra.mxu0 %v1027
      %v1150 = vpop.f32.mrf.mxu0
      %v1151 = vadd.f32 0.0, %v1150
      %1152 = vmatmul.f32.gmra.mxu0 %v1028
      %v1153 = vpop.f32.mrf.mxu0
      %v1154 = vadd.f32 0.0, %v1153
      %1155 = vmatmul.f32.gmra.mxu0 %v1029
      %v1156 = vpop.f32.mrf.mxu0
      %v1157 = vadd.f32 0.0, %v1156
      %1158 = vmatmul.f32.gmra.mxu0 %v1030
      %v1159 = vpop.f32.mrf.mxu0
      %v1160 = vadd.f32 0.0, %v1159
      %1161 = vmatmul.f32.gmra.mxu0 %v1031
      %v1162 = vpop.f32.mrf.mxu0
      %v1163 = vadd.f32 0.0, %v1162
      %1164 = vmatmul.f32.gmra.mxu0 %v1032
      %v1165 = vpop.f32.mrf.mxu0
      %v1166 = vadd.f32 0.0, %v1165
      %1167 = vmatmul.f32.gmra.mxu0 %v1033
      %v1168 = vpop.f32.mrf.mxu0
      %v1169 = vadd.f32 0.0, %v1168
      %1170 = vmatmul.f32.gmra.mxu0 %v1034
      %v1171 = vpop.f32.mrf.mxu0
      %v1172 = vadd.f32 0.0, %v1171
      %1173 = vmatmul.f32.gmra.mxu0 %v1035
      %v1174 = vpop.f32.mrf.mxu0
      %v1175 = vadd.f32 0.0, %v1174
      %1176 = vmatmul.f32.gmra.mxu0 %v1036
      %v1177 = vpop.f32.mrf.mxu0
      %v1178 = vadd.f32 0.0, %v1177
      %1179 = vmatmul.f32.gmra.mxu0 %v1037
      %v1180 = vpop.f32.mrf.mxu0
      %v1181 = vadd.f32 0.0, %v1180
      %1182 = vdwg.mxu0
      %1183 = vmatpush.msra.mxu0 %v1069
      %1184 = vmatpush.msra.mxu0 %v1067
      %1185 = vmatpush.msra.mxu0 %v1065
      %1186 = vmatpush.msra.mxu0 %v1063
      %1187 = vmatpush.msra.mxu0 %v1061
      %1188 = vmatpush.msra.mxu0 %v1059
      %1189 = vmatpush.msra.mxu0 %v1057
      %1190 = vmatpush.msra.mxu0 %v1055
      %1191 = vmatpush.msra.mxu0 %v1053
      %1192 = vmatpush.msra.mxu0 %v1051
      %1193 = vmatpush.msra.mxu0 %v1049
      %1194 = vmatpush.msra.mxu0 %v1047
      %1195 = vmatpush.msra.mxu0 %v1045
      %1196 = vmatpush.msra.mxu0 %v1043
      %1197 = vmatpush.msra.mxu0 %v1041
      %1198 = vmatpush.msra.mxu0 %v1039
      %1199 = vmatmul.f32.gmra.mxu0 %v1006
      %v1200 = vpop.f32.mrf.mxu0
      %v1201 = vadd.f32 0.0, %v1200
      %1202 = vmatmul.f32.gmra.mxu0 %v1007
      %v1203 = vpop.f32.mrf.mxu0
      %v1204 = vadd.f32 0.0, %v1203
      %1205 = vmatmul.f32.gmra.mxu0 %v1008
      %v1206 = vpop.f32.mrf.mxu0
      %v1207 = vadd.f32 0.0, %v1206
      %1208 = vmatmul.f32.gmra.mxu0 %v1009
      %v1209 = vpop.f32.mrf.mxu0
      %v1210 = vadd.f32 0.0, %v1209
      %1211 = vmatmul.f32.gmra.mxu0 %v1010
      %v1212 = vpop.f32.mrf.mxu0
      %v1213 = vadd.f32 0.0, %v1212
      %1214 = vmatmul.f32.gmra.mxu0 %v1011
      %v1215 = vpop.f32.mrf.mxu0
      %v1216 = vadd.f32 0.0, %v1215
      %1217 = vmatmul.f32.gmra.mxu0 %v1012
      %v1218 = vpop.f32.mrf.mxu0
      %v1219 = vadd.f32 0.0, %v1218
      %1220 = vmatmul.f32.gmra.mxu0 %v1013
      %v1221 = vpop.f32.mrf.mxu0
      %v1222 = vadd.f32 0.0, %v1221
      %1223 = vmatmul.f32.gmra.mxu0 %v1014
      %v1224 = vpop.f32.mrf.mxu0
      %v1225 = vadd.f32 0.0, %v1224
      %1226 = vmatmul.f32.gmra.mxu0 %v1015
      %v1227 = vpop.f32.mrf.mxu0
      %v1228 = vadd.f32 0.0, %v1227
      %1229 = vmatmul.f32.gmra.mxu0 %v1016
      %v1230 = vpop.f32.mrf.mxu0
      %v1231 = vadd.f32 0.0, %v1230
      %1232 = vmatmul.f32.gmra.mxu0 %v1017
      %v1233 = vpop.f32.mrf.mxu0
      %v1234 = vadd.f32 0.0, %v1233
      %1235 = vmatmul.f32.gmra.mxu0 %v1018
      %v1236 = vpop.f32.mrf.mxu0
      %v1237 = vadd.f32 0.0, %v1236
      %1238 = vmatmul.f32.gmra.mxu0 %v1019
      %v1239 = vpop.f32.mrf.mxu0
      %v1240 = vadd.f32 0.0, %v1239
      %1241 = vmatmul.f32.gmra.mxu0 %v1020
      %v1242 = vpop.f32.mrf.mxu0
      %v1243 = vadd.f32 0.0, %v1242
      %1244 = vmatmul.f32.gmra.mxu0 %v1021
      %v1245 = vpop.f32.mrf.mxu0
      %v1246 = vadd.f32 0.0, %v1245
      %1247 = vmatmul.f32.gmra.mxu0 %v1022
      %v1248 = vpop.f32.mrf.mxu0
      %v1249 = vadd.f32 0.0, %v1248
      %1250 = vmatmul.f32.gmra.mxu0 %v1023
      %v1251 = vpop.f32.mrf.mxu0
      %v1252 = vadd.f32 0.0, %v1251
      %1253 = vmatmul.f32.gmra.mxu0 %v1024
      %v1254 = vpop.f32.mrf.mxu0
      %v1255 = vadd.f32 0.0, %v1254
      %1256 = vmatmul.f32.gmra.mxu0 %v1025
      %v1257 = vpop.f32.mrf.mxu0
      %v1258 = vadd.f32 0.0, %v1257
      %1259 = vmatmul.f32.gmra.mxu0 %v1026
      %v1260 = vpop.f32.mrf.mxu0
      %v1261 = vadd.f32 0.0, %v1260
      %1262 = vmatmul.f32.gmra.mxu0 %v1027
      %v1263 = vpop.f32.mrf.mxu0
      %v1264 = vadd.f32 0.0, %v1263
      %1265 = vmatmul.f32.gmra.mxu0 %v1028
      %v1266 = vpop.f32.mrf.mxu0
      %v1267 = vadd.f32 0.0, %v1266
      %1268 = vmatmul.f32.gmra.mxu0 %v1029
      %v1269 = vpop.f32.mrf.mxu0
      %v1270 = vadd.f32 0.0, %v1269
      %1271 = vmatmul.f32.gmra.mxu0 %v1030
      %v1272 = vpop.f32.mrf.mxu0
      %v1273 = vadd.f32 0.0, %v1272
      %1274 = vmatmul.f32.gmra.mxu0 %v1031
      %v1275 = vpop.f32.mrf.mxu0
      %v1276 = vadd.f32 0.0, %v1275
      %1277 = vmatmul.f32.gmra.mxu0 %v1032
      %v1278 = vpop.f32.mrf.mxu0
      %v1279 = vadd.f32 0.0, %v1278
      %1280 = vmatmul.f32.gmra.mxu0 %v1033
      %v1281 = vpop.f32.mrf.mxu0
      %v1282 = vadd.f32 0.0, %v1281
      %1283 = vmatmul.f32.gmra.mxu0 %v1034
      %v1284 = vpop.f32.mrf.mxu0
      %v1285 = vadd.f32 0.0, %v1284
      %1286 = vmatmul.f32.gmra.mxu0 %v1035
      %v1287 = vpop.f32.mrf.mxu0
      %v1288 = vadd.f32 0.0, %v1287
      %1289 = vmatmul.f32.gmra.mxu0 %v1036
      %v1290 = vpop.f32.mrf.mxu0
      %v1291 = vadd.f32 0.0, %v1290
      %1292 = vmatmul.f32.gmra.mxu0 %v1037
      %v1293 = vpop.f32.mrf.mxu0
      %v1294 = vadd.f32 0.0, %v1293
      %1295 = vdwg.mxu0
      %1296 = vst [vmem:[%s7] sm:$0xff] %v1088
      %1297 = vst [vmem:[%s7 + $0x8] sm:$0xff] %v1201
      %1298 = vst [vmem:[%s7 + $0x10] sm:$0xff] %v1091
      %1299 = vst [vmem:[%s7 + $0x18] sm:$0xff] %v1204
      %1300 = vst [vmem:[%s7 + $0x20] sm:$0xff] %v1094
      %1301 = vst [vmem:[%s7 + $0x28] sm:$0xff] %v1207
      %1302 = vst [vmem:[%s7 + $0x30] sm:$0xff] %v1097
      %1303 = vst [vmem:[%s7 + $0x38] sm:$0xff] %v1210
      %1304 = vst [vmem:[%s7 + $0x40] sm:$0xff] %v1100
      %1305 = vst [vmem:[%s7 + $0x48] sm:$0xff] %v1213
      %1306 = vst [vmem:[%s7 + $0x50] sm:$0xff] %v1103
      %1307 = vst [vmem:[%s7 + $0x58] sm:$0xff] %v1216
      %1308 = vst [vmem:[%s7 + $0x60] sm:$0xff] %v1106
      %1309 = vst [vmem:[%s7 + $0x68] sm:$0xff] %v1219
      %1310 = vst [vmem:[%s7 + $0x70] sm:$0xff] %v1109
      %1311 = vst [vmem:[%s7 + $0x78] sm:$0xff] %v1222
      %1312 = vst [vmem:[%s7 + $0x80] sm:$0xff] %v1112
      %1313 = vst [vmem:[%s7 + $0x88] sm:$0xff] %v1225
      %1314 = vst [vmem:[%s7 + $0x90] sm:$0xff] %v1115
      %1315 = vst [vmem:[%s7 + $0x98] sm:$0xff] %v1228
      %1316 = vst [vmem:[%s7 + $0xa0] sm:$0xff] %v1118
      %1317 = vst [vmem:[%s7 + $0xa8] sm:$0xff] %v1231
      %1318 = vst [vmem:[%s7 + $0xb0] sm:$0xff] %v1121
      %1319 = vst [vmem:[%s7 + $0xb8] sm:$0xff] %v1234
      %1320 = vst [vmem:[%s7 + $0xc0] sm:$0xff] %v1124
      %1321 = vst [vmem:[%s7 + $0xc8] sm:$0xff] %v1237
      %1322 = vst [vmem:[%s7 + $0xd0] sm:$0xff] %v1127
      %1323 = vst [vmem:[%s7 + $0xd8] sm:$0xff] %v1240
      %1324 = vst [vmem:[%s7 + $0xe0] sm:$0xff] %v1130
      %1325 = vst [vmem:[%s7 + $0xe8] sm:$0xff] %v1243
      %1326 = vst [vmem:[%s7 + $0xf0] sm:$0xff] %v1133
      %1327 = vst [vmem:[%s7 + $0xf8] sm:$0xff] %v1246
      %1328 = vst [vmem:[%s7 + $0x100] sm:$0xff] %v1136
      %1329 = vst [vmem:[%s7 + $0x108] sm:$0xff] %v1249
      %1330 = vst [vmem:[%s7 + $0x110] sm:$0xff] %v1139
      %1331 = vst [vmem:[%s7 + $0x118] sm:$0xff] %v1252
      %1332 = vst [vmem:[%s7 + $0x120] sm:$0xff] %v1142
      %1333 = vst [vmem:[%s7 + $0x128] sm:$0xff] %v1255
      %1334 = vst [vmem:[%s7 + $0x130] sm:$0xff] %v1145
      %1335 = vst [vmem:[%s7 + $0x138] sm:$0xff] %v1258
      %1336 = vst [vmem:[%s7 + $0x140] sm:$0xff] %v1148
      %1337 = vst [vmem:[%s7 + $0x148] sm:$0xff] %v1261
      %1338 = vst [vmem:[%s7 + $0x150] sm:$0xff] %v1151
      %1339 = vst [vmem:[%s7 + $0x158] sm:$0xff] %v1264
      %1340 = vst [vmem:[%s7 + $0x160] sm:$0xff] %v1154
      %1341 = vst [vmem:[%s7 + $0x168] sm:$0xff] %v1267
      %1342 = vst [vmem:[%s7 + $0x170] sm:$0xff] %v1157
      %1343 = vst [vmem:[%s7 + $0x178] sm:$0xff] %v1270
      %1344 = vst [vmem:[%s7 + $0x180] sm:$0xff] %v1160
      %1345 = vst [vmem:[%s7 + $0x188] sm:$0xff] %v1273
      %1346 = vst [vmem:[%s7 + $0x190] sm:$0xff] %v1163
      %1347 = vst [vmem:[%s7 + $0x198] sm:$0xff] %v1276
      %1348 = vst [vmem:[%s7 + $0x1a0] sm:$0xff] %v1166
      %1349 = vst [vmem:[%s7 + $0x1a8] sm:$0xff] %v1279
      %1350 = vst [vmem:[%s7 + $0x1b0] sm:$0xff] %v1169
      %1351 = vst [vmem:[%s7 + $0x1b8] sm:$0xff] %v1282
      %1352 = vst [vmem:[%s7 + $0x1c0] sm:$0xff] %v1172
      %1353 = vst [vmem:[%s7 + $0x1c8] sm:$0xff] %v1285
      %1354 = vst [vmem:[%s7 + $0x1d0] sm:$0xff] %v1175
      %1355 = vst [vmem:[%s7 + $0x1d8] sm:$0xff] %v1288
      %1356 = vst [vmem:[%s7 + $0x1e0] sm:$0xff] %v1178
      %1357 = vst [vmem:[%s7 + $0x1e8] sm:$0xff] %v1291
      %1358 = vst [vmem:[%s7 + $0x1f0] sm:$0xff] %v1181
      %1359 = vst [vmem:[%s7 + $0x1f8] sm:$0xff] %v1294
    $region113: #{improved_gae_forward.6} parent=1 // pred_fallthru
      _
    // Predicated region
    $region114: #{improved_gae_forward.6} parent=1 // pred_check
      _
    $region115: #{improved_gae_forward.6} parent=1 // pred_check_branch
      %1361 = sbr.rel (0) target = $region117
    $region116: #{improved_gae_forward.6} parent=1 // pred_region
      _
    $region117: #{improved_gae_forward.6} parent=1 // pred_fallthru
      _
    // Predicated region
    $region118: #{improved_gae_forward.6} parent=1 // pred_check
      _
    $region119: #{improved_gae_forward.6} parent=1 // pred_check_branch
      %1363 = sbr.rel (0) target = $region121
    $region120: #{improved_gae_forward.6} parent=1 // pred_region
      _
    $region121: #{improved_gae_forward.6} parent=1 // pred_fallthru
      _

// kernel: improved_gae_forward.8
$region0: #{improved_gae_forward.8}
  #allocation0 [shape = 'u32[]', space=smem, size = 0x4, offset = 0x4, fixed_abs, tag = 'smem constant byte address 0x4 - core index']
  #allocation1 [shape = 'u32[72,128]{1,0:T(1,128)}', space=vmem, size = 0x9000, scoped, tag = 'internal scratch']
  #allocation2 [shape = 'f32[256,128]{1,0:T(8,128)}', space=vmem, size = 0x20000, scoped, tag = 'scratch operand']
  %s0 = inlined_call_operand.vmem [shape: f32[256,256], index: 0, kind: input, shape index: {}]
  %s1 = inlined_call_operand.vmem [shape: f32[256,128], index: 1, kind: input, shape index: {}]
  %s2 = inlined_call_operand.vmem [shape: f32[256,128], index: 2, kind: input, shape index: {}]
  %s3 = inlined_call_operand.vmem [shape: f32[1,128], index: 3, kind: input, shape index: {}]
  %s4 = inlined_call_operand.vmem [shape: f32[256,128], index: 4, kind: output, shape index: {}]
  %s5 = sld [smem:[#allocation0]]
  $region34: #{improved_gae_forward.8} parent=0
    _
  %s7 = ssub.s32 1, %s5
  %s8 = scalar_select 0, %s7, %s5
  // Predicated region
  $region2: #{improved_gae_forward.8} parent=0 // pred_check
    _
  $region3: #{improved_gae_forward.8} parent=0 // pred_check_branch
    %10 = sbr.rel (0) target = $region5
  $region4: #{improved_gae_forward.8} parent=0 // pred_region
    _
  $region5: #{improved_gae_forward.8} parent=0 // pred_fallthru
    _
  // Predicated region
  $region6: #{improved_gae_forward.8} parent=0 // pred_check
    _
  $region7: #{improved_gae_forward.8} parent=0 // pred_check_branch
    %12 = sbr.rel (0) target = $region9
  $region8: #{improved_gae_forward.8} parent=0 // pred_region
    _
  $region9: #{improved_gae_forward.8} parent=0 // pred_fallthru
    _
  // Predicated region
  $region10: #{improved_gae_forward.8} parent=0 // pred_check
    _
  $region11: #{improved_gae_forward.8} parent=0 // pred_check_branch
    %14 = sbr.rel (0) target = $region13
  $region12: #{improved_gae_forward.8} parent=0 // pred_region
    _
  $region13: #{improved_gae_forward.8} parent=0 // pred_fallthru
    _
  // Predicated region
  $region14: #{improved_gae_forward.8} parent=0 // pred_check
    _
  $region15: #{improved_gae_forward.8} parent=0 // pred_check_branch
    %16 = sbr.rel (0) target = $region17
  $region16: #{improved_gae_forward.8} parent=0 // pred_region
    _
  $region17: #{improved_gae_forward.8} parent=0 // pred_fallthru
    _
  %p17 = scmp.eq.s32.totalorder 0, 0
  // Predicated region
  $region18: #{improved_gae_forward.8} parent=0 // pred_check
    %p18 = pneg %p17
  $region19: #{improved_gae_forward.8} parent=0 // pred_check_branch
    %20 = sbr.rel (%p18) target = $region21
  $region20: #{improved_gae_forward.8} parent=0 // pred_region
    %21 = vst [vmem:[#allocation2] sm:$0xff] 0.0
    %22 = vst [vmem:[#allocation2 + $0x8] sm:$0xff] 0.0
    %23 = vst [vmem:[#allocation2 + $0x10] sm:$0xff] 0.0
    %24 = vst [vmem:[#allocation2 + $0x18] sm:$0xff] 0.0
    %25 = vst [vmem:[#allocation2 + $0x20] sm:$0xff] 0.0
    %26 = vst [vmem:[#allocation2 + $0x28] sm:$0xff] 0.0
    %27 = vst [vmem:[#allocation2 + $0x30] sm:$0xff] 0.0
    %28 = vst [vmem:[#allocation2 + $0x38] sm:$0xff] 0.0
    %29 = vst [vmem:[#allocation2 + $0x40] sm:$0xff] 0.0
    %30 = vst [vmem:[#allocation2 + $0x48] sm:$0xff] 0.0
    %31 = vst [vmem:[#allocation2 + $0x50] sm:$0xff] 0.0
    %32 = vst [vmem:[#allocation2 + $0x58] sm:$0xff] 0.0
    %33 = vst [vmem:[#allocation2 + $0x60] sm:$0xff] 0.0
    %34 = vst [vmem:[#allocation2 + $0x68] sm:$0xff] 0.0
    %35 = vst [vmem:[#allocation2 + $0x70] sm:$0xff] 0.0
    %36 = vst [vmem:[#allocation2 + $0x78] sm:$0xff] 0.0
    %37 = vst [vmem:[#allocation2 + $0x80] sm:$0xff] 0.0
    %38 = vst [vmem:[#allocation2 + $0x88] sm:$0xff] 0.0
    %39 = vst [vmem:[#allocation2 + $0x90] sm:$0xff] 0.0
    %40 = vst [vmem:[#allocation2 + $0x98] sm:$0xff] 0.0
    %41 = vst [vmem:[#allocation2 + $0xa0] sm:$0xff] 0.0
    %42 = vst [vmem:[#allocation2 + $0xa8] sm:$0xff] 0.0
    %43 = vst [vmem:[#allocation2 + $0xb0] sm:$0xff] 0.0
    %44 = vst [vmem:[#allocation2 + $0xb8] sm:$0xff] 0.0
    %45 = vst [vmem:[#allocation2 + $0xc0] sm:$0xff] 0.0
    %46 = vst [vmem:[#allocation2 + $0xc8] sm:$0xff] 0.0
    %47 = vst [vmem:[#allocation2 + $0xd0] sm:$0xff] 0.0
    %48 = vst [vmem:[#allocation2 + $0xd8] sm:$0xff] 0.0
    %49 = vst [vmem:[#allocation2 + $0xe0] sm:$0xff] 0.0
    %50 = vst [vmem:[#allocation2 + $0xe8] sm:$0xff] 0.0
    %51 = vst [vmem:[#allocation2 + $0xf0] sm:$0xff] 0.0
    %52 = vst [vmem:[#allocation2 + $0xf8] sm:$0xff] 0.0
  $region21: #{improved_gae_forward.8} parent=0 // pred_fallthru
    _
  %v53 = vld [vmem:[#allocation2] sm:$0xff]
  %v54 = vld [vmem:[#allocation2 + $0x8] sm:$0xff]
  %v55 = vld [vmem:[#allocation2 + $0x10] sm:$0xff]
  %v56 = vld [vmem:[#allocation2 + $0x18] sm:$0xff]
  %v57 = vld [vmem:[#allocation2 + $0x20] sm:$0xff]
  %v58 = vld [vmem:[#allocation2 + $0x28] sm:$0xff]
  %v59 = vld [vmem:[#allocation2 + $0x30] sm:$0xff]
  %v60 = vld [vmem:[#allocation2 + $0x38] sm:$0xff]
  %v61 = vld [vmem:[#allocation2 + $0x40] sm:$0xff]
  %v62 = vld [vmem:[#allocation2 + $0x48] sm:$0xff]
  %v63 = vld [vmem:[#allocation2 + $0x50] sm:$0xff]
  %v64 = vld [vmem:[#allocation2 + $0x58] sm:$0xff]
  %v65 = vld [vmem:[#allocation2 + $0x60] sm:$0xff]
  %v66 = vld [vmem:[#allocation2 + $0x68] sm:$0xff]
  %v67 = vld [vmem:[#allocation2 + $0x70] sm:$0xff]
  %v68 = vld [vmem:[#allocation2 + $0x78] sm:$0xff]
  %v69 = vld [vmem:[#allocation2 + $0x80] sm:$0xff]
  %v70 = vld [vmem:[#allocation2 + $0x88] sm:$0xff]
  %v71 = vld [vmem:[#allocation2 + $0x90] sm:$0xff]
  %v72 = vld [vmem:[#allocation2 + $0x98] sm:$0xff]
  %v73 = vld [vmem:[#allocation2 + $0xa0] sm:$0xff]
  %v74 = vld [vmem:[#allocation2 + $0xa8] sm:$0xff]
  %v75 = vld [vmem:[#allocation2 + $0xb0] sm:$0xff]
  %v76 = vld [vmem:[#allocation2 + $0xb8] sm:$0xff]
  %v77 = vld [vmem:[#allocation2 + $0xc0] sm:$0xff]
  %v78 = vld [vmem:[#allocation2 + $0xc8] sm:$0xff]
  %v79 = vld [vmem:[#allocation2 + $0xd0] sm:$0xff]
  %v80 = vld [vmem:[#allocation2 + $0xd8] sm:$0xff]
  %v81 = vld [vmem:[#allocation2 + $0xe0] sm:$0xff]
  %v82 = vld [vmem:[#allocation2 + $0xe8] sm:$0xff]
  %v83 = vld [vmem:[#allocation2 + $0xf0] sm:$0xff]
  %v84 = vld [vmem:[#allocation2 + $0xf8] sm:$0xff]
  %v85 = vld [vmem:[%s0] sm:$0xff]
  %v86 = vld [vmem:[%s0 + $0x8] sm:$0xff]
  %v87 = vld [vmem:[%s0 + $0x10] sm:$0xff]
  %v88 = vld [vmem:[%s0 + $0x18] sm:$0xff]
  %v89 = vld [vmem:[%s0 + $0x20] sm:$0xff]
  %v90 = vld [vmem:[%s0 + $0x28] sm:$0xff]
  %v91 = vld [vmem:[%s0 + $0x30] sm:$0xff]
  %v92 = vld [vmem:[%s0 + $0x38] sm:$0xff]
  %v93 = vld [vmem:[%s0 + $0x40] sm:$0xff]
  %v94 = vld [vmem:[%s0 + $0x48] sm:$0xff]
  %v95 = vld [vmem:[%s0 + $0x50] sm:$0xff]
  %v96 = vld [vmem:[%s0 + $0x58] sm:$0xff]
  %v97 = vld [vmem:[%s0 + $0x60] sm:$0xff]
  %v98 = vld [vmem:[%s0 + $0x68] sm:$0xff]
  %v99 = vld [vmem:[%s0 + $0x70] sm:$0xff]
  %v100 = vld [vmem:[%s0 + $0x78] sm:$0xff]
  %v101 = vld [vmem:[%s0 + $0x80] sm:$0xff]
  %v102 = vld [vmem:[%s0 + $0x88] sm:$0xff]
  %v103 = vld [vmem:[%s0 + $0x90] sm:$0xff]
  %v104 = vld [vmem:[%s0 + $0x98] sm:$0xff]
  %v105 = vld [vmem:[%s0 + $0xa0] sm:$0xff]
  %v106 = vld [vmem:[%s0 + $0xa8] sm:$0xff]
  %v107 = vld [vmem:[%s0 + $0xb0] sm:$0xff]
  %v108 = vld [vmem:[%s0 + $0xb8] sm:$0xff]
  %v109 = vld [vmem:[%s0 + $0xc0] sm:$0xff]
  %v110 = vld [vmem:[%s0 + $0xc8] sm:$0xff]
  %v111 = vld [vmem:[%s0 + $0xd0] sm:$0xff]
  %v112 = vld [vmem:[%s0 + $0xd8] sm:$0xff]
  %v113 = vld [vmem:[%s0 + $0xe0] sm:$0xff]
  %v114 = vld [vmem:[%s0 + $0xe8] sm:$0xff]
  %v115 = vld [vmem:[%s0 + $0xf0] sm:$0xff]
  %v116 = vld [vmem:[%s0 + $0xf8] sm:$0xff]
  %v117 = vld [vmem:[%s0 + $0x100] sm:$0xff]
  %v118 = vld [vmem:[%s0 + $0x108] sm:$0xff]
  %v119 = vld [vmem:[%s0 + $0x110] sm:$0xff]
  %v120 = vld [vmem:[%s0 + $0x118] sm:$0xff]
  %v121 = vld [vmem:[%s0 + $0x120] sm:$0xff]
  %v122 = vld [vmem:[%s0 + $0x128] sm:$0xff]
  %v123 = vld [vmem:[%s0 + $0x130] sm:$0xff]
  %v124 = vld [vmem:[%s0 + $0x138] sm:$0xff]
  %v125 = vld [vmem:[%s0 + $0x140] sm:$0xff]
  %v126 = vld [vmem:[%s0 + $0x148] sm:$0xff]
  %v127 = vld [vmem:[%s0 + $0x150] sm:$0xff]
  %v128 = vld [vmem:[%s0 + $0x158] sm:$0xff]
  %v129 = vld [vmem:[%s0 + $0x160] sm:$0xff]
  %v130 = vld [vmem:[%s0 + $0x168] sm:$0xff]
  %v131 = vld [vmem:[%s0 + $0x170] sm:$0xff]
  %v132 = vld [vmem:[%s0 + $0x178] sm:$0xff]
  %v133 = vld [vmem:[%s0 + $0x180] sm:$0xff]
  %v134 = vld [vmem:[%s0 + $0x188] sm:$0xff]
  %v135 = vld [vmem:[%s0 + $0x190] sm:$0xff]
  %v136 = vld [vmem:[%s0 + $0x198] sm:$0xff]
  %v137 = vld [vmem:[%s0 + $0x1a0] sm:$0xff]
  %v138 = vld [vmem:[%s0 + $0x1a8] sm:$0xff]
  %v139 = vld [vmem:[%s0 + $0x1b0] sm:$0xff]
  %v140 = vld [vmem:[%s0 + $0x1b8] sm:$0xff]
  %v141 = vld [vmem:[%s0 + $0x1c0] sm:$0xff]
  %v142 = vld [vmem:[%s0 + $0x1c8] sm:$0xff]
  %v143 = vld [vmem:[%s0 + $0x1d0] sm:$0xff]
  %v144 = vld [vmem:[%s0 + $0x1d8] sm:$0xff]
  %v145 = vld [vmem:[%s0 + $0x1e0] sm:$0xff]
  %v146 = vld [vmem:[%s0 + $0x1e8] sm:$0xff]
  %v147 = vld [vmem:[%s0 + $0x1f0] sm:$0xff]
  %v148 = vld [vmem:[%s0 + $0x1f8] sm:$0xff]
  %v149 = vld [vmem:[%s1] sm:$0xff]
  %v150 = vld [vmem:[%s1 + $0x8] sm:$0xff]
  %v151 = vld [vmem:[%s1 + $0x10] sm:$0xff]
  %v152 = vld [vmem:[%s1 + $0x18] sm:$0xff]
  %v153 = vld [vmem:[%s1 + $0x20] sm:$0xff]
  %v154 = vld [vmem:[%s1 + $0x28] sm:$0xff]
  %v155 = vld [vmem:[%s1 + $0x30] sm:$0xff]
  %v156 = vld [vmem:[%s1 + $0x38] sm:$0xff]
  %v157 = vld [vmem:[%s1 + $0x40] sm:$0xff]
  %v158 = vld [vmem:[%s1 + $0x48] sm:$0xff]
  %v159 = vld [vmem:[%s1 + $0x50] sm:$0xff]
  %v160 = vld [vmem:[%s1 + $0x58] sm:$0xff]
  %v161 = vld [vmem:[%s1 + $0x60] sm:$0xff]
  %v162 = vld [vmem:[%s1 + $0x68] sm:$0xff]
  %v163 = vld [vmem:[%s1 + $0x70] sm:$0xff]
  %v164 = vld [vmem:[%s1 + $0x78] sm:$0xff]
  %v165 = vld [vmem:[%s1 + $0x80] sm:$0xff]
  %v166 = vld [vmem:[%s1 + $0x88] sm:$0xff]
  %v167 = vld [vmem:[%s1 + $0x90] sm:$0xff]
  %v168 = vld [vmem:[%s1 + $0x98] sm:$0xff]
  %v169 = vld [vmem:[%s1 + $0xa0] sm:$0xff]
  %v170 = vld [vmem:[%s1 + $0xa8] sm:$0xff]
  %v171 = vld [vmem:[%s1 + $0xb0] sm:$0xff]
  %v172 = vld [vmem:[%s1 + $0xb8] sm:$0xff]
  %v173 = vld [vmem:[%s1 + $0xc0] sm:$0xff]
  %v174 = vld [vmem:[%s1 + $0xc8] sm:$0xff]
  %v175 = vld [vmem:[%s1 + $0xd0] sm:$0xff]
  %v176 = vld [vmem:[%s1 + $0xd8] sm:$0xff]
  %v177 = vld [vmem:[%s1 + $0xe0] sm:$0xff]
  %v178 = vld [vmem:[%s1 + $0xe8] sm:$0xff]
  %v179 = vld [vmem:[%s1 + $0xf0] sm:$0xff]
  %v180 = vld [vmem:[%s1 + $0xf8] sm:$0xff]
  %181 = vmatpush.msra.mxu0 %v164
  %182 = vmatpush.msra.mxu0 %v163
  %183 = vmatpush.msra.mxu0 %v162
  %184 = vmatpush.msra.mxu0 %v161
  %185 = vmatpush.msra.mxu0 %v160
  %186 = vmatpush.msra.mxu0 %v159
  %187 = vmatpush.msra.mxu0 %v158
  %188 = vmatpush.msra.mxu0 %v157
  %189 = vmatpush.msra.mxu0 %v156
  %190 = vmatpush.msra.mxu0 %v155
  %191 = vmatpush.msra.mxu0 %v154
  %192 = vmatpush.msra.mxu0 %v153
  %193 = vmatpush.msra.mxu0 %v152
  %194 = vmatpush.msra.mxu0 %v151
  %195 = vmatpush.msra.mxu0 %v150
  %196 = vmatpush.msra.mxu0 %v149
  %197 = vmatmul.f32.gmra.mxu0 %v85
  %v198 = vpop.f32.mrf.mxu0
  %v199 = vadd.f32 0.0, %v198
  %200 = vmatmul.f32.gmra.mxu0 %v87
  %v201 = vpop.f32.mrf.mxu0
  %v202 = vadd.f32 0.0, %v201
  %203 = vmatmul.f32.gmra.mxu0 %v89
  %v204 = vpop.f32.mrf.mxu0
  %v205 = vadd.f32 0.0, %v204
  %206 = vmatmul.f32.gmra.mxu0 %v91
  %v207 = vpop.f32.mrf.mxu0
  %v208 = vadd.f32 0.0, %v207
  %209 = vmatmul.f32.gmra.mxu0 %v93
  %v210 = vpop.f32.mrf.mxu0
  %v211 = vadd.f32 0.0, %v210
  %212 = vmatmul.f32.gmra.mxu0 %v95
  %v213 = vpop.f32.mrf.mxu0
  %v214 = vadd.f32 0.0, %v213
  %215 = vmatmul.f32.gmra.mxu0 %v97
  %v216 = vpop.f32.mrf.mxu0
  %v217 = vadd.f32 0.0, %v216
  %218 = vmatmul.f32.gmra.mxu0 %v99
  %v219 = vpop.f32.mrf.mxu0
  %v220 = vadd.f32 0.0, %v219
  %221 = vmatmul.f32.gmra.mxu0 %v101
  %v222 = vpop.f32.mrf.mxu0
  %v223 = vadd.f32 0.0, %v222
  %224 = vmatmul.f32.gmra.mxu0 %v103
  %v225 = vpop.f32.mrf.mxu0
  %v226 = vadd.f32 0.0, %v225
  %227 = vmatmul.f32.gmra.mxu0 %v105
  %v228 = vpop.f32.mrf.mxu0
  %v229 = vadd.f32 0.0, %v228
  %230 = vmatmul.f32.gmra.mxu0 %v107
  %v231 = vpop.f32.mrf.mxu0
  %v232 = vadd.f32 0.0, %v231
  %233 = vmatmul.f32.gmra.mxu0 %v109
  %v234 = vpop.f32.mrf.mxu0
  %v235 = vadd.f32 0.0, %v234
  %236 = vmatmul.f32.gmra.mxu0 %v111
  %v237 = vpop.f32.mrf.mxu0
  %v238 = vadd.f32 0.0, %v237
  %239 = vmatmul.f32.gmra.mxu0 %v113
  %v240 = vpop.f32.mrf.mxu0
  %v241 = vadd.f32 0.0, %v240
  %242 = vmatmul.f32.gmra.mxu0 %v115
  %v243 = vpop.f32.mrf.mxu0
  %v244 = vadd.f32 0.0, %v243
  %245 = vmatmul.f32.gmra.mxu0 %v117
  %v246 = vpop.f32.mrf.mxu0
  %v247 = vadd.f32 0.0, %v246
  %248 = vmatmul.f32.gmra.mxu0 %v119
  %v249 = vpop.f32.mrf.mxu0
  %v250 = vadd.f32 0.0, %v249
  %251 = vmatmul.f32.gmra.mxu0 %v121
  %v252 = vpop.f32.mrf.mxu0
  %v253 = vadd.f32 0.0, %v252
  %254 = vmatmul.f32.gmra.mxu0 %v123
  %v255 = vpop.f32.mrf.mxu0
  %v256 = vadd.f32 0.0, %v255
  %257 = vmatmul.f32.gmra.mxu0 %v125
  %v258 = vpop.f32.mrf.mxu0
  %v259 = vadd.f32 0.0, %v258
  %260 = vmatmul.f32.gmra.mxu0 %v127
  %v261 = vpop.f32.mrf.mxu0
  %v262 = vadd.f32 0.0, %v261
  %263 = vmatmul.f32.gmra.mxu0 %v129
  %v264 = vpop.f32.mrf.mxu0
  %v265 = vadd.f32 0.0, %v264
  %266 = vmatmul.f32.gmra.mxu0 %v131
  %v267 = vpop.f32.mrf.mxu0
  %v268 = vadd.f32 0.0, %v267
  %269 = vmatmul.f32.gmra.mxu0 %v133
  %v270 = vpop.f32.mrf.mxu0
  %v271 = vadd.f32 0.0, %v270
  %272 = vmatmul.f32.gmra.mxu0 %v135
  %v273 = vpop.f32.mrf.mxu0
  %v274 = vadd.f32 0.0, %v273
  %275 = vmatmul.f32.gmra.mxu0 %v137
  %v276 = vpop.f32.mrf.mxu0
  %v277 = vadd.f32 0.0, %v276
  %278 = vmatmul.f32.gmra.mxu0 %v139
  %v279 = vpop.f32.mrf.mxu0
  %v280 = vadd.f32 0.0, %v279
  %281 = vmatmul.f32.gmra.mxu0 %v141
  %v282 = vpop.f32.mrf.mxu0
  %v283 = vadd.f32 0.0, %v282
  %284 = vmatmul.f32.gmra.mxu0 %v143
  %v285 = vpop.f32.mrf.mxu0
  %v286 = vadd.f32 0.0, %v285
  %287 = vmatmul.f32.gmra.mxu0 %v145
  %v288 = vpop.f32.mrf.mxu0
  %v289 = vadd.f32 0.0, %v288
  %290 = vmatmul.f32.gmra.mxu0 %v147
  %v291 = vpop.f32.mrf.mxu0
  %v292 = vadd.f32 0.0, %v291
  %293 = vdwg.mxu0
  %294 = vmatpush.msra.mxu0 %v180
  %295 = vmatpush.msra.mxu0 %v179
  %296 = vmatpush.msra.mxu0 %v178
  %297 = vmatpush.msra.mxu0 %v177
  %298 = vmatpush.msra.mxu0 %v176
  %299 = vmatpush.msra.mxu0 %v175
  %300 = vmatpush.msra.mxu0 %v174
  %301 = vmatpush.msra.mxu0 %v173
  %302 = vmatpush.msra.mxu0 %v172
  %303 = vmatpush.msra.mxu0 %v171
  %304 = vmatpush.msra.mxu0 %v170
  %305 = vmatpush.msra.mxu0 %v169
  %306 = vmatpush.msra.mxu0 %v168
  %307 = vmatpush.msra.mxu0 %v167
  %308 = vmatpush.msra.mxu0 %v166
  %309 = vmatpush.msra.mxu0 %v165
  %310 = vmatmul.f32.gmra.mxu0 %v86
  %v311 = vpop.f32.mrf.mxu0
  %v312 = vadd.f32 %v199, %v311
  %313 = vmatmul.f32.gmra.mxu0 %v88
  %v314 = vpop.f32.mrf.mxu0
  %v315 = vadd.f32 %v202, %v314
  %316 = vmatmul.f32.gmra.mxu0 %v90
  %v317 = vpop.f32.mrf.mxu0
  %v318 = vadd.f32 %v205, %v317
  %319 = vmatmul.f32.gmra.mxu0 %v92
  %v320 = vpop.f32.mrf.mxu0
  %v321 = vadd.f32 %v208, %v320
  %322 = vmatmul.f32.gmra.mxu0 %v94
  %v323 = vpop.f32.mrf.mxu0
  %v324 = vadd.f32 %v211, %v323
  %325 = vmatmul.f32.gmra.mxu0 %v96
  %v326 = vpop.f32.mrf.mxu0
  %v327 = vadd.f32 %v214, %v326
  %328 = vmatmul.f32.gmra.mxu0 %v98
  %v329 = vpop.f32.mrf.mxu0
  %v330 = vadd.f32 %v217, %v329
  %331 = vmatmul.f32.gmra.mxu0 %v100
  %v332 = vpop.f32.mrf.mxu0
  %v333 = vadd.f32 %v220, %v332
  %334 = vmatmul.f32.gmra.mxu0 %v102
  %v335 = vpop.f32.mrf.mxu0
  %v336 = vadd.f32 %v223, %v335
  %337 = vmatmul.f32.gmra.mxu0 %v104
  %v338 = vpop.f32.mrf.mxu0
  %v339 = vadd.f32 %v226, %v338
  %340 = vmatmul.f32.gmra.mxu0 %v106
  %v341 = vpop.f32.mrf.mxu0
  %v342 = vadd.f32 %v229, %v341
  %343 = vmatmul.f32.gmra.mxu0 %v108
  %v344 = vpop.f32.mrf.mxu0
  %v345 = vadd.f32 %v232, %v344
  %346 = vmatmul.f32.gmra.mxu0 %v110
  %v347 = vpop.f32.mrf.mxu0
  %v348 = vadd.f32 %v235, %v347
  %349 = vmatmul.f32.gmra.mxu0 %v112
  %v350 = vpop.f32.mrf.mxu0
  %v351 = vadd.f32 %v238, %v350
  %352 = vmatmul.f32.gmra.mxu0 %v114
  %v353 = vpop.f32.mrf.mxu0
  %v354 = vadd.f32 %v241, %v353
  %355 = vmatmul.f32.gmra.mxu0 %v116
  %v356 = vpop.f32.mrf.mxu0
  %v357 = vadd.f32 %v244, %v356
  %358 = vmatmul.f32.gmra.mxu0 %v118
  %v359 = vpop.f32.mrf.mxu0
  %v360 = vadd.f32 %v247, %v359
  %361 = vmatmul.f32.gmra.mxu0 %v120
  %v362 = vpop.f32.mrf.mxu0
  %v363 = vadd.f32 %v250, %v362
  %364 = vmatmul.f32.gmra.mxu0 %v122
  %v365 = vpop.f32.mrf.mxu0
  %v366 = vadd.f32 %v253, %v365
  %367 = vmatmul.f32.gmra.mxu0 %v124
  %v368 = vpop.f32.mrf.mxu0
  %v369 = vadd.f32 %v256, %v368
  %370 = vmatmul.f32.gmra.mxu0 %v126
  %v371 = vpop.f32.mrf.mxu0
  %v372 = vadd.f32 %v259, %v371
  %373 = vmatmul.f32.gmra.mxu0 %v128
  %v374 = vpop.f32.mrf.mxu0
  %v375 = vadd.f32 %v262, %v374
  %376 = vmatmul.f32.gmra.mxu0 %v130
  %v377 = vpop.f32.mrf.mxu0
  %v378 = vadd.f32 %v265, %v377
  %379 = vmatmul.f32.gmra.mxu0 %v132
  %v380 = vpop.f32.mrf.mxu0
  %v381 = vadd.f32 %v268, %v380
  %382 = vmatmul.f32.gmra.mxu0 %v134
  %v383 = vpop.f32.mrf.mxu0
  %v384 = vadd.f32 %v271, %v383
  %385 = vmatmul.f32.gmra.mxu0 %v136
  %v386 = vpop.f32.mrf.mxu0
  %v387 = vadd.f32 %v274, %v386
  %388 = vmatmul.f32.gmra.mxu0 %v138
  %v389 = vpop.f32.mrf.mxu0
  %v390 = vadd.f32 %v277, %v389
  %391 = vmatmul.f32.gmra.mxu0 %v140
  %v392 = vpop.f32.mrf.mxu0
  %v393 = vadd.f32 %v280, %v392
  %394 = vmatmul.f32.gmra.mxu0 %v142
  %v395 = vpop.f32.mrf.mxu0
  %v396 = vadd.f32 %v283, %v395
  %397 = vmatmul.f32.gmra.mxu0 %v144
  %v398 = vpop.f32.mrf.mxu0
  %v399 = vadd.f32 %v286, %v398
  %400 = vmatmul.f32.gmra.mxu0 %v146
  %v401 = vpop.f32.mrf.mxu0
  %v402 = vadd.f32 %v289, %v401
  %403 = vmatmul.f32.gmra.mxu0 %v148
  %v404 = vpop.f32.mrf.mxu0
  %v405 = vadd.f32 %v292, %v404
  %406 = vdwg.mxu0
  %v407 = vadd.f32 %v53, %v312
  %v408 = vadd.f32 %v54, %v315
  %v409 = vadd.f32 %v55, %v318
  %v410 = vadd.f32 %v56, %v321
  %v411 = vadd.f32 %v57, %v324
  %v412 = vadd.f32 %v58, %v327
  %v413 = vadd.f32 %v59, %v330
  %v414 = vadd.f32 %v60, %v333
  %v415 = vadd.f32 %v61, %v336
  %v416 = vadd.f32 %v62, %v339
  %v417 = vadd.f32 %v63, %v342
  %v418 = vadd.f32 %v64, %v345
  %v419 = vadd.f32 %v65, %v348
  %v420 = vadd.f32 %v66, %v351
  %v421 = vadd.f32 %v67, %v354
  %v422 = vadd.f32 %v68, %v357
  %v423 = vadd.f32 %v69, %v360
  %v424 = vadd.f32 %v70, %v363
  %v425 = vadd.f32 %v71, %v366
  %v426 = vadd.f32 %v72, %v369
  %v427 = vadd.f32 %v73, %v372
  %v428 = vadd.f32 %v74, %v375
  %v429 = vadd.f32 %v75, %v378
  %v430 = vadd.f32 %v76, %v381
  %v431 = vadd.f32 %v77, %v384
  %v432 = vadd.f32 %v78, %v387
  %v433 = vadd.f32 %v79, %v390
  %v434 = vadd.f32 %v80, %v393
  %v435 = vadd.f32 %v81, %v396
  %v436 = vadd.f32 %v82, %v399
  %v437 = vadd.f32 %v83, %v402
  %v438 = vadd.f32 %v84, %v405
  %439 = vst [vmem:[#allocation2] sm:$0xff] %v407
  %440 = vst [vmem:[#allocation2 + $0x8] sm:$0xff] %v408
  %441 = vst [vmem:[#allocation2 + $0x10] sm:$0xff] %v409
  %442 = vst [vmem:[#allocation2 + $0x18] sm:$0xff] %v410
  %443 = vst [vmem:[#allocation2 + $0x20] sm:$0xff] %v411
  %444 = vst [vmem:[#allocation2 + $0x28] sm:$0xff] %v412
  %445 = vst [vmem:[#allocation2 + $0x30] sm:$0xff] %v413
  %446 = vst [vmem:[#allocation2 + $0x38] sm:$0xff] %v414
  %447 = vst [vmem:[#allocation2 + $0x40] sm:$0xff] %v415
  %448 = vst [vmem:[#allocation2 + $0x48] sm:$0xff] %v416
  %449 = vst [vmem:[#allocation2 + $0x50] sm:$0xff] %v417
  %450 = vst [vmem:[#allocation2 + $0x58] sm:$0xff] %v418
  %451 = vst [vmem:[#allocation2 + $0x60] sm:$0xff] %v419
  %452 = vst [vmem:[#allocation2 + $0x68] sm:$0xff] %v420
  %453 = vst [vmem:[#allocation2 + $0x70] sm:$0xff] %v421
  %454 = vst [vmem:[#allocation2 + $0x78] sm:$0xff] %v422
  %455 = vst [vmem:[#allocation2 + $0x80] sm:$0xff] %v423
  %456 = vst [vmem:[#allocation2 + $0x88] sm:$0xff] %v424
  %457 = vst [vmem:[#allocation2 + $0x90] sm:$0xff] %v425
  %458 = vst [vmem:[#allocation2 + $0x98] sm:$0xff] %v426
  %459 = vst [vmem:[#allocation2 + $0xa0] sm:$0xff] %v427
  %460 = vst [vmem:[#allocation2 + $0xa8] sm:$0xff] %v428
  %461 = vst [vmem:[#allocation2 + $0xb0] sm:$0xff] %v429
  %462 = vst [vmem:[#allocation2 + $0xb8] sm:$0xff] %v430
  %463 = vst [vmem:[#allocation2 + $0xc0] sm:$0xff] %v431
  %464 = vst [vmem:[#allocation2 + $0xc8] sm:$0xff] %v432
  %465 = vst [vmem:[#allocation2 + $0xd0] sm:$0xff] %v433
  %466 = vst [vmem:[#allocation2 + $0xd8] sm:$0xff] %v434
  %467 = vst [vmem:[#allocation2 + $0xe0] sm:$0xff] %v435
  %468 = vst [vmem:[#allocation2 + $0xe8] sm:$0xff] %v436
  %469 = vst [vmem:[#allocation2 + $0xf0] sm:$0xff] %v437
  %470 = vst [vmem:[#allocation2 + $0xf8] sm:$0xff] %v438
  // Predicated region
  $region22: #{improved_gae_forward.8} parent=0 // pred_check
    %p471 = pneg %p17
  $region23: #{improved_gae_forward.8} parent=0 // pred_check_branch
    %473 = sbr.rel (%p471) target = $region25
  $region24: #{improved_gae_forward.8} parent=0 // pred_region
    %v474 = vld [vmem:[#allocation2] sm:$0xff]
    %v475 = vld [vmem:[#allocation2 + $0x8] sm:$0xff]
    %v476 = vld [vmem:[#allocation2 + $0x10] sm:$0xff]
    %v477 = vld [vmem:[#allocation2 + $0x18] sm:$0xff]
    %v478 = vld [vmem:[#allocation2 + $0x20] sm:$0xff]
    %v479 = vld [vmem:[#allocation2 + $0x28] sm:$0xff]
    %v480 = vld [vmem:[#allocation2 + $0x30] sm:$0xff]
    %v481 = vld [vmem:[#allocation2 + $0x38] sm:$0xff]
    %v482 = vld [vmem:[#allocation2 + $0x40] sm:$0xff]
    %v483 = vld [vmem:[#allocation2 + $0x48] sm:$0xff]
    %v484 = vld [vmem:[#allocation2 + $0x50] sm:$0xff]
    %v485 = vld [vmem:[#allocation2 + $0x58] sm:$0xff]
    %v486 = vld [vmem:[#allocation2 + $0x60] sm:$0xff]
    %v487 = vld [vmem:[#allocation2 + $0x68] sm:$0xff]
    %v488 = vld [vmem:[#allocation2 + $0x70] sm:$0xff]
    %v489 = vld [vmem:[#allocation2 + $0x78] sm:$0xff]
    %v490 = vld [vmem:[#allocation2 + $0x80] sm:$0xff]
    %v491 = vld [vmem:[#allocation2 + $0x88] sm:$0xff]
    %v492 = vld [vmem:[#allocation2 + $0x90] sm:$0xff]
    %v493 = vld [vmem:[#allocation2 + $0x98] sm:$0xff]
    %v494 = vld [vmem:[#allocation2 + $0xa0] sm:$0xff]
    %v495 = vld [vmem:[#allocation2 + $0xa8] sm:$0xff]
    %v496 = vld [vmem:[#allocation2 + $0xb0] sm:$0xff]
    %v497 = vld [vmem:[#allocation2 + $0xb8] sm:$0xff]
    %v498 = vld [vmem:[#allocation2 + $0xc0] sm:$0xff]
    %v499 = vld [vmem:[#allocation2 + $0xc8] sm:$0xff]
    %v500 = vld [vmem:[#allocation2 + $0xd0] sm:$0xff]
    %v501 = vld [vmem:[#allocation2 + $0xd8] sm:$0xff]
    %v502 = vld [vmem:[#allocation2 + $0xe0] sm:$0xff]
    %v503 = vld [vmem:[#allocation2 + $0xe8] sm:$0xff]
    %v504 = vld [vmem:[#allocation2 + $0xf0] sm:$0xff]
    %v505 = vld [vmem:[#allocation2 + $0xf8] sm:$0xff]
    %v506 = vld [vmem:[%s3] sm:$0x1]
    %v508 = vperm.slane %v506, 0
    %v510 = vadd.f32 %v474, %v508
    %v511 = vadd.f32 %v475, %v508
    %v512 = vadd.f32 %v476, %v508
    %v513 = vadd.f32 %v477, %v508
    %v514 = vadd.f32 %v478, %v508
    %v515 = vadd.f32 %v479, %v508
    %v516 = vadd.f32 %v480, %v508
    %v517 = vadd.f32 %v481, %v508
    %v518 = vadd.f32 %v482, %v508
    %v519 = vadd.f32 %v483, %v508
    %v520 = vadd.f32 %v484, %v508
    %v521 = vadd.f32 %v485, %v508
    %v522 = vadd.f32 %v486, %v508
    %v523 = vadd.f32 %v487, %v508
    %v524 = vadd.f32 %v488, %v508
    %v525 = vadd.f32 %v489, %v508
    %v526 = vadd.f32 %v490, %v508
    %v527 = vadd.f32 %v491, %v508
    %v528 = vadd.f32 %v492, %v508
    %v529 = vadd.f32 %v493, %v508
    %v530 = vadd.f32 %v494, %v508
    %v531 = vadd.f32 %v495, %v508
    %v532 = vadd.f32 %v496, %v508
    %v533 = vadd.f32 %v497, %v508
    %v534 = vadd.f32 %v498, %v508
    %v535 = vadd.f32 %v499, %v508
    %v536 = vadd.f32 %v500, %v508
    %v537 = vadd.f32 %v501, %v508
    %v538 = vadd.f32 %v502, %v508
    %v539 = vadd.f32 %v503, %v508
    %v540 = vadd.f32 %v504, %v508
    %v541 = vadd.f32 %v505, %v508
    %v542 = vld [vmem:[%s2] sm:$0xff]
    %v543 = vld [vmem:[%s2 + $0x8] sm:$0xff]
    %v544 = vld [vmem:[%s2 + $0x10] sm:$0xff]
    %v545 = vld [vmem:[%s2 + $0x18] sm:$0xff]
    %v546 = vld [vmem:[%s2 + $0x20] sm:$0xff]
    %v547 = vld [vmem:[%s2 + $0x28] sm:$0xff]
    %v548 = vld [vmem:[%s2 + $0x30] sm:$0xff]
    %v549 = vld [vmem:[%s2 + $0x38] sm:$0xff]
    %v550 = vld [vmem:[%s2 + $0x40] sm:$0xff]
    %v551 = vld [vmem:[%s2 + $0x48] sm:$0xff]
    %v552 = vld [vmem:[%s2 + $0x50] sm:$0xff]
    %v553 = vld [vmem:[%s2 + $0x58] sm:$0xff]
    %v554 = vld [vmem:[%s2 + $0x60] sm:$0xff]
    %v555 = vld [vmem:[%s2 + $0x68] sm:$0xff]
    %v556 = vld [vmem:[%s2 + $0x70] sm:$0xff]
    %v557 = vld [vmem:[%s2 + $0x78] sm:$0xff]
    %v558 = vld [vmem:[%s2 + $0x80] sm:$0xff]
    %v559 = vld [vmem:[%s2 + $0x88] sm:$0xff]
    %v560 = vld [vmem:[%s2 + $0x90] sm:$0xff]
    %v561 = vld [vmem:[%s2 + $0x98] sm:$0xff]
    %v562 = vld [vmem:[%s2 + $0xa0] sm:$0xff]
    %v563 = vld [vmem:[%s2 + $0xa8] sm:$0xff]
    %v564 = vld [vmem:[%s2 + $0xb0] sm:$0xff]
    %v565 = vld [vmem:[%s2 + $0xb8] sm:$0xff]
    %v566 = vld [vmem:[%s2 + $0xc0] sm:$0xff]
    %v567 = vld [vmem:[%s2 + $0xc8] sm:$0xff]
    %v568 = vld [vmem:[%s2 + $0xd0] sm:$0xff]
    %v569 = vld [vmem:[%s2 + $0xd8] sm:$0xff]
    %v570 = vld [vmem:[%s2 + $0xe0] sm:$0xff]
    %v571 = vld [vmem:[%s2 + $0xe8] sm:$0xff]
    %v572 = vld [vmem:[%s2 + $0xf0] sm:$0xff]
    %v573 = vld [vmem:[%s2 + $0xf8] sm:$0xff]
    %v574 = vadd.f32 %v510, %v542
    %v575 = vadd.f32 %v511, %v543
    %v576 = vadd.f32 %v512, %v544
    %v577 = vadd.f32 %v513, %v545
    %v578 = vadd.f32 %v514, %v546
    %v579 = vadd.f32 %v515, %v547
    %v580 = vadd.f32 %v516, %v548
    %v581 = vadd.f32 %v517, %v549
    %v582 = vadd.f32 %v518, %v550
    %v583 = vadd.f32 %v519, %v551
    %v584 = vadd.f32 %v520, %v552
    %v585 = vadd.f32 %v521, %v553
    %v586 = vadd.f32 %v522, %v554
    %v587 = vadd.f32 %v523, %v555
    %v588 = vadd.f32 %v524, %v556
    %v589 = vadd.f32 %v525, %v557
    %v590 = vadd.f32 %v526, %v558
    %v591 = vadd.f32 %v527, %v559
    %v592 = vadd.f32 %v528, %v560
    %v593 = vadd.f32 %v529, %v561
    %v594 = vadd.f32 %v530, %v562
    %v595 = vadd.f32 %v531, %v563
    %v596 = vadd.f32 %v532, %v564
    %v597 = vadd.f32 %v533, %v565
    %v598 = vadd.f32 %v534, %v566
    %v599 = vadd.f32 %v535, %v567
    %v600 = vadd.f32 %v536, %v568
    %v601 = vadd.f32 %v537, %v569
    %v602 = vadd.f32 %v538, %v570
    %v603 = vadd.f32 %v539, %v571
    %v604 = vadd.f32 %v540, %v572
    %v605 = vadd.f32 %v541, %v573
    %606 = vst [vmem:[%s4] sm:$0xff] %v574
    %607 = vst [vmem:[%s4 + $0x8] sm:$0xff] %v575
    %608 = vst [vmem:[%s4 + $0x10] sm:$0xff] %v576
    %609 = vst [vmem:[%s4 + $0x18] sm:$0xff] %v577
    %610 = vst [vmem:[%s4 + $0x20] sm:$0xff] %v578
    %611 = vst [vmem:[%s4 + $0x28] sm:$0xff] %v579
    %612 = vst [vmem:[%s4 + $0x30] sm:$0xff] %v580
    %613 = vst [vmem:[%s4 + $0x38] sm:$0xff] %v581
    %614 = vst [vmem:[%s4 + $0x40] sm:$0xff] %v582
    %615 = vst [vmem:[%s4 + $0x48] sm:$0xff] %v583
    %616 = vst [vmem:[%s4 + $0x50] sm:$0xff] %v584
    %617 = vst [vmem:[%s4 + $0x58] sm:$0xff] %v585
    %618 = vst [vmem:[%s4 + $0x60] sm:$0xff] %v586
    %619 = vst [vmem:[%s4 + $0x68] sm:$0xff] %v587
    %620 = vst [vmem:[%s4 + $0x70] sm:$0xff] %v588
    %621 = vst [vmem:[%s4 + $0x78] sm:$0xff] %v589
    %622 = vst [vmem:[%s4 + $0x80] sm:$0xff] %v590
    %623 = vst [vmem:[%s4 + $0x88] sm:$0xff] %v591
    %624 = vst [vmem:[%s4 + $0x90] sm:$0xff] %v592
    %625 = vst [vmem:[%s4 + $0x98] sm:$0xff] %v593
    %626 = vst [vmem:[%s4 + $0xa0] sm:$0xff] %v594
    %627 = vst [vmem:[%s4 + $0xa8] sm:$0xff] %v595
    %628 = vst [vmem:[%s4 + $0xb0] sm:$0xff] %v596
    %629 = vst [vmem:[%s4 + $0xb8] sm:$0xff] %v597
    %630 = vst [vmem:[%s4 + $0xc0] sm:$0xff] %v598
    %631 = vst [vmem:[%s4 + $0xc8] sm:$0xff] %v599
    %632 = vst [vmem:[%s4 + $0xd0] sm:$0xff] %v600
    %633 = vst [vmem:[%s4 + $0xd8] sm:$0xff] %v601
    %634 = vst [vmem:[%s4 + $0xe0] sm:$0xff] %v602
    %635 = vst [vmem:[%s4 + $0xe8] sm:$0xff] %v603
    %636 = vst [vmem:[%s4 + $0xf0] sm:$0xff] %v604
    %637 = vst [vmem:[%s4 + $0xf8] sm:$0xff] %v605
  $region25: #{improved_gae_forward.8} parent=0 // pred_fallthru
    _
  // Predicated region
  $region26: #{improved_gae_forward.8} parent=0 // pred_check
    _
  $region27: #{improved_gae_forward.8} parent=0 // pred_check_branch
    %639 = sbr.rel (0) target = $region29
  $region28: #{improved_gae_forward.8} parent=0 // pred_region
    _
  $region29: #{improved_gae_forward.8} parent=0 // pred_fallthru
    _
  // Predicated region
  $region30: #{improved_gae_forward.8} parent=0 // pred_check
    _
  $region31: #{improved_gae_forward.8} parent=0 // pred_check_branch
    %641 = sbr.rel (0) target = $region33
  $region32: #{improved_gae_forward.8} parent=0 // pred_region
    _
  $region33: #{improved_gae_forward.8} parent=0 // pred_fallthru
    _

</llo_original>
